<compile_context>
chip_gen: v7x
topology: tpu7x:2x2x1
jax: 0.10.0
libtpu: 0.0.40
codegen_flags: <defaults>
</compile_context>

<pallas_src>
import functools

import numpy as np

import jax
import jax.numpy as jnp
from jax.experimental import pallas as pl
from jax.experimental.pallas import tpu as pltpu

_VPAD = 128  # lanes used for the padded critic_linear (out_features == 1) head


def _round_up(x, m):
    return ((x + m - 1) // m) * m


# ---------------------------------------------------------------------------
# Offline weight preparation (one-time re-layout; NOT part of the forward path)
# ---------------------------------------------------------------------------
def _conv3x3_as_matrix_nchw(w_oihw, H, W):
    """Exact dense matrix (Cin*H*W, Cout*H*W) for Conv2d(k=3, s=1, p=1).

    Row index ci*H*W + hi*W + wi, col index co*H*W + ho*W + wo -- both in
    torch's NCHW flatten order, so x.view(-1, C*H*W) before fc1 needs no
    runtime permutation.
    """
    w = np.asarray(w_oihw, np.float32)          # (Cout, Cin, 3, 3)
    Cout, Cin = w.shape[0], w.shape[1]
    M = np.zeros((Cin, H, W, Cout, H, W), np.float32)
    for kh in range(3):
        for kw in range(3):
            dh, dw = kh - 1, kw - 1
            for ho in range(H):
                hi = ho + dh
                if hi < 0 or hi >= H:
                    continue
                for wo in range(W):
                    wi = wo + dw
                    if wi < 0 or wi >= W:
                        continue
                    # out[co, ho, wo] += w[co, ci, kh, kw] * in[ci, hi, wi]
                    M[:, hi, wi, :, ho, wo] += w[:, :, kh, kw].T
    return M.reshape(Cin * H * W, Cout * H * W)


def prepare_params(params, board_size):
    """One-time re-layout of torch-style parameters into 3 packed operands.

    Returns:
      wa   : bf16 (Cin*HW + 3*hidden + fc1_out, hidden)
             rows = [conv1 | conv2 | fc2 | fc_critic | critic_linear(pad)]
      w1   : bf16 (hidden, fc1_out)          -- fc1, pre-transposed
      bias : f32  (1, 4*hidden + fc1_out + 128) -- all biases, lane-packed
    """
    H = W = board_size
    HW = H * W

    conv1_w = np.asarray(params["conv1_w"], np.float32)        # (C, Cin, 3, 3)
    conv2_w = np.asarray(params["conv2_w"], np.float32)        # (C, C, 3, 3)
    fc1_w = np.asarray(params["fc1_w"], np.float32)            # (1024, C*HW)
    fc2_w = np.asarray(params["fc2_w"], np.float32)            # (512, 1024)
    fcc_w = np.asarray(params["fc_critic_w"], np.float32)      # (512, 512)
    crit_w = np.asarray(params["critic_linear_w"], np.float32)  # (1, 512)

    hidden = fc2_w.shape[0]                  # 512
    fc1_out = fc1_w.shape[0]                 # 1024
    c_out = conv1_w.shape[0]

    # The single-slab packing assumes the conv output width (C*HW) equals the
    # fc2/fc_critic width, true for this small config (8 ch x 8x8 = 512).
    assert c_out * HW == hidden, "slab packing assumes num_channels*board^2 == hidden"

    wc1 = _conv3x3_as_matrix_nchw(conv1_w, H, W)               # (Cin*HW, hidden)
    wc2 = _conv3x3_as_matrix_nchw(conv2_w, H, W)               # (hidden, hidden)

    # critic_linear (out=1) padded to the slab width; only column 0 is real, so
    # the kernel's lane-dense (tile_b, 128) value block has the value in lane 0.
    crit_pad = np.zeros((hidden, hidden), np.float32)
    crit_pad[:, 0] = crit_w[0]

    wa = np.concatenate([wc1, wc2, fc2_w.T, fcc_w.T, crit_pad], axis=0)

    bias = np.concatenate([
        np.repeat(np.asarray(params["conv1_b"], np.float32), HW),   # matches NCHW flatten
        np.repeat(np.asarray(params["conv2_b"], np.float32), HW),
        np.asarray(params["fc1_b"], np.float32),
        np.asarray(params["fc2_b"], np.float32),
        np.asarray(params["fc_critic_b"], np.float32),
        np.pad(np.asarray(params["critic_linear_b"], np.float32), (0, _VPAD - 1)),
    ])[None, :]

    return {
        "wa": jnp.asarray(wa, jnp.bfloat16),
        "w1": jnp.asarray(fc1_w.T, jnp.bfloat16),
        "bias": jnp.asarray(bias, jnp.float32),
    }


# ---------------------------------------------------------------------------
# Fused Pallas kernel: the entire forward pass, weights resident across the grid
# ---------------------------------------------------------------------------
def _fused_forward_kernel(x_ref, wa_ref, w1_ref, bias_ref, x_out_ref, value_ref,
                          *, in_feat, hidden, fc1_out):
    bf16, f32 = jnp.bfloat16, jnp.float32

    # Static row offsets into the packed weight slab (all 16-aligned here).
    r_c1 = 0
    r_c2 = r_c1 + in_feat
    r_f2 = r_c2 + hidden
    r_fc = r_f2 + fc1_out
    r_cr = r_fc + hidden
    # Static lane offsets into the packed bias row (all 128-aligned here).
    b_c1 = 0
    b_c2 = b_c1 + hidden
    b_f1 = b_c2 + hidden
    b_f2 = b_f1 + fc1_out
    b_fc = b_f2 + hidden
    b_cr = b_fc + hidden

    def dense(a_bf16, w, b_f32):
        # bf16 MXU matmul, f32 accumulation, f32 bias add.
        return jnp.dot(a_bf16, w, preferred_element_type=f32) + b_f32

    a = x_ref[...]                                                   # (tb, in_feat) bf16
    # relu(conv1) / relu(conv2) folded as dense matmuls on NCHW-flat features
    a = jnp.maximum(dense(a, wa_ref[r_c1:r_c2, :], bias_ref[:, b_c1:b_c1 + hidden]), 0.0).astype(bf16)
    a = jnp.maximum(dense(a, wa_ref[r_c2:r_f2, :], bias_ref[:, b_c2:b_c2 + hidden]), 0.0).astype(bf16)
    # relu(fc1)
    a = jnp.maximum(dense(a, w1_ref[...], bias_ref[:, b_f1:b_f1 + fc1_out]), 0.0).astype(bf16)
    # relu(fc2) -> features x (module output), kept f32 for the output store
    x32 = jnp.maximum(dense(a, wa_ref[r_f2:r_fc, :], bias_ref[:, b_f2:b_f2 + hidden]), 0.0)
    x_out_ref[...] = x32.astype(x_out_ref.dtype)

    # tanh(fc_critic)
    y = jnp.tanh(dense(x32.astype(bf16), wa_ref[r_fc:r_cr, :], bias_ref[:, b_fc:b_fc + hidden]))
    # critic_linear (out=1) as a padded 128-lane matmul: lane 0 = value, rest 0.
    v = dense(y.astype(bf16), wa_ref[r_cr:r_cr + hidden, 0:_VPAD],
              bias_ref[:, b_cr:b_cr + _VPAD])
    value_ref[...] = v.astype(value_ref.dtype)


def _fused_forward(x_flat, p):
    B, in_feat = x_flat.shape
    wa, w1, bias = p["wa"], p["w1"], p["bias"]
    hidden = wa.shape[1]                 # 512
    fc1_out = w1.shape[1]                # 1024
    assert wa.shape[0] == in_feat + 3 * hidden + fc1_out
    assert bias.shape[1] == 4 * hidden + fc1_out + _VPAD

    # Batch tiling: pad to >=8 rows (sublane); one tile for small batches,
    # 128-row tiles (MXU-friendly everywhere; 256 also fine on v6e/v7x) when
    # the caller batches.  The grid axis is "parallel" so v7x's two TCs split
    # the tiles; weights use constant index maps and stay VMEM-resident.
    if B <= 256:
        tile_b = _round_up(max(B, 1), 8)
    else:
        tile_b = 128
    b_pad = _round_up(B, tile_b)
    num_tiles = b_pad // tile_b
    if b_pad != B:
        x_flat = jnp.pad(x_flat, ((0, b_pad - B), (0, 0)))

    kernel = functools.partial(_fused_forward_kernel,
                               in_feat=in_feat, hidden=hidden, fc1_out=fc1_out)

    x_out, value_pad = pl.pallas_call(
        kernel,
        out_shape=(
            jax.ShapeDtypeStruct((b_pad, hidden), jnp.float32),
            jax.ShapeDtypeStruct((b_pad, _VPAD), jnp.float32),
        ),
        grid=(num_tiles,),
        in_specs=[
            pl.BlockSpec((tile_b, in_feat), lambda b: (b, 0)),   # activations: per batch tile
            pl.BlockSpec(wa.shape, lambda b: (0, 0)),            # weight slab: resident
            pl.BlockSpec(w1.shape, lambda b: (0, 0)),            # fc1 weights: resident
            pl.BlockSpec(bias.shape, lambda b: (0, 0)),          # packed biases: resident
        ],
        out_specs=(
            pl.BlockSpec((tile_b, hidden), lambda b: (b, 0)),
            pl.BlockSpec((tile_b, _VPAD), lambda b: (b, 0)),
        ),
        compiler_params=pltpu.CompilerParams(
            dimension_semantics=("parallel",),
            # ~8 MiB VMEM footprint -> under every generation's scoped default;
            # no vmem_limit_bytes override needed.
        ),
    )(x_flat, wa, w1, bias)

    return value_pad[:B, :1], x_out[:B]


# ---------------------------------------------------------------------------
# Module forward (use_gru=False path)
# ---------------------------------------------------------------------------
def forward(prepped, inputs_nchw, states, masks, use_gru=False):
    """Returns (critic_linear(tanh(fc_critic(x))), x, states) like the torch module."""
    if use_gru:
        # TODO(synk): GRU branch (use_gru=True) not implemented in the Pallas path.
        raise NotImplementedError("use_gru=True is not supported by this Pallas kernel")
    del masks  # only consumed by the GRU branch
    B = inputs_nchw.shape[0]
    # NCHW contiguous flatten == torch's x.view(-1, C*H*W); cast once to bf16
    # so the kernel's input DMA is half-width and layer 1 needs no in-kernel cast.
    x_flat = inputs_nchw.reshape(B, -1).astype(jnp.bfloat16)
    value, x = _fused_forward(x_flat, prepped)
    return value, x, states


# ---------------------------------------------------------------------------
# Pure-JAX reference (f32) for the numerical self-check
# ---------------------------------------------------------------------------
def _reference_forward(params, inputs, states, masks):
    def conv(x, w, b):
        y = jax.lax.conv_general_dilated(
            x, w, window_strides=(1, 1), padding=((1, 1), (1, 1)),
            dimension_numbers=("NCHW", "OIHW", "NCHW"))
        return jnp.maximum(y + b[None, :, None, None], 0.0)

    x = conv(inputs, params["conv1_w"], params["conv1_b"])
    x = conv(x, params["conv2_w"], params["conv2_b"])
    x = x.reshape(x.shape[0], -1)
    x = jnp.maximum(x @ params["fc1_w"].T + params["fc1_b"], 0.0)
    x = jnp.maximum(x @ params["fc2_w"].T + params["fc2_b"], 0.0)
    y = jnp.tanh(x @ params["fc_critic_w"].T + params["fc_critic_b"])
    value = y @ params["critic_linear_w"].T + params["critic_linear_b"]
    return value, x, states


# ---------------------------------------------------------------------------
# Deterministic parameter construction (synthetic init, torch-style shapes)
# ---------------------------------------------------------------------------
def make_params(key, num_inputs, num_channels, board_size):
    ks = jax.random.split(key, 6)
    flat = num_channels * board_size * board_size

    def w(k, shape, scale=0.05):
        return scale * jax.random.normal(k, shape, jnp.float32)

    return {
        "conv1_w": w(ks[0], (num_channels, num_inputs, 3, 3)),
        "conv1_b": jnp.zeros((num_channels,), jnp.float32),
        "conv2_w": w(ks[1], (num_channels, num_channels, 3, 3)),
        "conv2_b": jnp.zeros((num_channels,), jnp.float32),
        "fc1_w": w(ks[2], (1024, flat)),
        "fc1_b": jnp.zeros((1024,), jnp.float32),
        "fc2_w": w(ks[3], (512, 1024)),
        "fc2_b": jnp.zeros((512,), jnp.float32),
        "fc_critic_w": w(ks[4], (512, 512)),
        "fc_critic_b": jnp.zeros((512,), jnp.float32),
        "critic_linear_w": w(ks[5], (1, 512)),
        "critic_linear_b": jnp.zeros((1,), jnp.float32),
    }


if __name__ == "__main__":
    B, num_inputs, board_size, num_channels = 2, 4, 8, 8

    key = jax.random.PRNGKey(0)
    k_param, k_in = jax.random.split(key)

    params = make_params(k_param, num_inputs, num_channels, board_size)
    prepped = prepare_params(params, board_size)      # one-time offline re-layout

    inputs = jax.random.normal(
        k_in, (B, num_inputs, board_size, board_size), jnp.float32)   # NCHW
    states = jnp.zeros((B, 1), jnp.float32)   # state_size == 1 (no GRU)
    masks = jnp.ones((B, 1), jnp.float32)

    fwd = jax.jit(forward, static_argnames=("use_gru",))
    value, x_out, states_out = fwd(prepped, inputs, states, masks)
    jax.block_until_ready((value, x_out, states_out))

    # Tightened check vs f32 reference (kernel uses bf16 matmul operands,
    # f32 accumulation: expected error ~1e-2 relative).
    ref_value, ref_x, _ = _reference_forward(params, inputs, states, masks)
    np.testing.assert_allclose(np.asarray(value), np.asarray(ref_value),
                               rtol=2e-2, atol=2e-2)
    np.testing.assert_allclose(np.asarray(x_out), np.asarray(ref_x),
                               rtol=2e-2, atol=2e-2)

    assert value.shape == (B, 1)
    assert x_out.shape == (B, 512)
    assert states_out.shape == states.shape
    print("KERNEL_OK")
</pallas_src>

<mosaic_0001>
module attributes {stable_mosaic.version = 11 : i64} {
  func.func @_fused_forward_kernel(%arg0: i32, %arg1: memref<8x256xbf16, #tpu.memory_space<vmem>>, %arg2: memref<2816x512xbf16, #tpu.memory_space<vmem>>, %arg3: memref<512x1024xbf16, #tpu.memory_space<vmem>>, %arg4: memref<1x3200xf32, #tpu.memory_space<vmem>>, %arg5: memref<8x512xf32, #tpu.memory_space<vmem>>, %arg6: memref<8x128xf32, #tpu.memory_space<vmem>>) attributes {dimension_semantics = [#tpu.dimension_semantics<parallel>], iteration_bounds = array<i64: 1>, scalar_prefetch = 0 : i64, scratch_operands = 0 : i64, tpu.core_type = #tpu.core_type<tc>, window_params = [{transform_indices = @transform_0, window_bounds = array<i64: 8, 256>}, {pipeline_mode = #tpu.pipeline_mode<synchronous>, transform_indices = @transform_1, window_bounds = array<i64: 2816, 512>}, {pipeline_mode = #tpu.pipeline_mode<synchronous>, transform_indices = @transform_2, window_bounds = array<i64: 512, 1024>}, {pipeline_mode = #tpu.pipeline_mode<synchronous>, transform_indices = @transform_3, window_bounds = array<i64: 1, 3200>}, {transform_indices = @transform_4, window_bounds = array<i64: 8, 512>}, {transform_indices = @transform_5, window_bounds = array<i64: 8, 128>}]} {
    %c0 = arith.constant 0 : index
    %c0_0 = arith.constant 0 : index
    %0 = vector.load %arg1[%c0, %c0_0] : memref<8x256xbf16, #tpu.memory_space<vmem>>, vector<8x256xbf16>
    %c0_1 = arith.constant 0 : index
    %c0_2 = arith.constant 0 : index
    %1 = vector.load %arg2[%c0_1, %c0_2] : memref<2816x512xbf16, #tpu.memory_space<vmem>>, vector<256x512xbf16>
    %c0_3 = arith.constant 0 : index
    %c0_4 = arith.constant 0 : index
    %2 = vector.load %arg4[%c0_3, %c0_4] : memref<1x3200xf32, #tpu.memory_space<vmem>>, vector<1x512xf32>
    %cst = arith.constant dense<0.000000e+00> : vector<8x512xf32>
    %3 = tpu.matmul %0, %1, %cst {dimension_numbers = #tpu.dot_dimension_numbers<[1], [0], [0], [1], [0, 0, 1, 1], [], []>} : vector<8x256xbf16>, vector<256x512xbf16>, vector<8x512xf32> -> vector<8x512xf32>
    %4 = vector.broadcast %2 : vector<1x512xf32> to vector<8x512xf32>
    %5 = arith.addf %3, %4 : vector<8x512xf32>
    %cst_5 = arith.constant 0.000000e+00 : f32
    %6 = vector.broadcast %cst_5 : f32 to vector<8x512xf32>
    %7 = arith.maximumf %5, %6 : vector<8x512xf32>
    %8 = arith.truncf %7 : vector<8x512xf32> to vector<8x512xbf16>
    %c256 = arith.constant 256 : index
    %c0_6 = arith.constant 0 : index
    %9 = vector.load %arg2[%c256, %c0_6] : memref<2816x512xbf16, #tpu.memory_space<vmem>>, vector<512x512xbf16>
    %c0_7 = arith.constant 0 : index
    %c512 = arith.constant 512 : index
    %10 = vector.load %arg4[%c0_7, %c512] : memref<1x3200xf32, #tpu.memory_space<vmem>>, vector<1x512xf32>
    %cst_8 = arith.constant dense<0.000000e+00> : vector<8x512xf32>
    %11 = tpu.matmul %8, %9, %cst_8 {dimension_numbers = #tpu.dot_dimension_numbers<[1], [0], [0], [1], [0, 0, 1, 1], [], []>} : vector<8x512xbf16>, vector<512x512xbf16>, vector<8x512xf32> -> vector<8x512xf32>
    %12 = vector.broadcast %10 : vector<1x512xf32> to vector<8x512xf32>
    %13 = arith.addf %11, %12 : vector<8x512xf32>
    %cst_9 = arith.constant 0.000000e+00 : f32
    %14 = vector.broadcast %cst_9 : f32 to vector<8x512xf32>
    %15 = arith.maximumf %13, %14 : vector<8x512xf32>
    %16 = arith.truncf %15 : vector<8x512xf32> to vector<8x512xbf16>
    %c0_10 = arith.constant 0 : index
    %c0_11 = arith.constant 0 : index
    %17 = vector.load %arg3[%c0_10, %c0_11] : memref<512x1024xbf16, #tpu.memory_space<vmem>>, vector<512x1024xbf16>
    %c0_12 = arith.constant 0 : index
    %c1024 = arith.constant 1024 : index
    %18 = vector.load %arg4[%c0_12, %c1024] : memref<1x3200xf32, #tpu.memory_space<vmem>>, vector<1x1024xf32>
    %cst_13 = arith.constant dense<0.000000e+00> : vector<8x1024xf32>
    %19 = tpu.matmul %16, %17, %cst_13 {dimension_numbers = #tpu.dot_dimension_numbers<[1], [0], [0], [1], [0, 0, 1, 1], [], []>} : vector<8x512xbf16>, vector<512x1024xbf16>, vector<8x1024xf32> -> vector<8x1024xf32>
    %20 = vector.broadcast %18 : vector<1x1024xf32> to vector<8x1024xf32>
    %21 = arith.addf %19, %20 : vector<8x1024xf32>
    %cst_14 = arith.constant 0.000000e+00 : f32
    %22 = vector.broadcast %cst_14 : f32 to vector<8x1024xf32>
    %23 = arith.maximumf %21, %22 : vector<8x1024xf32>
    %24 = arith.truncf %23 : vector<8x1024xf32> to vector<8x1024xbf16>
    %c768 = arith.constant 768 : index
    %c0_15 = arith.constant 0 : index
    %25 = vector.load %arg2[%c768, %c0_15] : memref<2816x512xbf16, #tpu.memory_space<vmem>>, vector<1024x512xbf16>
    %c0_16 = arith.constant 0 : index
    %c2048 = arith.constant 2048 : index
    %26 = vector.load %arg4[%c0_16, %c2048] : memref<1x3200xf32, #tpu.memory_space<vmem>>, vector<1x512xf32>
    %cst_17 = arith.constant dense<0.000000e+00> : vector<8x512xf32>
    %27 = tpu.matmul %24, %25, %cst_17 {dimension_numbers = #tpu.dot_dimension_numbers<[1], [0], [0], [1], [0, 0, 1, 1], [], []>} : vector<8x1024xbf16>, vector<1024x512xbf16>, vector<8x512xf32> -> vector<8x512xf32>
    %28 = vector.broadcast %26 : vector<1x512xf32> to vector<8x512xf32>
    %29 = arith.addf %27, %28 : vector<8x512xf32>
    %cst_18 = arith.constant 0.000000e+00 : f32
    %30 = vector.broadcast %cst_18 : f32 to vector<8x512xf32>
    %31 = arith.maximumf %29, %30 : vector<8x512xf32>
    %c0_19 = arith.constant 0 : index
    %c0_20 = arith.constant 0 : index
    %32 = vector.load %arg5[%c0_19, %c0_20] : memref<8x512xf32, #tpu.memory_space<vmem>>, vector<8x512xf32>
    tpu.vector_store %arg5[%c0_19, %c0_20], %31 {strides = array<i32>} : memref<8x512xf32, #tpu.memory_space<vmem>>, vector<8x512xf32>,
    %33 = arith.truncf %31 : vector<8x512xf32> to vector<8x512xbf16>
    %c1792 = arith.constant 1792 : index
    %c0_21 = arith.constant 0 : index
    %34 = vector.load %arg2[%c1792, %c0_21] : memref<2816x512xbf16, #tpu.memory_space<vmem>>, vector<512x512xbf16>
    %c0_22 = arith.constant 0 : index
    %c2560 = arith.constant 2560 : index
    %35 = vector.load %arg4[%c0_22, %c2560] : memref<1x3200xf32, #tpu.memory_space<vmem>>, vector<1x512xf32>
    %cst_23 = arith.constant dense<0.000000e+00> : vector<8x512xf32>
    %36 = tpu.matmul %33, %34, %cst_23 {dimension_numbers = #tpu.dot_dimension_numbers<[1], [0], [0], [1], [0, 0, 1, 1], [], []>} : vector<8x512xbf16>, vector<512x512xbf16>, vector<8x512xf32> -> vector<8x512xf32>
    %37 = vector.broadcast %35 : vector<1x512xf32> to vector<8x512xf32>
    %38 = arith.addf %36, %37 : vector<8x512xf32>
    %39 = math.tanh %38 : vector<8x512xf32>
    %40 = arith.truncf %39 : vector<8x512xf32> to vector<8x512xbf16>
    %c2304 = arith.constant 2304 : index
    %c0_24 = arith.constant 0 : index
    %41 = vector.load %arg2[%c2304, %c0_24] : memref<2816x512xbf16, #tpu.memory_space<vmem>>, vector<512x128xbf16>
    %c0_25 = arith.constant 0 : index
    %c3072 = arith.constant 3072 : index
    %42 = vector.load %arg4[%c0_25, %c3072] : memref<1x3200xf32, #tpu.memory_space<vmem>>, vector<1x128xf32>
    %cst_26 = arith.constant dense<0.000000e+00> : vector<8x128xf32>
    %43 = tpu.matmul %40, %41, %cst_26 {dimension_numbers = #tpu.dot_dimension_numbers<[1], [0], [0], [1], [0, 0, 1, 1], [], []>} : vector<8x512xbf16>, vector<512x128xbf16>, vector<8x128xf32> -> vector<8x128xf32>
    %44 = vector.broadcast %42 : vector<1x128xf32> to vector<8x128xf32>
    %45 = arith.addf %43, %44 : vector<8x128xf32>
    %c0_27 = arith.constant 0 : index
    %c0_28 = arith.constant 0 : index
    %46 = vector.load %arg6[%c0_27, %c0_28] : memref<8x128xf32, #tpu.memory_space<vmem>>, vector<8x128xf32>
    tpu.vector_store %arg6[%c0_27, %c0_28], %45 {strides = array<i32>} : memref<8x128xf32, #tpu.memory_space<vmem>>, vector<8x128xf32>,
    return
  }
  func.func @transform_0(%arg0: i32) -> (i32, i32) {
    %c0_i32 = arith.constant 0 : i32
    %c0_i32_0 = arith.constant 0 : i32
    return %arg0, %c0_i32 : i32, i32
  }
  func.func @transform_1(%arg0: i32) -> (i32, i32) {
    %c0_i32 = arith.constant 0 : i32
    %c0_i32_0 = arith.constant 0 : i32
    %c0_i32_1 = arith.constant 0 : i32
    return %c0_i32, %c0_i32_0 : i32, i32
  }
  func.func @transform_2(%arg0: i32) -> (i32, i32) {
    %c0_i32 = arith.constant 0 : i32
    %c0_i32_0 = arith.constant 0 : i32
    %c0_i32_1 = arith.constant 0 : i32
    return %c0_i32, %c0_i32_0 : i32, i32
  }
  func.func @transform_3(%arg0: i32) -> (i32, i32) {
    %c0_i32 = arith.constant 0 : i32
    %c0_i32_0 = arith.constant 0 : i32
    %c0_i32_1 = arith.constant 0 : i32
    return %c0_i32, %c0_i32_0 : i32, i32
  }
  func.func @transform_4(%arg0: i32) -> (i32, i32) {
    %c0_i32 = arith.constant 0 : i32
    %c0_i32_0 = arith.constant 0 : i32
    return %arg0, %c0_i32 : i32, i32
  }
  func.func @transform_5(%arg0: i32) -> (i32, i32) {
    %c0_i32 = arith.constant 0 : i32
    %c0_i32_0 = arith.constant 0 : i32
    return %arg0, %c0_i32 : i32, i32
  }
}

</mosaic_0001>

<llo_original>
// kernel: forward.1
$region0: #{forward.1}
  #allocation0 [shape = 'u32[]', space=smem, size = 0x4, offset = 0x4, fixed_abs, tag = 'smem constant byte address 0x4 - core index']
  #allocation1 [shape = 'u32[144,128]{1,0:T(1,128)}', space=vmem, size = 0x12000, scoped, tag = 'internal scratch']
  %s0 = inlined_call_operand.vmem [shape: bf16[8,256], index: 0, kind: input, shape index: {}]
  %s1 = inlined_call_operand.hbm [shape: bf16[2816,512], index: 1, kind: input, shape index: {}]
  %s2 = inlined_call_operand.hbm [shape: bf16[512,1024], index: 2, kind: input, shape index: {}]
  %s3 = inlined_call_operand.hbm [shape: f32[1,3200], index: 3, kind: input, shape index: {}]
  %s4 = inlined_call_operand.vmem [shape: f32[8,512], index: 4, kind: output, shape index: {0}]
  %s5 = inlined_call_operand.vmem [shape: f32[8,128], index: 5, kind: output, shape index: {1}]
  %6 = xla_tuple %s4, %s5
  %s7 = sld [smem:[#allocation0]]
  $region46: #{forward.1} parent=0
    _
  %s9 = ssub.s32 1, %s7
  %s10 = scalar_select 0, %s9, %s7
  $region1: #{forward.1} parent=0
    #allocation2 [shape = 'u8[2883584]{0}', space=vmem, size = 0x2c0000, scoped, tag = 'input window, operand 1, single buffered']
    #allocation3 [shape = 's32[1]{0}', space=sflag, size = 0x4, scoped, tag = 'scoped memory for forward.1']
    #allocation4 [shape = 'u8[1048576]{0}', space=vmem, size = 0x100000, scoped, tag = 'input window, operand 2, single buffered']
    #allocation5 [shape = 's32[1]{0}', space=sflag, size = 0x4, scoped, tag = 'scoped memory for forward.1']
    #allocation6 [shape = 'u8[12800]{0}', space=vmem, size = 0x3400, scoped, tag = 'input window, operand 3, single buffered']
    %11 = vsyncpa [#allocation3], 0
    %12 = vsyncpa [#allocation5], 0
    // Predicated region
    $region2: #{forward.1} parent=1 // pred_check
      _
    $region3: #{forward.1} parent=1 // pred_check_branch
      %14 = sbr.rel (0) target = $region5
    $region4: #{forward.1} parent=1 // pred_region
      _
    $region5: #{forward.1} parent=1 // pred_fallthru
      _
    // Predicated region
    $region6: #{forward.1} parent=1 // pred_check
      _
    $region7: #{forward.1} parent=1 // pred_check_branch
      %16 = sbr.rel (0) target = $region9
    $region8: #{forward.1} parent=1 // pred_region
      %s18 = ssub.s32 90112, 90112
      %19 = vsyncadd [#allocation3], %s18
      %s20 = sshll.u32 [#allocation2], 4
      %s21 = int_to_ptr.vmem [resolvable:$true] %s20
      %26 = dma.hbm_to_vmem [thread:$0]  %s1, 90112, %s21, [#allocation3], 256, 256, 16
    $region9: #{forward.1} parent=1 // pred_fallthru
      _
    // Predicated region
    $region10: #{forward.1} parent=1 // pred_check
      _
    $region11: #{forward.1} parent=1 // pred_check_branch
      %28 = sbr.rel (0) target = $region13
    $region12: #{forward.1} parent=1 // pred_region
      %s30 = ssub.s32 32768, 32768
      %31 = vsyncadd [#allocation5], %s30
      %s32 = sshll.u32 [#allocation4], 4
      %s33 = int_to_ptr.vmem [resolvable:$true] %s32
      %38 = dma.hbm_to_vmem [thread:$0]  %s2, 32768, %s33, [#allocation5], 512, 512, 32
    $region13: #{forward.1} parent=1 // pred_fallthru
      _
    // Predicated region
    $region14: #{forward.1} parent=1 // pred_check
      _
    $region15: #{forward.1} parent=1 // pred_check_branch
      %40 = sbr.rel (0) target = $region17
    $region16: #{forward.1} parent=1 // pred_region
      %s42 = ssub.s32 400, 400
      %43 = vsyncadd [#allocation5], %s42
      %s45 = sshll.u32 [#allocation6], 4
      %s46 = int_to_ptr.vmem [resolvable:$true] %s45
      %48 = dma.hbm_to_vmem [thread:$0]  %s3, 400, %s46, [#allocation5]
    $region17: #{forward.1} parent=1 // pred_fallthru
      _
    // Predicated region
    $region18: #{forward.1} parent=1 // pred_check
      _
    $region19: #{forward.1} parent=1 // pred_check_branch
      %50 = sbr.rel (0) target = $region21
    $region20: #{forward.1} parent=1 // pred_region
      %51 = dma.done [#allocation3], 90112
    $region21: #{forward.1} parent=1 // pred_fallthru
      _
    // Predicated region
    $region22: #{forward.1} parent=1 // pred_check
      _
    $region23: #{forward.1} parent=1 // pred_check_branch
      %53 = sbr.rel (0) target = $region25
    $region24: #{forward.1} parent=1 // pred_region
      %54 = dma.done [#allocation5], 32768
    $region25: #{forward.1} parent=1 // pred_fallthru
      _
    // Predicated region
    $region26: #{forward.1} parent=1 // pred_check
      _
    $region27: #{forward.1} parent=1 // pred_check_branch
      %56 = sbr.rel (0) target = $region29
    $region28: #{forward.1} parent=1 // pred_region
      %57 = dma.done [#allocation5], 400
    $region29: #{forward.1} parent=1 // pred_fallthru
      _
    %v59 = vld [vmem:[%s0] sm:$0xff]
    %v60 = vld [vmem:[#allocation2] sm:$0xff]
    %v61 = vld [vmem:[#allocation2 + $0x8] sm:$0xff]
    %v62 = vld [vmem:[#allocation2 + $0x10] sm:$0xff]
    %v63 = vld [vmem:[#allocation2 + $0x18] sm:$0xff]
    %v64 = vld [vmem:[#allocation2 + $0x20] sm:$0xff]
    %v65 = vld [vmem:[#allocation2 + $0x28] sm:$0xff]
    %v66 = vld [vmem:[#allocation2 + $0x30] sm:$0xff]
    %v67 = vld [vmem:[#allocation2 + $0x38] sm:$0xff]
    %v68 = vld [vmem:[#allocation2 + $0x40] sm:$0xff]
    %v69 = vld [vmem:[#allocation2 + $0x48] sm:$0xff]
    %v70 = vld [vmem:[#allocation2 + $0x50] sm:$0xff]
    %v71 = vld [vmem:[#allocation2 + $0x58] sm:$0xff]
    %v72 = vld [vmem:[#allocation2 + $0x60] sm:$0xff]
    %v73 = vld [vmem:[#allocation2 + $0x68] sm:$0xff]
    %v74 = vld [vmem:[#allocation2 + $0x70] sm:$0xff]
    %v75 = vld [vmem:[#allocation2 + $0x78] sm:$0xff]
    %v76 = vld [vmem:[#allocation2 + $0x80] sm:$0xff]
    %v77 = vld [vmem:[#allocation2 + $0x88] sm:$0xff]
    %v78 = vld [vmem:[#allocation2 + $0x90] sm:$0xff]
    %v79 = vld [vmem:[#allocation2 + $0x98] sm:$0xff]
    %v80 = vld [vmem:[#allocation2 + $0xa0] sm:$0xff]
    %v81 = vld [vmem:[#allocation2 + $0xa8] sm:$0xff]
    %v82 = vld [vmem:[#allocation2 + $0xb0] sm:$0xff]
    %v83 = vld [vmem:[#allocation2 + $0xb8] sm:$0xff]
    %v84 = vld [vmem:[#allocation2 + $0xc0] sm:$0xff]
    %v85 = vld [vmem:[#allocation2 + $0xc8] sm:$0xff]
    %v86 = vld [vmem:[#allocation2 + $0xd0] sm:$0xff]
    %v87 = vld [vmem:[#allocation2 + $0xd8] sm:$0xff]
    %v88 = vld [vmem:[#allocation2 + $0xe0] sm:$0xff]
    %v89 = vld [vmem:[#allocation2 + $0xe8] sm:$0xff]
    %v90 = vld [vmem:[#allocation2 + $0xf0] sm:$0xff]
    %v91 = vld [vmem:[#allocation2 + $0xf8] sm:$0xff]
    %v92 = vld [vmem:[#allocation2 + $0x100] sm:$0xff]
    %v93 = vld [vmem:[#allocation2 + $0x108] sm:$0xff]
    %v94 = vld [vmem:[#allocation2 + $0x110] sm:$0xff]
    %v95 = vld [vmem:[#allocation2 + $0x118] sm:$0xff]
    %v96 = vld [vmem:[#allocation2 + $0x120] sm:$0xff]
    %v97 = vld [vmem:[#allocation2 + $0x128] sm:$0xff]
    %v98 = vld [vmem:[#allocation2 + $0x130] sm:$0xff]
    %v99 = vld [vmem:[#allocation2 + $0x138] sm:$0xff]
    %v100 = vld [vmem:[#allocation2 + $0x140] sm:$0xff]
    %v101 = vld [vmem:[#allocation2 + $0x148] sm:$0xff]
    %v102 = vld [vmem:[#allocation2 + $0x150] sm:$0xff]
    %v103 = vld [vmem:[#allocation2 + $0x158] sm:$0xff]
    %v104 = vld [vmem:[#allocation2 + $0x160] sm:$0xff]
    %v105 = vld [vmem:[#allocation2 + $0x168] sm:$0xff]
    %v106 = vld [vmem:[#allocation2 + $0x170] sm:$0xff]
    %v107 = vld [vmem:[#allocation2 + $0x178] sm:$0xff]
    %v108 = vld [vmem:[#allocation2 + $0x180] sm:$0xff]
    %v109 = vld [vmem:[#allocation2 + $0x188] sm:$0xff]
    %v110 = vld [vmem:[#allocation2 + $0x190] sm:$0xff]
    %v111 = vld [vmem:[#allocation2 + $0x198] sm:$0xff]
    %v112 = vld [vmem:[#allocation2 + $0x1a0] sm:$0xff]
    %v113 = vld [vmem:[#allocation2 + $0x1a8] sm:$0xff]
    %v114 = vld [vmem:[#allocation2 + $0x1b0] sm:$0xff]
    %v115 = vld [vmem:[#allocation2 + $0x1b8] sm:$0xff]
    %v116 = vld [vmem:[#allocation2 + $0x1c0] sm:$0xff]
    %v117 = vld [vmem:[#allocation2 + $0x1c8] sm:$0xff]
    %v118 = vld [vmem:[#allocation2 + $0x1d0] sm:$0xff]
    %v119 = vld [vmem:[#allocation2 + $0x1d8] sm:$0xff]
    %v120 = vld [vmem:[#allocation2 + $0x1e0] sm:$0xff]
    %v121 = vld [vmem:[#allocation2 + $0x1e8] sm:$0xff]
    %v122 = vld [vmem:[#allocation2 + $0x1f0] sm:$0xff]
    %v123 = vld [vmem:[#allocation2 + $0x1f8] sm:$0xff]
    %v124 = vld [vmem:[#allocation6] sm:$0xf]
    %v126 = vlaneseq
    %v127 = vshrl.u32 %v126, 7
    %v128 = vsub.s32 0, %v127
    %v129 = vrot.slane %v124, %v128
    %v130 = vlaneseq
    %v131 = vshrl.u32 %v130, 7
    %v132 = vsub.s32 1, %v131
    %v133 = vrot.slane %v124, %v132
    %v134 = vlaneseq
    %v135 = vshrl.u32 %v134, 7
    %v136 = vsub.s32 2, %v135
    %v137 = vrot.slane %v124, %v136
    %v138 = vlaneseq
    %v139 = vshrl.u32 %v138, 7
    %v140 = vsub.s32 3, %v139
    %v141 = vrot.slane %v124, %v140
    %v147 = vunpack.c.l.b16 %v59
    %v148 = vunpack.c.h.b16 %v59
    %v149 = vpack.c.b16 %v147, %v147
    %v150 = vpack.c.b16 %v148, %v148
    %v217 = vunpack.c.l.b16 %v60
    %v218 = vunpack.c.h.b16 %v60
    %v219 = vunpack.c.l.b16 %v61
    %v220 = vunpack.c.h.b16 %v61
    %v221 = vunpack.c.l.b16 %v62
    %v222 = vunpack.c.h.b16 %v62
    %v223 = vunpack.c.l.b16 %v63
    %v224 = vunpack.c.h.b16 %v63
    %v225 = vunpack.c.l.b16 %v64
    %v226 = vunpack.c.h.b16 %v64
    %v227 = vunpack.c.l.b16 %v65
    %v228 = vunpack.c.h.b16 %v65
    %v229 = vunpack.c.l.b16 %v66
    %v230 = vunpack.c.h.b16 %v66
    %v231 = vunpack.c.l.b16 %v67
    %v232 = vunpack.c.h.b16 %v67
    %v233 = vunpack.c.l.b16 %v68
    %v234 = vunpack.c.h.b16 %v68
    %v235 = vunpack.c.l.b16 %v69
    %v236 = vunpack.c.h.b16 %v69
    %v237 = vunpack.c.l.b16 %v70
    %v238 = vunpack.c.h.b16 %v70
    %v239 = vunpack.c.l.b16 %v71
    %v240 = vunpack.c.h.b16 %v71
    %v241 = vunpack.c.l.b16 %v72
    %v242 = vunpack.c.h.b16 %v72
    %v243 = vunpack.c.l.b16 %v73
    %v244 = vunpack.c.h.b16 %v73
    %v245 = vunpack.c.l.b16 %v74
    %v246 = vunpack.c.h.b16 %v74
    %v247 = vunpack.c.l.b16 %v75
    %v248 = vunpack.c.h.b16 %v75
    %v249 = vunpack.c.l.b16 %v76
    %v250 = vunpack.c.h.b16 %v76
    %v251 = vunpack.c.l.b16 %v77
    %v252 = vunpack.c.h.b16 %v77
    %v253 = vunpack.c.l.b16 %v78
    %v254 = vunpack.c.h.b16 %v78
    %v255 = vunpack.c.l.b16 %v79
    %v256 = vunpack.c.h.b16 %v79
    %v257 = vunpack.c.l.b16 %v80
    %v258 = vunpack.c.h.b16 %v80
    %v259 = vunpack.c.l.b16 %v81
    %v260 = vunpack.c.h.b16 %v81
    %v261 = vunpack.c.l.b16 %v82
    %v262 = vunpack.c.h.b16 %v82
    %v263 = vunpack.c.l.b16 %v83
    %v264 = vunpack.c.h.b16 %v83
    %v265 = vunpack.c.l.b16 %v84
    %v266 = vunpack.c.h.b16 %v84
    %v267 = vunpack.c.l.b16 %v85
    %v268 = vunpack.c.h.b16 %v85
    %v269 = vunpack.c.l.b16 %v86
    %v270 = vunpack.c.h.b16 %v86
    %v271 = vunpack.c.l.b16 %v87
    %v272 = vunpack.c.h.b16 %v87
    %v273 = vunpack.c.l.b16 %v88
    %v274 = vunpack.c.h.b16 %v88
    %v275 = vunpack.c.l.b16 %v89
    %v276 = vunpack.c.h.b16 %v89
    %v277 = vunpack.c.l.b16 %v90
    %v278 = vunpack.c.h.b16 %v90
    %v279 = vunpack.c.l.b16 %v91
    %v280 = vunpack.c.h.b16 %v91
    %v281 = vunpack.c.l.b16 %v92
    %v282 = vunpack.c.h.b16 %v92
    %v283 = vunpack.c.l.b16 %v93
    %v284 = vunpack.c.h.b16 %v93
    %v285 = vunpack.c.l.b16 %v94
    %v286 = vunpack.c.h.b16 %v94
    %v287 = vunpack.c.l.b16 %v95
    %v288 = vunpack.c.h.b16 %v95
    %v289 = vunpack.c.l.b16 %v96
    %v290 = vunpack.c.h.b16 %v96
    %v291 = vunpack.c.l.b16 %v97
    %v292 = vunpack.c.h.b16 %v97
    %v293 = vunpack.c.l.b16 %v98
    %v294 = vunpack.c.h.b16 %v98
    %v295 = vunpack.c.l.b16 %v99
    %v296 = vunpack.c.h.b16 %v99
    %v297 = vunpack.c.l.b16 %v100
    %v298 = vunpack.c.h.b16 %v100
    %v299 = vunpack.c.l.b16 %v101
    %v300 = vunpack.c.h.b16 %v101
    %v301 = vunpack.c.l.b16 %v102
    %v302 = vunpack.c.h.b16 %v102
    %v303 = vunpack.c.l.b16 %v103
    %v304 = vunpack.c.h.b16 %v103
    %v305 = vunpack.c.l.b16 %v104
    %v306 = vunpack.c.h.b16 %v104
    %v307 = vunpack.c.l.b16 %v105
    %v308 = vunpack.c.h.b16 %v105
    %v309 = vunpack.c.l.b16 %v106
    %v310 = vunpack.c.h.b16 %v106
    %v311 = vunpack.c.l.b16 %v107
    %v312 = vunpack.c.h.b16 %v107
    %v313 = vunpack.c.l.b16 %v108
    %v314 = vunpack.c.h.b16 %v108
    %v315 = vunpack.c.l.b16 %v109
    %v316 = vunpack.c.h.b16 %v109
    %v317 = vunpack.c.l.b16 %v110
    %v318 = vunpack.c.h.b16 %v110
    %v319 = vunpack.c.l.b16 %v111
    %v320 = vunpack.c.h.b16 %v111
    %v321 = vunpack.c.l.b16 %v112
    %v322 = vunpack.c.h.b16 %v112
    %v323 = vunpack.c.l.b16 %v113
    %v324 = vunpack.c.h.b16 %v113
    %v325 = vunpack.c.l.b16 %v114
    %v326 = vunpack.c.h.b16 %v114
    %v327 = vunpack.c.l.b16 %v115
    %v328 = vunpack.c.h.b16 %v115
    %v329 = vunpack.c.l.b16 %v116
    %v330 = vunpack.c.h.b16 %v116
    %v331 = vunpack.c.l.b16 %v117
    %v332 = vunpack.c.h.b16 %v117
    %v333 = vunpack.c.l.b16 %v118
    %v334 = vunpack.c.h.b16 %v118
    %v335 = vunpack.c.l.b16 %v119
    %v336 = vunpack.c.h.b16 %v119
    %v337 = vunpack.c.l.b16 %v120
    %v338 = vunpack.c.h.b16 %v120
    %v339 = vunpack.c.l.b16 %v121
    %v340 = vunpack.c.h.b16 %v121
    %v341 = vunpack.c.l.b16 %v122
    %v342 = vunpack.c.h.b16 %v122
    %v343 = vunpack.c.l.b16 %v123
    %v344 = vunpack.c.h.b16 %v123
    %v345 = vpack.c.b16 %v221, %v217
    %v346 = vpack.c.b16 %v222, %v218
    %v347 = vpack.c.b16 %v223, %v219
    %v348 = vpack.c.b16 %v224, %v220
    %v349 = vpack.c.b16 %v229, %v225
    %v350 = vpack.c.b16 %v230, %v226
    %v351 = vpack.c.b16 %v231, %v227
    %v352 = vpack.c.b16 %v232, %v228
    %v353 = vpack.c.b16 %v237, %v233
    %v354 = vpack.c.b16 %v238, %v234
    %v355 = vpack.c.b16 %v239, %v235
    %v356 = vpack.c.b16 %v240, %v236
    %v357 = vpack.c.b16 %v245, %v241
    %v358 = vpack.c.b16 %v246, %v242
    %v359 = vpack.c.b16 %v247, %v243
    %v360 = vpack.c.b16 %v248, %v244
    %v361 = vpack.c.b16 %v253, %v249
    %v362 = vpack.c.b16 %v254, %v250
    %v363 = vpack.c.b16 %v255, %v251
    %v364 = vpack.c.b16 %v256, %v252
    %v365 = vpack.c.b16 %v261, %v257
    %v366 = vpack.c.b16 %v262, %v258
    %v367 = vpack.c.b16 %v263, %v259
    %v368 = vpack.c.b16 %v264, %v260
    %v369 = vpack.c.b16 %v269, %v265
    %v370 = vpack.c.b16 %v270, %v266
    %v371 = vpack.c.b16 %v271, %v267
    %v372 = vpack.c.b16 %v272, %v268
    %v373 = vpack.c.b16 %v277, %v273
    %v374 = vpack.c.b16 %v278, %v274
    %v375 = vpack.c.b16 %v279, %v275
    %v376 = vpack.c.b16 %v280, %v276
    %v377 = vpack.c.b16 %v285, %v281
    %v378 = vpack.c.b16 %v286, %v282
    %v379 = vpack.c.b16 %v287, %v283
    %v380 = vpack.c.b16 %v288, %v284
    %v381 = vpack.c.b16 %v293, %v289
    %v382 = vpack.c.b16 %v294, %v290
    %v383 = vpack.c.b16 %v295, %v291
    %v384 = vpack.c.b16 %v296, %v292
    %v385 = vpack.c.b16 %v301, %v297
    %v386 = vpack.c.b16 %v302, %v298
    %v387 = vpack.c.b16 %v303, %v299
    %v388 = vpack.c.b16 %v304, %v300
    %v389 = vpack.c.b16 %v309, %v305
    %v390 = vpack.c.b16 %v310, %v306
    %v391 = vpack.c.b16 %v311, %v307
    %v392 = vpack.c.b16 %v312, %v308
    %v393 = vpack.c.b16 %v317, %v313
    %v394 = vpack.c.b16 %v318, %v314
    %v395 = vpack.c.b16 %v319, %v315
    %v396 = vpack.c.b16 %v320, %v316
    %v397 = vpack.c.b16 %v325, %v321
    %v398 = vpack.c.b16 %v326, %v322
    %v399 = vpack.c.b16 %v327, %v323
    %v400 = vpack.c.b16 %v328, %v324
    %v401 = vpack.c.b16 %v333, %v329
    %v402 = vpack.c.b16 %v334, %v330
    %v403 = vpack.c.b16 %v335, %v331
    %v404 = vpack.c.b16 %v336, %v332
    %v405 = vpack.c.b16 %v341, %v337
    %v406 = vpack.c.b16 %v342, %v338
    %v407 = vpack.c.b16 %v343, %v339
    %v408 = vpack.c.b16 %v344, %v340
    %473 = vmatprep.subr.bf16.mxu0 %v346
    %474 = vmatpush1.bf16.msra.mxu0 %v345
    %475 = vmatprep.subr.bf16.mxu0 %v350
    %476 = vmatpush1.bf16.msra.mxu0 %v349
    %477 = vmatprep.subr.bf16.mxu0 %v354
    %478 = vmatpush1.bf16.msra.mxu0 %v353
    %479 = vmatprep.subr.bf16.mxu0 %v358
    %480 = vmatpush1.bf16.msra.mxu0 %v357
    %481 = vmatprep.subr.bf16.mxu0 %v362
    %482 = vmatpush1.bf16.msra.mxu0 %v361
    %483 = vmatprep.subr.bf16.mxu0 %v366
    %484 = vmatpush1.bf16.msra.mxu0 %v365
    %485 = vmatprep.subr.bf16.mxu0 %v370
    %486 = vmatpush1.bf16.msra.mxu0 %v369
    %487 = vmatprep.subr.bf16.mxu0 %v374
    %488 = vmatpush1.bf16.msra.mxu0 %v373
    %489 = vmatprep.subr.bf16.mxu0 %v378
    %490 = vmatpush1.bf16.msra.mxu0 %v377
    %491 = vmatprep.subr.bf16.mxu0 %v382
    %492 = vmatpush1.bf16.msra.mxu0 %v381
    %493 = vmatprep.subr.bf16.mxu0 %v386
    %494 = vmatpush1.bf16.msra.mxu0 %v385
    %495 = vmatprep.subr.bf16.mxu0 %v390
    %496 = vmatpush1.bf16.msra.mxu0 %v389
    %497 = vmatprep.subr.bf16.mxu0 %v394
    %498 = vmatpush1.bf16.msra.mxu0 %v393
    %499 = vmatprep.subr.bf16.mxu0 %v398
    %500 = vmatpush1.bf16.msra.mxu0 %v397
    %501 = vmatprep.subr.bf16.mxu0 %v402
    %502 = vmatpush1.bf16.msra.mxu0 %v401
    %503 = vmatprep.subr.bf16.mxu0 %v406
    %504 = vmatpush1.bf16.msra.mxu0 %v405
    %505 = vmatprep.mubr.bf16.mxu0 %v150
    %506 = vmatmul.mubr.bf16.gmra.mrb[0].mxu0 %v149
    %v507 = vpop.f32.mrb[0].mxu0
    %v508 = vadd.f32 %v129, %v507
    %v509 = vpop.f32.mrb[0].mxu0
    %v510 = vadd.f32 %v133, %v509
    %v511 = vpop.f32.mrb[0].mxu0
    %v512 = vpop.f32.mrb[0].mxu0
    %513 = vdwg.mxu0
    %514 = vmatprep.subr.bf16.mxu0 %v348
    %515 = vmatpush1.bf16.msra.mxu0 %v347
    %516 = vmatprep.subr.bf16.mxu0 %v352
    %517 = vmatpush1.bf16.msra.mxu0 %v351
    %518 = vmatprep.subr.bf16.mxu0 %v356
    %519 = vmatpush1.bf16.msra.mxu0 %v355
    %520 = vmatprep.subr.bf16.mxu0 %v360
    %521 = vmatpush1.bf16.msra.mxu0 %v359
    %522 = vmatprep.subr.bf16.mxu0 %v364
    %523 = vmatpush1.bf16.msra.mxu0 %v363
    %524 = vmatprep.subr.bf16.mxu0 %v368
    %525 = vmatpush1.bf16.msra.mxu0 %v367
    %526 = vmatprep.subr.bf16.mxu0 %v372
    %527 = vmatpush1.bf16.msra.mxu0 %v371
    %528 = vmatprep.subr.bf16.mxu0 %v376
    %529 = vmatpush1.bf16.msra.mxu0 %v375
    %530 = vmatprep.subr.bf16.mxu0 %v380
    %531 = vmatpush1.bf16.msra.mxu0 %v379
    %532 = vmatprep.subr.bf16.mxu0 %v384
    %533 = vmatpush1.bf16.msra.mxu0 %v383
    %534 = vmatprep.subr.bf16.mxu0 %v388
    %535 = vmatpush1.bf16.msra.mxu0 %v387
    %536 = vmatprep.subr.bf16.mxu0 %v392
    %537 = vmatpush1.bf16.msra.mxu0 %v391
    %538 = vmatprep.subr.bf16.mxu0 %v396
    %539 = vmatpush1.bf16.msra.mxu0 %v395
    %540 = vmatprep.subr.bf16.mxu0 %v400
    %541 = vmatpush1.bf16.msra.mxu0 %v399
    %542 = vmatprep.subr.bf16.mxu0 %v404
    %543 = vmatpush1.bf16.msra.mxu0 %v403
    %544 = vmatprep.subr.bf16.mxu0 %v408
    %545 = vmatpush1.bf16.msra.mxu0 %v407
    %546 = vmatprep.mubr.bf16.mxu0 %v150
    %547 = vmatmul.mubr.bf16.gmra.mrb[0].mxu0 %v149
    %v548 = vpop.f32.mrb[0].mxu0
    %v549 = vadd.f32 %v137, %v548
    %v550 = vpop.f32.mrb[0].mxu0
    %v551 = vadd.f32 %v141, %v550
    %v552 = vpop.f32.mrb[0].mxu0
    %v553 = vpop.f32.mrb[0].mxu0
    %554 = vdwg.mxu0
    %v555 = vmax.f32 %v508, 0.0
    %v556 = vmax.f32 %v510, 0.0
    %v557 = vmax.f32 %v549, 0.0
    %v558 = vmax.f32 %v551, 0.0
    %v559 = vpack.c.bf16 %v555, %v555
    %v560 = vpack.c.bf16 %v556, %v556
    %v561 = vpack.c.bf16 %v557, %v557
    %v562 = vpack.c.bf16 %v558, %v558
    %v563 = vld [vmem:[#allocation2 + $0x200] sm:$0xff]
    %v564 = vld [vmem:[#allocation2 + $0x208] sm:$0xff]
    %v565 = vld [vmem:[#allocation2 + $0x210] sm:$0xff]
    %v566 = vld [vmem:[#allocation2 + $0x218] sm:$0xff]
    %v567 = vld [vmem:[#allocation2 + $0x220] sm:$0xff]
    %v568 = vld [vmem:[#allocation2 + $0x228] sm:$0xff]
    %v569 = vld [vmem:[#allocation2 + $0x230] sm:$0xff]
    %v570 = vld [vmem:[#allocation2 + $0x238] sm:$0xff]
    %v571 = vld [vmem:[#allocation2 + $0x240] sm:$0xff]
    %v572 = vld [vmem:[#allocation2 + $0x248] sm:$0xff]
    %v573 = vld [vmem:[#allocation2 + $0x250] sm:$0xff]
    %v574 = vld [vmem:[#allocation2 + $0x258] sm:$0xff]
    %v575 = vld [vmem:[#allocation2 + $0x260] sm:$0xff]
    %v576 = vld [vmem:[#allocation2 + $0x268] sm:$0xff]
    %v577 = vld [vmem:[#allocation2 + $0x270] sm:$0xff]
    %v578 = vld [vmem:[#allocation2 + $0x278] sm:$0xff]
    %v579 = vld [vmem:[#allocation2 + $0x280] sm:$0xff]
    %v580 = vld [vmem:[#allocation2 + $0x288] sm:$0xff]
    %v581 = vld [vmem:[#allocation2 + $0x290] sm:$0xff]
    %v582 = vld [vmem:[#allocation2 + $0x298] sm:$0xff]
    %v583 = vld [vmem:[#allocation2 + $0x2a0] sm:$0xff]
    %v584 = vld [vmem:[#allocation2 + $0x2a8] sm:$0xff]
    %v585 = vld [vmem:[#allocation2 + $0x2b0] sm:$0xff]
    %v586 = vld [vmem:[#allocation2 + $0x2b8] sm:$0xff]
    %v587 = vld [vmem:[#allocation2 + $0x2c0] sm:$0xff]
    %v588 = vld [vmem:[#allocation2 + $0x2c8] sm:$0xff]
    %v589 = vld [vmem:[#allocation2 + $0x2d0] sm:$0xff]
    %v590 = vld [vmem:[#allocation2 + $0x2d8] sm:$0xff]
    %v591 = vld [vmem:[#allocation2 + $0x2e0] sm:$0xff]
    %v592 = vld [vmem:[#allocation2 + $0x2e8] sm:$0xff]
    %v593 = vld [vmem:[#allocation2 + $0x2f0] sm:$0xff]
    %v594 = vld [vmem:[#allocation2 + $0x2f8] sm:$0xff]
    %v595 = vld [vmem:[#allocation2 + $0x300] sm:$0xff]
    %v596 = vld [vmem:[#allocation2 + $0x308] sm:$0xff]
    %v597 = vld [vmem:[#allocation2 + $0x310] sm:$0xff]
    %v598 = vld [vmem:[#allocation2 + $0x318] sm:$0xff]
    %v599 = vld [vmem:[#allocation2 + $0x320] sm:$0xff]
    %v600 = vld [vmem:[#allocation2 + $0x328] sm:$0xff]
    %v601 = vld [vmem:[#allocation2 + $0x330] sm:$0xff]
    %v602 = vld [vmem:[#allocation2 + $0x338] sm:$0xff]
    %v603 = vld [vmem:[#allocation2 + $0x340] sm:$0xff]
    %v604 = vld [vmem:[#allocation2 + $0x348] sm:$0xff]
    %v605 = vld [vmem:[#allocation2 + $0x350] sm:$0xff]
    %v606 = vld [vmem:[#allocation2 + $0x358] sm:$0xff]
    %v607 = vld [vmem:[#allocation2 + $0x360] sm:$0xff]
    %v608 = vld [vmem:[#allocation2 + $0x368] sm:$0xff]
    %v609 = vld [vmem:[#allocation2 + $0x370] sm:$0xff]
    %v610 = vld [vmem:[#allocation2 + $0x378] sm:$0xff]
    %v611 = vld [vmem:[#allocation2 + $0x380] sm:$0xff]
    %v612 = vld [vmem:[#allocation2 + $0x388] sm:$0xff]
    %v613 = vld [vmem:[#allocation2 + $0x390] sm:$0xff]
    %v614 = vld [vmem:[#allocation2 + $0x398] sm:$0xff]
    %v615 = vld [vmem:[#allocation2 + $0x3a0] sm:$0xff]
    %v616 = vld [vmem:[#allocation2 + $0x3a8] sm:$0xff]
    %v617 = vld [vmem:[#allocation2 + $0x3b0] sm:$0xff]
    %v618 = vld [vmem:[#allocation2 + $0x3b8] sm:$0xff]
    %v619 = vld [vmem:[#allocation2 + $0x3c0] sm:$0xff]
    %v620 = vld [vmem:[#allocation2 + $0x3c8] sm:$0xff]
    %v621 = vld [vmem:[#allocation2 + $0x3d0] sm:$0xff]
    %v622 = vld [vmem:[#allocation2 + $0x3d8] sm:$0xff]
    %v623 = vld [vmem:[#allocation2 + $0x3e0] sm:$0xff]
    %v624 = vld [vmem:[#allocation2 + $0x3e8] sm:$0xff]
    %v625 = vld [vmem:[#allocation2 + $0x3f0] sm:$0xff]
    %v626 = vld [vmem:[#allocation2 + $0x3f8] sm:$0xff]
    %v627 = vld [vmem:[#allocation2 + $0x400] sm:$0xff]
    %v628 = vld [vmem:[#allocation2 + $0x408] sm:$0xff]
    %v629 = vld [vmem:[#allocation2 + $0x410] sm:$0xff]
    %v630 = vld [vmem:[#allocation2 + $0x418] sm:$0xff]
    %v631 = vld [vmem:[#allocation2 + $0x420] sm:$0xff]
    %v632 = vld [vmem:[#allocation2 + $0x428] sm:$0xff]
    %v633 = vld [vmem:[#allocation2 + $0x430] sm:$0xff]
    %v634 = vld [vmem:[#allocation2 + $0x438] sm:$0xff]
    %v635 = vld [vmem:[#allocation2 + $0x440] sm:$0xff]
    %v636 = vld [vmem:[#allocation2 + $0x448] sm:$0xff]
    %v637 = vld [vmem:[#allocation2 + $0x450] sm:$0xff]
    %v638 = vld [vmem:[#allocation2 + $0x458] sm:$0xff]
    %v639 = vld [vmem:[#allocation2 + $0x460] sm:$0xff]
    %v640 = vld [vmem:[#allocation2 + $0x468] sm:$0xff]
    %v641 = vld [vmem:[#allocation2 + $0x470] sm:$0xff]
    %v642 = vld [vmem:[#allocation2 + $0x478] sm:$0xff]
    %v643 = vld [vmem:[#allocation2 + $0x480] sm:$0xff]
    %v644 = vld [vmem:[#allocation2 + $0x488] sm:$0xff]
    %v645 = vld [vmem:[#allocation2 + $0x490] sm:$0xff]
    %v646 = vld [vmem:[#allocation2 + $0x498] sm:$0xff]
    %v647 = vld [vmem:[#allocation2 + $0x4a0] sm:$0xff]
    %v648 = vld [vmem:[#allocation2 + $0x4a8] sm:$0xff]
    %v649 = vld [vmem:[#allocation2 + $0x4b0] sm:$0xff]
    %v650 = vld [vmem:[#allocation2 + $0x4b8] sm:$0xff]
    %v651 = vld [vmem:[#allocation2 + $0x4c0] sm:$0xff]
    %v652 = vld [vmem:[#allocation2 + $0x4c8] sm:$0xff]
    %v653 = vld [vmem:[#allocation2 + $0x4d0] sm:$0xff]
    %v654 = vld [vmem:[#allocation2 + $0x4d8] sm:$0xff]
    %v655 = vld [vmem:[#allocation2 + $0x4e0] sm:$0xff]
    %v656 = vld [vmem:[#allocation2 + $0x4e8] sm:$0xff]
    %v657 = vld [vmem:[#allocation2 + $0x4f0] sm:$0xff]
    %v658 = vld [vmem:[#allocation2 + $0x4f8] sm:$0xff]
    %v659 = vld [vmem:[#allocation2 + $0x500] sm:$0xff]
    %v660 = vld [vmem:[#allocation2 + $0x508] sm:$0xff]
    %v661 = vld [vmem:[#allocation2 + $0x510] sm:$0xff]
    %v662 = vld [vmem:[#allocation2 + $0x518] sm:$0xff]
    %v663 = vld [vmem:[#allocation2 + $0x520] sm:$0xff]
    %v664 = vld [vmem:[#allocation2 + $0x528] sm:$0xff]
    %v665 = vld [vmem:[#allocation2 + $0x530] sm:$0xff]
    %v666 = vld [vmem:[#allocation2 + $0x538] sm:$0xff]
    %v667 = vld [vmem:[#allocation2 + $0x540] sm:$0xff]
    %v668 = vld [vmem:[#allocation2 + $0x548] sm:$0xff]
    %v669 = vld [vmem:[#allocation2 + $0x550] sm:$0xff]
    %v670 = vld [vmem:[#allocation2 + $0x558] sm:$0xff]
    %v671 = vld [vmem:[#allocation2 + $0x560] sm:$0xff]
    %v672 = vld [vmem:[#allocation2 + $0x568] sm:$0xff]
    %v673 = vld [vmem:[#allocation2 + $0x570] sm:$0xff]
    %v674 = vld [vmem:[#allocation2 + $0x578] sm:$0xff]
    %v675 = vld [vmem:[#allocation2 + $0x580] sm:$0xff]
    %v676 = vld [vmem:[#allocation2 + $0x588] sm:$0xff]
    %v677 = vld [vmem:[#allocation2 + $0x590] sm:$0xff]
    %v678 = vld [vmem:[#allocation2 + $0x598] sm:$0xff]
    %v679 = vld [vmem:[#allocation2 + $0x5a0] sm:$0xff]
    %v680 = vld [vmem:[#allocation2 + $0x5a8] sm:$0xff]
    %v681 = vld [vmem:[#allocation2 + $0x5b0] sm:$0xff]
    %v682 = vld [vmem:[#allocation2 + $0x5b8] sm:$0xff]
    %v683 = vld [vmem:[#allocation2 + $0x5c0] sm:$0xff]
    %v684 = vld [vmem:[#allocation2 + $0x5c8] sm:$0xff]
    %v685 = vld [vmem:[#allocation2 + $0x5d0] sm:$0xff]
    %v686 = vld [vmem:[#allocation2 + $0x5d8] sm:$0xff]
    %v687 = vld [vmem:[#allocation2 + $0x5e0] sm:$0xff]
    %v688 = vld [vmem:[#allocation2 + $0x5e8] sm:$0xff]
    %v689 = vld [vmem:[#allocation2 + $0x5f0] sm:$0xff]
    %v690 = vld [vmem:[#allocation2 + $0x5f8] sm:$0xff]
    %v691 = vld [vmem:[#allocation6 + $0x4] sm:$0xf]
    %v693 = vlaneseq
    %v694 = vshrl.u32 %v693, 7
    %v695 = vsub.s32 0, %v694
    %v696 = vrot.slane %v691, %v695
    %v697 = vlaneseq
    %v698 = vshrl.u32 %v697, 7
    %v699 = vsub.s32 1, %v698
    %v700 = vrot.slane %v691, %v699
    %v701 = vlaneseq
    %v702 = vshrl.u32 %v701, 7
    %v703 = vsub.s32 2, %v702
    %v704 = vrot.slane %v691, %v703
    %v705 = vlaneseq
    %v706 = vshrl.u32 %v705, 7
    %v707 = vsub.s32 3, %v706
    %v708 = vrot.slane %v691, %v707
    %v841 = vunpack.c.l.b16 %v563
    %v842 = vunpack.c.h.b16 %v563
    %v843 = vunpack.c.l.b16 %v564
    %v844 = vunpack.c.h.b16 %v564
    %v845 = vunpack.c.l.b16 %v565
    %v846 = vunpack.c.h.b16 %v565
    %v847 = vunpack.c.l.b16 %v566
    %v848 = vunpack.c.h.b16 %v566
    %v849 = vunpack.c.l.b16 %v567
    %v850 = vunpack.c.h.b16 %v567
    %v851 = vunpack.c.l.b16 %v568
    %v852 = vunpack.c.h.b16 %v568
    %v853 = vunpack.c.l.b16 %v569
    %v854 = vunpack.c.h.b16 %v569
    %v855 = vunpack.c.l.b16 %v570
    %v856 = vunpack.c.h.b16 %v570
    %v857 = vunpack.c.l.b16 %v571
    %v858 = vunpack.c.h.b16 %v571
    %v859 = vunpack.c.l.b16 %v572
    %v860 = vunpack.c.h.b16 %v572
    %v861 = vunpack.c.l.b16 %v573
    %v862 = vunpack.c.h.b16 %v573
    %v863 = vunpack.c.l.b16 %v574
    %v864 = vunpack.c.h.b16 %v574
    %v865 = vunpack.c.l.b16 %v575
    %v866 = vunpack.c.h.b16 %v575
    %v867 = vunpack.c.l.b16 %v576
    %v868 = vunpack.c.h.b16 %v576
    %v869 = vunpack.c.l.b16 %v577
    %v870 = vunpack.c.h.b16 %v577
    %v871 = vunpack.c.l.b16 %v578
    %v872 = vunpack.c.h.b16 %v578
    %v873 = vunpack.c.l.b16 %v579
    %v874 = vunpack.c.h.b16 %v579
    %v875 = vunpack.c.l.b16 %v580
    %v876 = vunpack.c.h.b16 %v580
    %v877 = vunpack.c.l.b16 %v581
    %v878 = vunpack.c.h.b16 %v581
    %v879 = vunpack.c.l.b16 %v582
    %v880 = vunpack.c.h.b16 %v582
    %v881 = vunpack.c.l.b16 %v583
    %v882 = vunpack.c.h.b16 %v583
    %v883 = vunpack.c.l.b16 %v584
    %v884 = vunpack.c.h.b16 %v584
    %v885 = vunpack.c.l.b16 %v585
    %v886 = vunpack.c.h.b16 %v585
    %v887 = vunpack.c.l.b16 %v586
    %v888 = vunpack.c.h.b16 %v586
    %v889 = vunpack.c.l.b16 %v587
    %v890 = vunpack.c.h.b16 %v587
    %v891 = vunpack.c.l.b16 %v588
    %v892 = vunpack.c.h.b16 %v588
    %v893 = vunpack.c.l.b16 %v589
    %v894 = vunpack.c.h.b16 %v589
    %v895 = vunpack.c.l.b16 %v590
    %v896 = vunpack.c.h.b16 %v590
    %v897 = vunpack.c.l.b16 %v591
    %v898 = vunpack.c.h.b16 %v591
    %v899 = vunpack.c.l.b16 %v592
    %v900 = vunpack.c.h.b16 %v592
    %v901 = vunpack.c.l.b16 %v593
    %v902 = vunpack.c.h.b16 %v593
    %v903 = vunpack.c.l.b16 %v594
    %v904 = vunpack.c.h.b16 %v594
    %v905 = vunpack.c.l.b16 %v595
    %v906 = vunpack.c.h.b16 %v595
    %v907 = vunpack.c.l.b16 %v596
    %v908 = vunpack.c.h.b16 %v596
    %v909 = vunpack.c.l.b16 %v597
    %v910 = vunpack.c.h.b16 %v597
    %v911 = vunpack.c.l.b16 %v598
    %v912 = vunpack.c.h.b16 %v598
    %v913 = vunpack.c.l.b16 %v599
    %v914 = vunpack.c.h.b16 %v599
    %v915 = vunpack.c.l.b16 %v600
    %v916 = vunpack.c.h.b16 %v600
    %v917 = vunpack.c.l.b16 %v601
    %v918 = vunpack.c.h.b16 %v601
    %v919 = vunpack.c.l.b16 %v602
    %v920 = vunpack.c.h.b16 %v602
    %v921 = vunpack.c.l.b16 %v603
    %v922 = vunpack.c.h.b16 %v603
    %v923 = vunpack.c.l.b16 %v604
    %v924 = vunpack.c.h.b16 %v604
    %v925 = vunpack.c.l.b16 %v605
    %v926 = vunpack.c.h.b16 %v605
    %v927 = vunpack.c.l.b16 %v606
    %v928 = vunpack.c.h.b16 %v606
    %v929 = vunpack.c.l.b16 %v607
    %v930 = vunpack.c.h.b16 %v607
    %v931 = vunpack.c.l.b16 %v608
    %v932 = vunpack.c.h.b16 %v608
    %v933 = vunpack.c.l.b16 %v609
    %v934 = vunpack.c.h.b16 %v609
    %v935 = vunpack.c.l.b16 %v610
    %v936 = vunpack.c.h.b16 %v610
    %v937 = vunpack.c.l.b16 %v611
    %v938 = vunpack.c.h.b16 %v611
    %v939 = vunpack.c.l.b16 %v612
    %v940 = vunpack.c.h.b16 %v612
    %v941 = vunpack.c.l.b16 %v613
    %v942 = vunpack.c.h.b16 %v613
    %v943 = vunpack.c.l.b16 %v614
    %v944 = vunpack.c.h.b16 %v614
    %v945 = vunpack.c.l.b16 %v615
    %v946 = vunpack.c.h.b16 %v615
    %v947 = vunpack.c.l.b16 %v616
    %v948 = vunpack.c.h.b16 %v616
    %v949 = vunpack.c.l.b16 %v617
    %v950 = vunpack.c.h.b16 %v617
    %v951 = vunpack.c.l.b16 %v618
    %v952 = vunpack.c.h.b16 %v618
    %v953 = vunpack.c.l.b16 %v619
    %v954 = vunpack.c.h.b16 %v619
    %v955 = vunpack.c.l.b16 %v620
    %v956 = vunpack.c.h.b16 %v620
    %v957 = vunpack.c.l.b16 %v621
    %v958 = vunpack.c.h.b16 %v621
    %v959 = vunpack.c.l.b16 %v622
    %v960 = vunpack.c.h.b16 %v622
    %v961 = vunpack.c.l.b16 %v623
    %v962 = vunpack.c.h.b16 %v623
    %v963 = vunpack.c.l.b16 %v624
    %v964 = vunpack.c.h.b16 %v624
    %v965 = vunpack.c.l.b16 %v625
    %v966 = vunpack.c.h.b16 %v625
    %v967 = vunpack.c.l.b16 %v626
    %v968 = vunpack.c.h.b16 %v626
    %v969 = vunpack.c.l.b16 %v627
    %v970 = vunpack.c.h.b16 %v627
    %v971 = vunpack.c.l.b16 %v628
    %v972 = vunpack.c.h.b16 %v628
    %v973 = vunpack.c.l.b16 %v629
    %v974 = vunpack.c.h.b16 %v629
    %v975 = vunpack.c.l.b16 %v630
    %v976 = vunpack.c.h.b16 %v630
    %v977 = vunpack.c.l.b16 %v631
    %v978 = vunpack.c.h.b16 %v631
    %v979 = vunpack.c.l.b16 %v632
    %v980 = vunpack.c.h.b16 %v632
    %v981 = vunpack.c.l.b16 %v633
    %v982 = vunpack.c.h.b16 %v633
    %v983 = vunpack.c.l.b16 %v634
    %v984 = vunpack.c.h.b16 %v634
    %v985 = vunpack.c.l.b16 %v635
    %v986 = vunpack.c.h.b16 %v635
    %v987 = vunpack.c.l.b16 %v636
    %v988 = vunpack.c.h.b16 %v636
    %v989 = vunpack.c.l.b16 %v637
    %v990 = vunpack.c.h.b16 %v637
    %v991 = vunpack.c.l.b16 %v638
    %v992 = vunpack.c.h.b16 %v638
    %v993 = vunpack.c.l.b16 %v639
    %v994 = vunpack.c.h.b16 %v639
    %v995 = vunpack.c.l.b16 %v640
    %v996 = vunpack.c.h.b16 %v640
    %v997 = vunpack.c.l.b16 %v641
    %v998 = vunpack.c.h.b16 %v641
    %v999 = vunpack.c.l.b16 %v642
    %v1000 = vunpack.c.h.b16 %v642
    %v1001 = vunpack.c.l.b16 %v643
    %v1002 = vunpack.c.h.b16 %v643
    %v1003 = vunpack.c.l.b16 %v644
    %v1004 = vunpack.c.h.b16 %v644
    %v1005 = vunpack.c.l.b16 %v645
    %v1006 = vunpack.c.h.b16 %v645
    %v1007 = vunpack.c.l.b16 %v646
    %v1008 = vunpack.c.h.b16 %v646
    %v1009 = vunpack.c.l.b16 %v647
    %v1010 = vunpack.c.h.b16 %v647
    %v1011 = vunpack.c.l.b16 %v648
    %v1012 = vunpack.c.h.b16 %v648
    %v1013 = vunpack.c.l.b16 %v649
    %v1014 = vunpack.c.h.b16 %v649
    %v1015 = vunpack.c.l.b16 %v650
    %v1016 = vunpack.c.h.b16 %v650
    %v1017 = vunpack.c.l.b16 %v651
    %v1018 = vunpack.c.h.b16 %v651
    %v1019 = vunpack.c.l.b16 %v652
    %v1020 = vunpack.c.h.b16 %v652
    %v1021 = vunpack.c.l.b16 %v653
    %v1022 = vunpack.c.h.b16 %v653
    %v1023 = vunpack.c.l.b16 %v654
    %v1024 = vunpack.c.h.b16 %v654
    %v1025 = vunpack.c.l.b16 %v655
    %v1026 = vunpack.c.h.b16 %v655
    %v1027 = vunpack.c.l.b16 %v656
    %v1028 = vunpack.c.h.b16 %v656
    %v1029 = vunpack.c.l.b16 %v657
    %v1030 = vunpack.c.h.b16 %v657
    %v1031 = vunpack.c.l.b16 %v658
    %v1032 = vunpack.c.h.b16 %v658
    %v1033 = vunpack.c.l.b16 %v659
    %v1034 = vunpack.c.h.b16 %v659
    %v1035 = vunpack.c.l.b16 %v660
    %v1036 = vunpack.c.h.b16 %v660
    %v1037 = vunpack.c.l.b16 %v661
    %v1038 = vunpack.c.h.b16 %v661
    %v1039 = vunpack.c.l.b16 %v662
    %v1040 = vunpack.c.h.b16 %v662
    %v1041 = vunpack.c.l.b16 %v663
    %v1042 = vunpack.c.h.b16 %v663
    %v1043 = vunpack.c.l.b16 %v664
    %v1044 = vunpack.c.h.b16 %v664
    %v1045 = vunpack.c.l.b16 %v665
    %v1046 = vunpack.c.h.b16 %v665
    %v1047 = vunpack.c.l.b16 %v666
    %v1048 = vunpack.c.h.b16 %v666
    %v1049 = vunpack.c.l.b16 %v667
    %v1050 = vunpack.c.h.b16 %v667
    %v1051 = vunpack.c.l.b16 %v668
    %v1052 = vunpack.c.h.b16 %v668
    %v1053 = vunpack.c.l.b16 %v669
    %v1054 = vunpack.c.h.b16 %v669
    %v1055 = vunpack.c.l.b16 %v670
    %v1056 = vunpack.c.h.b16 %v670
    %v1057 = vunpack.c.l.b16 %v671
    %v1058 = vunpack.c.h.b16 %v671
    %v1059 = vunpack.c.l.b16 %v672
    %v1060 = vunpack.c.h.b16 %v672
    %v1061 = vunpack.c.l.b16 %v673
    %v1062 = vunpack.c.h.b16 %v673
    %v1063 = vunpack.c.l.b16 %v674
    %v1064 = vunpack.c.h.b16 %v674
    %v1065 = vunpack.c.l.b16 %v675
    %v1066 = vunpack.c.h.b16 %v675
    %v1067 = vunpack.c.l.b16 %v676
    %v1068 = vunpack.c.h.b16 %v676
    %v1069 = vunpack.c.l.b16 %v677
    %v1070 = vunpack.c.h.b16 %v677
    %v1071 = vunpack.c.l.b16 %v678
    %v1072 = vunpack.c.h.b16 %v678
    %v1073 = vunpack.c.l.b16 %v679
    %v1074 = vunpack.c.h.b16 %v679
    %v1075 = vunpack.c.l.b16 %v680
    %v1076 = vunpack.c.h.b16 %v680
    %v1077 = vunpack.c.l.b16 %v681
    %v1078 = vunpack.c.h.b16 %v681
    %v1079 = vunpack.c.l.b16 %v682
    %v1080 = vunpack.c.h.b16 %v682
    %v1081 = vunpack.c.l.b16 %v683
    %v1082 = vunpack.c.h.b16 %v683
    %v1083 = vunpack.c.l.b16 %v684
    %v1084 = vunpack.c.h.b16 %v684
    %v1085 = vunpack.c.l.b16 %v685
    %v1086 = vunpack.c.h.b16 %v685
    %v1087 = vunpack.c.l.b16 %v686
    %v1088 = vunpack.c.h.b16 %v686
    %v1089 = vunpack.c.l.b16 %v687
    %v1090 = vunpack.c.h.b16 %v687
    %v1091 = vunpack.c.l.b16 %v688
    %v1092 = vunpack.c.h.b16 %v688
    %v1093 = vunpack.c.l.b16 %v689
    %v1094 = vunpack.c.h.b16 %v689
    %v1095 = vunpack.c.l.b16 %v690
    %v1096 = vunpack.c.h.b16 %v690
    %v1097 = vpack.c.b16 %v845, %v841
    %v1098 = vpack.c.b16 %v846, %v842
    %v1099 = vpack.c.b16 %v847, %v843
    %v1100 = vpack.c.b16 %v848, %v844
    %v1101 = vpack.c.b16 %v853, %v849
    %v1102 = vpack.c.b16 %v854, %v850
    %v1103 = vpack.c.b16 %v855, %v851
    %v1104 = vpack.c.b16 %v856, %v852
    %v1105 = vpack.c.b16 %v861, %v857
    %v1106 = vpack.c.b16 %v862, %v858
    %v1107 = vpack.c.b16 %v863, %v859
    %v1108 = vpack.c.b16 %v864, %v860
    %v1109 = vpack.c.b16 %v869, %v865
    %v1110 = vpack.c.b16 %v870, %v866
    %v1111 = vpack.c.b16 %v871, %v867
    %v1112 = vpack.c.b16 %v872, %v868
    %v1113 = vpack.c.b16 %v877, %v873
    %v1114 = vpack.c.b16 %v878, %v874
    %v1115 = vpack.c.b16 %v879, %v875
    %v1116 = vpack.c.b16 %v880, %v876
    %v1117 = vpack.c.b16 %v885, %v881
    %v1118 = vpack.c.b16 %v886, %v882
    %v1119 = vpack.c.b16 %v887, %v883
    %v1120 = vpack.c.b16 %v888, %v884
    %v1121 = vpack.c.b16 %v893, %v889
    %v1122 = vpack.c.b16 %v894, %v890
    %v1123 = vpack.c.b16 %v895, %v891
    %v1124 = vpack.c.b16 %v896, %v892
    %v1125 = vpack.c.b16 %v901, %v897
    %v1126 = vpack.c.b16 %v902, %v898
    %v1127 = vpack.c.b16 %v903, %v899
    %v1128 = vpack.c.b16 %v904, %v900
    %v1129 = vpack.c.b16 %v909, %v905
    %v1130 = vpack.c.b16 %v910, %v906
    %v1131 = vpack.c.b16 %v911, %v907
    %v1132 = vpack.c.b16 %v912, %v908
    %v1133 = vpack.c.b16 %v917, %v913
    %v1134 = vpack.c.b16 %v918, %v914
    %v1135 = vpack.c.b16 %v919, %v915
    %v1136 = vpack.c.b16 %v920, %v916
    %v1137 = vpack.c.b16 %v925, %v921
    %v1138 = vpack.c.b16 %v926, %v922
    %v1139 = vpack.c.b16 %v927, %v923
    %v1140 = vpack.c.b16 %v928, %v924
    %v1141 = vpack.c.b16 %v933, %v929
    %v1142 = vpack.c.b16 %v934, %v930
    %v1143 = vpack.c.b16 %v935, %v931
    %v1144 = vpack.c.b16 %v936, %v932
    %v1145 = vpack.c.b16 %v941, %v937
    %v1146 = vpack.c.b16 %v942, %v938
    %v1147 = vpack.c.b16 %v943, %v939
    %v1148 = vpack.c.b16 %v944, %v940
    %v1149 = vpack.c.b16 %v949, %v945
    %v1150 = vpack.c.b16 %v950, %v946
    %v1151 = vpack.c.b16 %v951, %v947
    %v1152 = vpack.c.b16 %v952, %v948
    %v1153 = vpack.c.b16 %v957, %v953
    %v1154 = vpack.c.b16 %v958, %v954
    %v1155 = vpack.c.b16 %v959, %v955
    %v1156 = vpack.c.b16 %v960, %v956
    %v1157 = vpack.c.b16 %v965, %v961
    %v1158 = vpack.c.b16 %v966, %v962
    %v1159 = vpack.c.b16 %v967, %v963
    %v1160 = vpack.c.b16 %v968, %v964
    %v1161 = vpack.c.b16 %v973, %v969
    %v1162 = vpack.c.b16 %v974, %v970
    %v1163 = vpack.c.b16 %v975, %v971
    %v1164 = vpack.c.b16 %v976, %v972
    %v1165 = vpack.c.b16 %v981, %v977
    %v1166 = vpack.c.b16 %v982, %v978
    %v1167 = vpack.c.b16 %v983, %v979
    %v1168 = vpack.c.b16 %v984, %v980
    %v1169 = vpack.c.b16 %v989, %v985
    %v1170 = vpack.c.b16 %v990, %v986
    %v1171 = vpack.c.b16 %v991, %v987
    %v1172 = vpack.c.b16 %v992, %v988
    %v1173 = vpack.c.b16 %v997, %v993
    %v1174 = vpack.c.b16 %v998, %v994
    %v1175 = vpack.c.b16 %v999, %v995
    %v1176 = vpack.c.b16 %v1000, %v996
    %v1177 = vpack.c.b16 %v1005, %v1001
    %v1178 = vpack.c.b16 %v1006, %v1002
    %v1179 = vpack.c.b16 %v1007, %v1003
    %v1180 = vpack.c.b16 %v1008, %v1004
    %v1181 = vpack.c.b16 %v1013, %v1009
    %v1182 = vpack.c.b16 %v1014, %v1010
    %v1183 = vpack.c.b16 %v1015, %v1011
    %v1184 = vpack.c.b16 %v1016, %v1012
    %v1185 = vpack.c.b16 %v1021, %v1017
    %v1186 = vpack.c.b16 %v1022, %v1018
    %v1187 = vpack.c.b16 %v1023, %v1019
    %v1188 = vpack.c.b16 %v1024, %v1020
    %v1189 = vpack.c.b16 %v1029, %v1025
    %v1190 = vpack.c.b16 %v1030, %v1026
    %v1191 = vpack.c.b16 %v1031, %v1027
    %v1192 = vpack.c.b16 %v1032, %v1028
    %v1193 = vpack.c.b16 %v1037, %v1033
    %v1194 = vpack.c.b16 %v1038, %v1034
    %v1195 = vpack.c.b16 %v1039, %v1035
    %v1196 = vpack.c.b16 %v1040, %v1036
    %v1197 = vpack.c.b16 %v1045, %v1041
    %v1198 = vpack.c.b16 %v1046, %v1042
    %v1199 = vpack.c.b16 %v1047, %v1043
    %v1200 = vpack.c.b16 %v1048, %v1044
    %v1201 = vpack.c.b16 %v1053, %v1049
    %v1202 = vpack.c.b16 %v1054, %v1050
    %v1203 = vpack.c.b16 %v1055, %v1051
    %v1204 = vpack.c.b16 %v1056, %v1052
    %v1205 = vpack.c.b16 %v1061, %v1057
    %v1206 = vpack.c.b16 %v1062, %v1058
    %v1207 = vpack.c.b16 %v1063, %v1059
    %v1208 = vpack.c.b16 %v1064, %v1060
    %v1209 = vpack.c.b16 %v1069, %v1065
    %v1210 = vpack.c.b16 %v1070, %v1066
    %v1211 = vpack.c.b16 %v1071, %v1067
    %v1212 = vpack.c.b16 %v1072, %v1068
    %v1213 = vpack.c.b16 %v1077, %v1073
    %v1214 = vpack.c.b16 %v1078, %v1074
    %v1215 = vpack.c.b16 %v1079, %v1075
    %v1216 = vpack.c.b16 %v1080, %v1076
    %v1217 = vpack.c.b16 %v1085, %v1081
    %v1218 = vpack.c.b16 %v1086, %v1082
    %v1219 = vpack.c.b16 %v1087, %v1083
    %v1220 = vpack.c.b16 %v1088, %v1084
    %v1221 = vpack.c.b16 %v1093, %v1089
    %v1222 = vpack.c.b16 %v1094, %v1090
    %v1223 = vpack.c.b16 %v1095, %v1091
    %v1224 = vpack.c.b16 %v1096, %v1092
    %1353 = vmatprep.subr.bf16.mxu0 %v1098
    %1354 = vmatpush1.bf16.msra.mxu0 %v1097
    %1355 = vmatprep.subr.bf16.mxu0 %v1102
    %1356 = vmatpush1.bf16.msra.mxu0 %v1101
    %1357 = vmatprep.subr.bf16.mxu0 %v1106
    %1358 = vmatpush1.bf16.msra.mxu0 %v1105
    %1359 = vmatprep.subr.bf16.mxu0 %v1110
    %1360 = vmatpush1.bf16.msra.mxu0 %v1109
    %1361 = vmatprep.subr.bf16.mxu0 %v1114
    %1362 = vmatpush1.bf16.msra.mxu0 %v1113
    %1363 = vmatprep.subr.bf16.mxu0 %v1118
    %1364 = vmatpush1.bf16.msra.mxu0 %v1117
    %1365 = vmatprep.subr.bf16.mxu0 %v1122
    %1366 = vmatpush1.bf16.msra.mxu0 %v1121
    %1367 = vmatprep.subr.bf16.mxu0 %v1126
    %1368 = vmatpush1.bf16.msra.mxu0 %v1125
    %1369 = vmatprep.subr.bf16.mxu0 %v1130
    %1370 = vmatpush1.bf16.msra.mxu0 %v1129
    %1371 = vmatprep.subr.bf16.mxu0 %v1134
    %1372 = vmatpush1.bf16.msra.mxu0 %v1133
    %1373 = vmatprep.subr.bf16.mxu0 %v1138
    %1374 = vmatpush1.bf16.msra.mxu0 %v1137
    %1375 = vmatprep.subr.bf16.mxu0 %v1142
    %1376 = vmatpush1.bf16.msra.mxu0 %v1141
    %1377 = vmatprep.subr.bf16.mxu0 %v1146
    %1378 = vmatpush1.bf16.msra.mxu0 %v1145
    %1379 = vmatprep.subr.bf16.mxu0 %v1150
    %1380 = vmatpush1.bf16.msra.mxu0 %v1149
    %1381 = vmatprep.subr.bf16.mxu0 %v1154
    %1382 = vmatpush1.bf16.msra.mxu0 %v1153
    %1383 = vmatprep.subr.bf16.mxu0 %v1158
    %1384 = vmatpush1.bf16.msra.mxu0 %v1157
    %1385 = vmatprep.mubr.bf16.mxu0 %v560
    %1386 = vmatmul.mubr.bf16.gmra.mrb[0].mxu0 %v559
    %v1387 = vpop.f32.mrb[0].mxu0
    %v1388 = vadd.f32 %v696, %v1387
    %v1389 = vpop.f32.mrb[0].mxu0
    %v1390 = vadd.f32 %v700, %v1389
    %v1391 = vpop.f32.mrb[0].mxu0
    %v1392 = vpop.f32.mrb[0].mxu0
    %1393 = vdwg.mxu0
    %1394 = vmatprep.subr.bf16.mxu0 %v1162
    %1395 = vmatpush1.bf16.msra.mxu0 %v1161
    %1396 = vmatprep.subr.bf16.mxu0 %v1166
    %1397 = vmatpush1.bf16.msra.mxu0 %v1165
    %1398 = vmatprep.subr.bf16.mxu0 %v1170
    %1399 = vmatpush1.bf16.msra.mxu0 %v1169
    %1400 = vmatprep.subr.bf16.mxu0 %v1174
    %1401 = vmatpush1.bf16.msra.mxu0 %v1173
    %1402 = vmatprep.subr.bf16.mxu0 %v1178
    %1403 = vmatpush1.bf16.msra.mxu0 %v1177
    %1404 = vmatprep.subr.bf16.mxu0 %v1182
    %1405 = vmatpush1.bf16.msra.mxu0 %v1181
    %1406 = vmatprep.subr.bf16.mxu0 %v1186
    %1407 = vmatpush1.bf16.msra.mxu0 %v1185
    %1408 = vmatprep.subr.bf16.mxu0 %v1190
    %1409 = vmatpush1.bf16.msra.mxu0 %v1189
    %1410 = vmatprep.subr.bf16.mxu0 %v1194
    %1411 = vmatpush1.bf16.msra.mxu0 %v1193
    %1412 = vmatprep.subr.bf16.mxu0 %v1198
    %1413 = vmatpush1.bf16.msra.mxu0 %v1197
    %1414 = vmatprep.subr.bf16.mxu0 %v1202
    %1415 = vmatpush1.bf16.msra.mxu0 %v1201
    %1416 = vmatprep.subr.bf16.mxu0 %v1206
    %1417 = vmatpush1.bf16.msra.mxu0 %v1205
    %1418 = vmatprep.subr.bf16.mxu0 %v1210
    %1419 = vmatpush1.bf16.msra.mxu0 %v1209
    %1420 = vmatprep.subr.bf16.mxu0 %v1214
    %1421 = vmatpush1.bf16.msra.mxu0 %v1213
    %1422 = vmatprep.subr.bf16.mxu0 %v1218
    %1423 = vmatpush1.bf16.msra.mxu0 %v1217
    %1424 = vmatprep.subr.bf16.mxu0 %v1222
    %1425 = vmatpush1.bf16.msra.mxu0 %v1221
    %1426 = vmatprep.mubr.bf16.mxu0 %v562
    %1427 = vmatmul.mubr.bf16.gmra.mrb[0].mxu0 %v561
    %v1428 = vpop.f32.mrb[0].mxu0
    %v1429 = vadd.f32 %v1388, %v1428
    %v1430 = vpop.f32.mrb[0].mxu0
    %v1431 = vadd.f32 %v1390, %v1430
    %v1432 = vpop.f32.mrb[0].mxu0
    %v1433 = vpop.f32.mrb[0].mxu0
    %1434 = vdwg.mxu0
    %1435 = vmatprep.subr.bf16.mxu0 %v1100
    %1436 = vmatpush1.bf16.msra.mxu0 %v1099
    %1437 = vmatprep.subr.bf16.mxu0 %v1104
    %1438 = vmatpush1.bf16.msra.mxu0 %v1103
    %1439 = vmatprep.subr.bf16.mxu0 %v1108
    %1440 = vmatpush1.bf16.msra.mxu0 %v1107
    %1441 = vmatprep.subr.bf16.mxu0 %v1112
    %1442 = vmatpush1.bf16.msra.mxu0 %v1111
    %1443 = vmatprep.subr.bf16.mxu0 %v1116
    %1444 = vmatpush1.bf16.msra.mxu0 %v1115
    %1445 = vmatprep.subr.bf16.mxu0 %v1120
    %1446 = vmatpush1.bf16.msra.mxu0 %v1119
    %1447 = vmatprep.subr.bf16.mxu0 %v1124
    %1448 = vmatpush1.bf16.msra.mxu0 %v1123
    %1449 = vmatprep.subr.bf16.mxu0 %v1128
    %1450 = vmatpush1.bf16.msra.mxu0 %v1127
    %1451 = vmatprep.subr.bf16.mxu0 %v1132
    %1452 = vmatpush1.bf16.msra.mxu0 %v1131
    %1453 = vmatprep.subr.bf16.mxu0 %v1136
    %1454 = vmatpush1.bf16.msra.mxu0 %v1135
    %1455 = vmatprep.subr.bf16.mxu0 %v1140
    %1456 = vmatpush1.bf16.msra.mxu0 %v1139
    %1457 = vmatprep.subr.bf16.mxu0 %v1144
    %1458 = vmatpush1.bf16.msra.mxu0 %v1143
    %1459 = vmatprep.subr.bf16.mxu0 %v1148
    %1460 = vmatpush1.bf16.msra.mxu0 %v1147
    %1461 = vmatprep.subr.bf16.mxu0 %v1152
    %1462 = vmatpush1.bf16.msra.mxu0 %v1151
    %1463 = vmatprep.subr.bf16.mxu0 %v1156
    %1464 = vmatpush1.bf16.msra.mxu0 %v1155
    %1465 = vmatprep.subr.bf16.mxu0 %v1160
    %1466 = vmatpush1.bf16.msra.mxu0 %v1159
    %1467 = vmatprep.mubr.bf16.mxu0 %v560
    %1468 = vmatmul.mubr.bf16.gmra.mrb[0].mxu0 %v559
    %v1469 = vpop.f32.mrb[0].mxu0
    %v1470 = vadd.f32 %v704, %v1469
    %v1471 = vpop.f32.mrb[0].mxu0
    %v1472 = vadd.f32 %v708, %v1471
    %v1473 = vpop.f32.mrb[0].mxu0
    %v1474 = vpop.f32.mrb[0].mxu0
    %1475 = vdwg.mxu0
    %1476 = vmatprep.subr.bf16.mxu0 %v1164
    %1477 = vmatpush1.bf16.msra.mxu0 %v1163
    %1478 = vmatprep.subr.bf16.mxu0 %v1168
    %1479 = vmatpush1.bf16.msra.mxu0 %v1167
    %1480 = vmatprep.subr.bf16.mxu0 %v1172
    %1481 = vmatpush1.bf16.msra.mxu0 %v1171
    %1482 = vmatprep.subr.bf16.mxu0 %v1176
    %1483 = vmatpush1.bf16.msra.mxu0 %v1175
    %1484 = vmatprep.subr.bf16.mxu0 %v1180
    %1485 = vmatpush1.bf16.msra.mxu0 %v1179
    %1486 = vmatprep.subr.bf16.mxu0 %v1184
    %1487 = vmatpush1.bf16.msra.mxu0 %v1183
    %1488 = vmatprep.subr.bf16.mxu0 %v1188
    %1489 = vmatpush1.bf16.msra.mxu0 %v1187
    %1490 = vmatprep.subr.bf16.mxu0 %v1192
    %1491 = vmatpush1.bf16.msra.mxu0 %v1191
    %1492 = vmatprep.subr.bf16.mxu0 %v1196
    %1493 = vmatpush1.bf16.msra.mxu0 %v1195
    %1494 = vmatprep.subr.bf16.mxu0 %v1200
    %1495 = vmatpush1.bf16.msra.mxu0 %v1199
    %1496 = vmatprep.subr.bf16.mxu0 %v1204
    %1497 = vmatpush1.bf16.msra.mxu0 %v1203
    %1498 = vmatprep.subr.bf16.mxu0 %v1208
    %1499 = vmatpush1.bf16.msra.mxu0 %v1207
    %1500 = vmatprep.subr.bf16.mxu0 %v1212
    %1501 = vmatpush1.bf16.msra.mxu0 %v1211
    %1502 = vmatprep.subr.bf16.mxu0 %v1216
    %1503 = vmatpush1.bf16.msra.mxu0 %v1215
    %1504 = vmatprep.subr.bf16.mxu0 %v1220
    %1505 = vmatpush1.bf16.msra.mxu0 %v1219
    %1506 = vmatprep.subr.bf16.mxu0 %v1224
    %1507 = vmatpush1.bf16.msra.mxu0 %v1223
    %1508 = vmatprep.mubr.bf16.mxu0 %v562
    %1509 = vmatmul.mubr.bf16.gmra.mrb[0].mxu0 %v561
    %v1510 = vpop.f32.mrb[0].mxu0
    %v1511 = vadd.f32 %v1470, %v1510
    %v1512 = vpop.f32.mrb[0].mxu0
    %v1513 = vadd.f32 %v1472, %v1512
    %v1514 = vpop.f32.mrb[0].mxu0
    %v1515 = vpop.f32.mrb[0].mxu0
    %1516 = vdwg.mxu0
    %v1517 = vmax.f32 %v1429, 0.0
    %v1518 = vmax.f32 %v1431, 0.0
    %v1519 = vmax.f32 %v1511, 0.0
    %v1520 = vmax.f32 %v1513, 0.0
    %v1521 = vpack.c.bf16 %v1517, %v1517
    %v1522 = vpack.c.bf16 %v1518, %v1518
    %v1523 = vpack.c.bf16 %v1519, %v1519
    %v1524 = vpack.c.bf16 %v1520, %v1520
    %v1525 = vld [vmem:[#allocation4] sm:$0xff]
    %v1526 = vld [vmem:[#allocation4 + $0x8] sm:$0xff]
    %v1527 = vld [vmem:[#allocation4 + $0x10] sm:$0xff]
    %v1528 = vld [vmem:[#allocation4 + $0x18] sm:$0xff]
    %v1529 = vld [vmem:[#allocation4 + $0x20] sm:$0xff]
    %v1530 = vld [vmem:[#allocation4 + $0x28] sm:$0xff]
    %v1531 = vld [vmem:[#allocation4 + $0x30] sm:$0xff]
    %v1532 = vld [vmem:[#allocation4 + $0x38] sm:$0xff]
    %v1533 = vld [vmem:[#allocation4 + $0x40] sm:$0xff]
    %v1534 = vld [vmem:[#allocation4 + $0x48] sm:$0xff]
    %v1535 = vld [vmem:[#allocation4 + $0x50] sm:$0xff]
    %v1536 = vld [vmem:[#allocation4 + $0x58] sm:$0xff]
    %v1537 = vld [vmem:[#allocation4 + $0x60] sm:$0xff]
    %v1538 = vld [vmem:[#allocation4 + $0x68] sm:$0xff]
    %v1539 = vld [vmem:[#allocation4 + $0x70] sm:$0xff]
    %v1540 = vld [vmem:[#allocation4 + $0x78] sm:$0xff]
    %v1541 = vld [vmem:[#allocation4 + $0x80] sm:$0xff]
    %v1542 = vld [vmem:[#allocation4 + $0x88] sm:$0xff]
    %v1543 = vld [vmem:[#allocation4 + $0x90] sm:$0xff]
    %v1544 = vld [vmem:[#allocation4 + $0x98] sm:$0xff]
    %v1545 = vld [vmem:[#allocation4 + $0xa0] sm:$0xff]
    %v1546 = vld [vmem:[#allocation4 + $0xa8] sm:$0xff]
    %v1547 = vld [vmem:[#allocation4 + $0xb0] sm:$0xff]
    %v1548 = vld [vmem:[#allocation4 + $0xb8] sm:$0xff]
    %v1549 = vld [vmem:[#allocation4 + $0xc0] sm:$0xff]
    %v1550 = vld [vmem:[#allocation4 + $0xc8] sm:$0xff]
    %v1551 = vld [vmem:[#allocation4 + $0xd0] sm:$0xff]
    %v1552 = vld [vmem:[#allocation4 + $0xd8] sm:$0xff]
    %v1553 = vld [vmem:[#allocation4 + $0xe0] sm:$0xff]
    %v1554 = vld [vmem:[#allocation4 + $0xe8] sm:$0xff]
    %v1555 = vld [vmem:[#allocation4 + $0xf0] sm:$0xff]
    %v1556 = vld [vmem:[#allocation4 + $0xf8] sm:$0xff]
    %v1557 = vld [vmem:[#allocation4 + $0x100] sm:$0xff]
    %v1558 = vld [vmem:[#allocation4 + $0x108] sm:$0xff]
    %v1559 = vld [vmem:[#allocation4 + $0x110] sm:$0xff]
    %v1560 = vld [vmem:[#allocation4 + $0x118] sm:$0xff]
    %v1561 = vld [vmem:[#allocation4 + $0x120] sm:$0xff]
    %v1562 = vld [vmem:[#allocation4 + $0x128] sm:$0xff]
    %v1563 = vld [vmem:[#allocation4 + $0x130] sm:$0xff]
    %v1564 = vld [vmem:[#allocation4 + $0x138] sm:$0xff]
    %v1565 = vld [vmem:[#allocation4 + $0x140] sm:$0xff]
    %v1566 = vld [vmem:[#allocation4 + $0x148] sm:$0xff]
    %v1567 = vld [vmem:[#allocation4 + $0x150] sm:$0xff]
    %v1568 = vld [vmem:[#allocation4 + $0x158] sm:$0xff]
    %v1569 = vld [vmem:[#allocation4 + $0x160] sm:$0xff]
    %v1570 = vld [vmem:[#allocation4 + $0x168] sm:$0xff]
    %v1571 = vld [vmem:[#allocation4 + $0x170] sm:$0xff]
    %v1572 = vld [vmem:[#allocation4 + $0x178] sm:$0xff]
    %v1573 = vld [vmem:[#allocation4 + $0x180] sm:$0xff]
    %v1574 = vld [vmem:[#allocation4 + $0x188] sm:$0xff]
    %v1575 = vld [vmem:[#allocation4 + $0x190] sm:$0xff]
    %v1576 = vld [vmem:[#allocation4 + $0x198] sm:$0xff]
    %v1577 = vld [vmem:[#allocation4 + $0x1a0] sm:$0xff]
    %v1578 = vld [vmem:[#allocation4 + $0x1a8] sm:$0xff]
    %v1579 = vld [vmem:[#allocation4 + $0x1b0] sm:$0xff]
    %v1580 = vld [vmem:[#allocation4 + $0x1b8] sm:$0xff]
    %v1581 = vld [vmem:[#allocation4 + $0x1c0] sm:$0xff]
    %v1582 = vld [vmem:[#allocation4 + $0x1c8] sm:$0xff]
    %v1583 = vld [vmem:[#allocation4 + $0x1d0] sm:$0xff]
    %v1584 = vld [vmem:[#allocation4 + $0x1d8] sm:$0xff]
    %v1585 = vld [vmem:[#allocation4 + $0x1e0] sm:$0xff]
    %v1586 = vld [vmem:[#allocation4 + $0x1e8] sm:$0xff]
    %v1587 = vld [vmem:[#allocation4 + $0x1f0] sm:$0xff]
    %v1588 = vld [vmem:[#allocation4 + $0x1f8] sm:$0xff]
    %v1589 = vld [vmem:[#allocation4 + $0x200] sm:$0xff]
    %v1590 = vld [vmem:[#allocation4 + $0x208] sm:$0xff]
    %v1591 = vld [vmem:[#allocation4 + $0x210] sm:$0xff]
    %v1592 = vld [vmem:[#allocation4 + $0x218] sm:$0xff]
    %v1593 = vld [vmem:[#allocation4 + $0x220] sm:$0xff]
    %v1594 = vld [vmem:[#allocation4 + $0x228] sm:$0xff]
    %v1595 = vld [vmem:[#allocation4 + $0x230] sm:$0xff]
    %v1596 = vld [vmem:[#allocation4 + $0x238] sm:$0xff]
    %v1597 = vld [vmem:[#allocation4 + $0x240] sm:$0xff]
    %v1598 = vld [vmem:[#allocation4 + $0x248] sm:$0xff]
    %v1599 = vld [vmem:[#allocation4 + $0x250] sm:$0xff]
    %v1600 = vld [vmem:[#allocation4 + $0x258] sm:$0xff]
    %v1601 = vld [vmem:[#allocation4 + $0x260] sm:$0xff]
    %v1602 = vld [vmem:[#allocation4 + $0x268] sm:$0xff]
    %v1603 = vld [vmem:[#allocation4 + $0x270] sm:$0xff]
    %v1604 = vld [vmem:[#allocation4 + $0x278] sm:$0xff]
    %v1605 = vld [vmem:[#allocation4 + $0x280] sm:$0xff]
    %v1606 = vld [vmem:[#allocation4 + $0x288] sm:$0xff]
    %v1607 = vld [vmem:[#allocation4 + $0x290] sm:$0xff]
    %v1608 = vld [vmem:[#allocation4 + $0x298] sm:$0xff]
    %v1609 = vld [vmem:[#allocation4 + $0x2a0] sm:$0xff]
    %v1610 = vld [vmem:[#allocation4 + $0x2a8] sm:$0xff]
    %v1611 = vld [vmem:[#allocation4 + $0x2b0] sm:$0xff]
    %v1612 = vld [vmem:[#allocation4 + $0x2b8] sm:$0xff]
    %v1613 = vld [vmem:[#allocation4 + $0x2c0] sm:$0xff]
    %v1614 = vld [vmem:[#allocation4 + $0x2c8] sm:$0xff]
    %v1615 = vld [vmem:[#allocation4 + $0x2d0] sm:$0xff]
    %v1616 = vld [vmem:[#allocation4 + $0x2d8] sm:$0xff]
    %v1617 = vld [vmem:[#allocation4 + $0x2e0] sm:$0xff]
    %v1618 = vld [vmem:[#allocation4 + $0x2e8] sm:$0xff]
    %v1619 = vld [vmem:[#allocation4 + $0x2f0] sm:$0xff]
    %v1620 = vld [vmem:[#allocation4 + $0x2f8] sm:$0xff]
    %v1621 = vld [vmem:[#allocation4 + $0x300] sm:$0xff]
    %v1622 = vld [vmem:[#allocation4 + $0x308] sm:$0xff]
    %v1623 = vld [vmem:[#allocation4 + $0x310] sm:$0xff]
    %v1624 = vld [vmem:[#allocation4 + $0x318] sm:$0xff]
    %v1625 = vld [vmem:[#allocation4 + $0x320] sm:$0xff]
    %v1626 = vld [vmem:[#allocation4 + $0x328] sm:$0xff]
    %v1627 = vld [vmem:[#allocation4 + $0x330] sm:$0xff]
    %v1628 = vld [vmem:[#allocation4 + $0x338] sm:$0xff]
    %v1629 = vld [vmem:[#allocation4 + $0x340] sm:$0xff]
    %v1630 = vld [vmem:[#allocation4 + $0x348] sm:$0xff]
    %v1631 = vld [vmem:[#allocation4 + $0x350] sm:$0xff]
    %v1632 = vld [vmem:[#allocation4 + $0x358] sm:$0xff]
    %v1633 = vld [vmem:[#allocation4 + $0x360] sm:$0xff]
    %v1634 = vld [vmem:[#allocation4 + $0x368] sm:$0xff]
    %v1635 = vld [vmem:[#allocation4 + $0x370] sm:$0xff]
    %v1636 = vld [vmem:[#allocation4 + $0x378] sm:$0xff]
    %v1637 = vld [vmem:[#allocation4 + $0x380] sm:$0xff]
    %v1638 = vld [vmem:[#allocation4 + $0x388] sm:$0xff]
    %v1639 = vld [vmem:[#allocation4 + $0x390] sm:$0xff]
    %v1640 = vld [vmem:[#allocation4 + $0x398] sm:$0xff]
    %v1641 = vld [vmem:[#allocation4 + $0x3a0] sm:$0xff]
    %v1642 = vld [vmem:[#allocation4 + $0x3a8] sm:$0xff]
    %v1643 = vld [vmem:[#allocation4 + $0x3b0] sm:$0xff]
    %v1644 = vld [vmem:[#allocation4 + $0x3b8] sm:$0xff]
    %v1645 = vld [vmem:[#allocation4 + $0x3c0] sm:$0xff]
    %v1646 = vld [vmem:[#allocation4 + $0x3c8] sm:$0xff]
    %v1647 = vld [vmem:[#allocation4 + $0x3d0] sm:$0xff]
    %v1648 = vld [vmem:[#allocation4 + $0x3d8] sm:$0xff]
    %v1649 = vld [vmem:[#allocation4 + $0x3e0] sm:$0xff]
    %v1650 = vld [vmem:[#allocation4 + $0x3e8] sm:$0xff]
    %v1651 = vld [vmem:[#allocation4 + $0x3f0] sm:$0xff]
    %v1652 = vld [vmem:[#allocation4 + $0x3f8] sm:$0xff]
    %v1653 = vld [vmem:[#allocation4 + $0x400] sm:$0xff]
    %v1654 = vld [vmem:[#allocation4 + $0x408] sm:$0xff]
    %v1655 = vld [vmem:[#allocation4 + $0x410] sm:$0xff]
    %v1656 = vld [vmem:[#allocation4 + $0x418] sm:$0xff]
    %v1657 = vld [vmem:[#allocation4 + $0x420] sm:$0xff]
    %v1658 = vld [vmem:[#allocation4 + $0x428] sm:$0xff]
    %v1659 = vld [vmem:[#allocation4 + $0x430] sm:$0xff]
    %v1660 = vld [vmem:[#allocation4 + $0x438] sm:$0xff]
    %v1661 = vld [vmem:[#allocation4 + $0x440] sm:$0xff]
    %v1662 = vld [vmem:[#allocation4 + $0x448] sm:$0xff]
    %v1663 = vld [vmem:[#allocation4 + $0x450] sm:$0xff]
    %v1664 = vld [vmem:[#allocation4 + $0x458] sm:$0xff]
    %v1665 = vld [vmem:[#allocation4 + $0x460] sm:$0xff]
    %v1666 = vld [vmem:[#allocation4 + $0x468] sm:$0xff]
    %v1667 = vld [vmem:[#allocation4 + $0x470] sm:$0xff]
    %v1668 = vld [vmem:[#allocation4 + $0x478] sm:$0xff]
    %v1669 = vld [vmem:[#allocation4 + $0x480] sm:$0xff]
    %v1670 = vld [vmem:[#allocation4 + $0x488] sm:$0xff]
    %v1671 = vld [vmem:[#allocation4 + $0x490] sm:$0xff]
    %v1672 = vld [vmem:[#allocation4 + $0x498] sm:$0xff]
    %v1673 = vld [vmem:[#allocation4 + $0x4a0] sm:$0xff]
    %v1674 = vld [vmem:[#allocation4 + $0x4a8] sm:$0xff]
    %v1675 = vld [vmem:[#allocation4 + $0x4b0] sm:$0xff]
    %v1676 = vld [vmem:[#allocation4 + $0x4b8] sm:$0xff]
    %v1677 = vld [vmem:[#allocation4 + $0x4c0] sm:$0xff]
    %v1678 = vld [vmem:[#allocation4 + $0x4c8] sm:$0xff]
    %v1679 = vld [vmem:[#allocation4 + $0x4d0] sm:$0xff]
    %v1680 = vld [vmem:[#allocation4 + $0x4d8] sm:$0xff]
    %v1681 = vld [vmem:[#allocation4 + $0x4e0] sm:$0xff]
    %v1682 = vld [vmem:[#allocation4 + $0x4e8] sm:$0xff]
    %v1683 = vld [vmem:[#allocation4 + $0x4f0] sm:$0xff]
    %v1684 = vld [vmem:[#allocation4 + $0x4f8] sm:$0xff]
    %v1685 = vld [vmem:[#allocation4 + $0x500] sm:$0xff]
    %v1686 = vld [vmem:[#allocation4 + $0x508] sm:$0xff]
    %v1687 = vld [vmem:[#allocation4 + $0x510] sm:$0xff]
    %v1688 = vld [vmem:[#allocation4 + $0x518] sm:$0xff]
    %v1689 = vld [vmem:[#allocation4 + $0x520] sm:$0xff]
    %v1690 = vld [vmem:[#allocation4 + $0x528] sm:$0xff]
    %v1691 = vld [vmem:[#allocation4 + $0x530] sm:$0xff]
    %v1692 = vld [vmem:[#allocation4 + $0x538] sm:$0xff]
    %v1693 = vld [vmem:[#allocation4 + $0x540] sm:$0xff]
    %v1694 = vld [vmem:[#allocation4 + $0x548] sm:$0xff]
    %v1695 = vld [vmem:[#allocation4 + $0x550] sm:$0xff]
    %v1696 = vld [vmem:[#allocation4 + $0x558] sm:$0xff]
    %v1697 = vld [vmem:[#allocation4 + $0x560] sm:$0xff]
    %v1698 = vld [vmem:[#allocation4 + $0x568] sm:$0xff]
    %v1699 = vld [vmem:[#allocation4 + $0x570] sm:$0xff]
    %v1700 = vld [vmem:[#allocation4 + $0x578] sm:$0xff]
    %v1701 = vld [vmem:[#allocation4 + $0x580] sm:$0xff]
    %v1702 = vld [vmem:[#allocation4 + $0x588] sm:$0xff]
    %v1703 = vld [vmem:[#allocation4 + $0x590] sm:$0xff]
    %v1704 = vld [vmem:[#allocation4 + $0x598] sm:$0xff]
    %v1705 = vld [vmem:[#allocation4 + $0x5a0] sm:$0xff]
    %v1706 = vld [vmem:[#allocation4 + $0x5a8] sm:$0xff]
    %v1707 = vld [vmem:[#allocation4 + $0x5b0] sm:$0xff]
    %v1708 = vld [vmem:[#allocation4 + $0x5b8] sm:$0xff]
    %v1709 = vld [vmem:[#allocation4 + $0x5c0] sm:$0xff]
    %v1710 = vld [vmem:[#allocation4 + $0x5c8] sm:$0xff]
    %v1711 = vld [vmem:[#allocation4 + $0x5d0] sm:$0xff]
    %v1712 = vld [vmem:[#allocation4 + $0x5d8] sm:$0xff]
    %v1713 = vld [vmem:[#allocation4 + $0x5e0] sm:$0xff]
    %v1714 = vld [vmem:[#allocation4 + $0x5e8] sm:$0xff]
    %v1715 = vld [vmem:[#allocation4 + $0x5f0] sm:$0xff]
    %v1716 = vld [vmem:[#allocation4 + $0x5f8] sm:$0xff]
    %v1717 = vld [vmem:[#allocation4 + $0x600] sm:$0xff]
    %v1718 = vld [vmem:[#allocation4 + $0x608] sm:$0xff]
    %v1719 = vld [vmem:[#allocation4 + $0x610] sm:$0xff]
    %v1720 = vld [vmem:[#allocation4 + $0x618] sm:$0xff]
    %v1721 = vld [vmem:[#allocation4 + $0x620] sm:$0xff]
    %v1722 = vld [vmem:[#allocation4 + $0x628] sm:$0xff]
    %v1723 = vld [vmem:[#allocation4 + $0x630] sm:$0xff]
    %v1724 = vld [vmem:[#allocation4 + $0x638] sm:$0xff]
    %v1725 = vld [vmem:[#allocation4 + $0x640] sm:$0xff]
    %v1726 = vld [vmem:[#allocation4 + $0x648] sm:$0xff]
    %v1727 = vld [vmem:[#allocation4 + $0x650] sm:$0xff]
    %v1728 = vld [vmem:[#allocation4 + $0x658] sm:$0xff]
    %v1729 = vld [vmem:[#allocation4 + $0x660] sm:$0xff]
    %v1730 = vld [vmem:[#allocation4 + $0x668] sm:$0xff]
    %v1731 = vld [vmem:[#allocation4 + $0x670] sm:$0xff]
    %v1732 = vld [vmem:[#allocation4 + $0x678] sm:$0xff]
    %v1733 = vld [vmem:[#allocation4 + $0x680] sm:$0xff]
    %v1734 = vld [vmem:[#allocation4 + $0x688] sm:$0xff]
    %v1735 = vld [vmem:[#allocation4 + $0x690] sm:$0xff]
    %v1736 = vld [vmem:[#allocation4 + $0x698] sm:$0xff]
    %v1737 = vld [vmem:[#allocation4 + $0x6a0] sm:$0xff]
    %v1738 = vld [vmem:[#allocation4 + $0x6a8] sm:$0xff]
    %v1739 = vld [vmem:[#allocation4 + $0x6b0] sm:$0xff]
    %v1740 = vld [vmem:[#allocation4 + $0x6b8] sm:$0xff]
    %v1741 = vld [vmem:[#allocation4 + $0x6c0] sm:$0xff]
    %v1742 = vld [vmem:[#allocation4 + $0x6c8] sm:$0xff]
    %v1743 = vld [vmem:[#allocation4 + $0x6d0] sm:$0xff]
    %v1744 = vld [vmem:[#allocation4 + $0x6d8] sm:$0xff]
    %v1745 = vld [vmem:[#allocation4 + $0x6e0] sm:$0xff]
    %v1746 = vld [vmem:[#allocation4 + $0x6e8] sm:$0xff]
    %v1747 = vld [vmem:[#allocation4 + $0x6f0] sm:$0xff]
    %v1748 = vld [vmem:[#allocation4 + $0x6f8] sm:$0xff]
    %v1749 = vld [vmem:[#allocation4 + $0x700] sm:$0xff]
    %v1750 = vld [vmem:[#allocation4 + $0x708] sm:$0xff]
    %v1751 = vld [vmem:[#allocation4 + $0x710] sm:$0xff]
    %v1752 = vld [vmem:[#allocation4 + $0x718] sm:$0xff]
    %v1753 = vld [vmem:[#allocation4 + $0x720] sm:$0xff]
    %v1754 = vld [vmem:[#allocation4 + $0x728] sm:$0xff]
    %v1755 = vld [vmem:[#allocation4 + $0x730] sm:$0xff]
    %v1756 = vld [vmem:[#allocation4 + $0x738] sm:$0xff]
    %v1757 = vld [vmem:[#allocation4 + $0x740] sm:$0xff]
    %v1758 = vld [vmem:[#allocation4 + $0x748] sm:$0xff]
    %v1759 = vld [vmem:[#allocation4 + $0x750] sm:$0xff]
    %v1760 = vld [vmem:[#allocation4 + $0x758] sm:$0xff]
    %v1761 = vld [vmem:[#allocation4 + $0x760] sm:$0xff]
    %v1762 = vld [vmem:[#allocation4 + $0x768] sm:$0xff]
    %v1763 = vld [vmem:[#allocation4 + $0x770] sm:$0xff]
    %v1764 = vld [vmem:[#allocation4 + $0x778] sm:$0xff]
    %v1765 = vld [vmem:[#allocation4 + $0x780] sm:$0xff]
    %v1766 = vld [vmem:[#allocation4 + $0x788] sm:$0xff]
    %v1767 = vld [vmem:[#allocation4 + $0x790] sm:$0xff]
    %v1768 = vld [vmem:[#allocation4 + $0x798] sm:$0xff]
    %v1769 = vld [vmem:[#allocation4 + $0x7a0] sm:$0xff]
    %v1770 = vld [vmem:[#allocation4 + $0x7a8] sm:$0xff]
    %v1771 = vld [vmem:[#allocation4 + $0x7b0] sm:$0xff]
    %v1772 = vld [vmem:[#allocation4 + $0x7b8] sm:$0xff]
    %v1773 = vld [vmem:[#allocation4 + $0x7c0] sm:$0xff]
    %v1774 = vld [vmem:[#allocation4 + $0x7c8] sm:$0xff]
    %v1775 = vld [vmem:[#allocation4 + $0x7d0] sm:$0xff]
    %v1776 = vld [vmem:[#allocation4 + $0x7d8] sm:$0xff]
    %v1777 = vld [vmem:[#allocation4 + $0x7e0] sm:$0xff]
    %v1778 = vld [vmem:[#allocation4 + $0x7e8] sm:$0xff]
    %v1779 = vld [vmem:[#allocation4 + $0x7f0] sm:$0xff]
    %v1780 = vld [vmem:[#allocation4 + $0x7f8] sm:$0xff]
    %v1781 = vld [vmem:[#allocation6 + $0x8] sm:$0xff]
    %v1783 = vlaneseq
    %v1784 = vshrl.u32 %v1783, 7
    %v1785 = vsub.s32 0, %v1784
    %v1786 = vrot.slane %v1781, %v1785
    %v1787 = vlaneseq
    %v1788 = vshrl.u32 %v1787, 7
    %v1789 = vsub.s32 1, %v1788
    %v1790 = vrot.slane %v1781, %v1789
    %v1791 = vlaneseq
    %v1792 = vshrl.u32 %v1791, 7
    %v1793 = vsub.s32 2, %v1792
    %v1794 = vrot.slane %v1781, %v1793
    %v1795 = vlaneseq
    %v1796 = vshrl.u32 %v1795, 7
    %v1797 = vsub.s32 3, %v1796
    %v1798 = vrot.slane %v1781, %v1797
    %v1799 = vlaneseq
    %v1800 = vshrl.u32 %v1799, 7
    %v1801 = vsub.s32 4, %v1800
    %v1802 = vrot.slane %v1781, %v1801
    %v1803 = vlaneseq
    %v1804 = vshrl.u32 %v1803, 7
    %v1805 = vsub.s32 5, %v1804
    %v1806 = vrot.slane %v1781, %v1805
    %v1807 = vlaneseq
    %v1808 = vshrl.u32 %v1807, 7
    %v1809 = vsub.s32 6, %v1808
    %v1810 = vrot.slane %v1781, %v1809
    %v1811 = vlaneseq
    %v1812 = vshrl.u32 %v1811, 7
    %v1813 = vsub.s32 7, %v1812
    %v1814 = vrot.slane %v1781, %v1813
    %v2079 = vunpack.c.l.b16 %v1525
    %v2080 = vunpack.c.h.b16 %v1525
    %v2081 = vunpack.c.l.b16 %v1526
    %v2082 = vunpack.c.h.b16 %v1526
    %v2083 = vunpack.c.l.b16 %v1527
    %v2084 = vunpack.c.h.b16 %v1527
    %v2085 = vunpack.c.l.b16 %v1528
    %v2086 = vunpack.c.h.b16 %v1528
    %v2087 = vunpack.c.l.b16 %v1529
    %v2088 = vunpack.c.h.b16 %v1529
    %v2089 = vunpack.c.l.b16 %v1530
    %v2090 = vunpack.c.h.b16 %v1530
    %v2091 = vunpack.c.l.b16 %v1531
    %v2092 = vunpack.c.h.b16 %v1531
    %v2093 = vunpack.c.l.b16 %v1532
    %v2094 = vunpack.c.h.b16 %v1532
    %v2095 = vunpack.c.l.b16 %v1533
    %v2096 = vunpack.c.h.b16 %v1533
    %v2097 = vunpack.c.l.b16 %v1534
    %v2098 = vunpack.c.h.b16 %v1534
    %v2099 = vunpack.c.l.b16 %v1535
    %v2100 = vunpack.c.h.b16 %v1535
    %v2101 = vunpack.c.l.b16 %v1536
    %v2102 = vunpack.c.h.b16 %v1536
    %v2103 = vunpack.c.l.b16 %v1537
    %v2104 = vunpack.c.h.b16 %v1537
    %v2105 = vunpack.c.l.b16 %v1538
    %v2106 = vunpack.c.h.b16 %v1538
    %v2107 = vunpack.c.l.b16 %v1539
    %v2108 = vunpack.c.h.b16 %v1539
    %v2109 = vunpack.c.l.b16 %v1540
    %v2110 = vunpack.c.h.b16 %v1540
    %v2111 = vunpack.c.l.b16 %v1541
    %v2112 = vunpack.c.h.b16 %v1541
    %v2113 = vunpack.c.l.b16 %v1542
    %v2114 = vunpack.c.h.b16 %v1542
    %v2115 = vunpack.c.l.b16 %v1543
    %v2116 = vunpack.c.h.b16 %v1543
    %v2117 = vunpack.c.l.b16 %v1544
    %v2118 = vunpack.c.h.b16 %v1544
    %v2119 = vunpack.c.l.b16 %v1545
    %v2120 = vunpack.c.h.b16 %v1545
    %v2121 = vunpack.c.l.b16 %v1546
    %v2122 = vunpack.c.h.b16 %v1546
    %v2123 = vunpack.c.l.b16 %v1547
    %v2124 = vunpack.c.h.b16 %v1547
    %v2125 = vunpack.c.l.b16 %v1548
    %v2126 = vunpack.c.h.b16 %v1548
    %v2127 = vunpack.c.l.b16 %v1549
    %v2128 = vunpack.c.h.b16 %v1549
    %v2129 = vunpack.c.l.b16 %v1550
    %v2130 = vunpack.c.h.b16 %v1550
    %v2131 = vunpack.c.l.b16 %v1551
    %v2132 = vunpack.c.h.b16 %v1551
    %v2133 = vunpack.c.l.b16 %v1552
    %v2134 = vunpack.c.h.b16 %v1552
    %v2135 = vunpack.c.l.b16 %v1553
    %v2136 = vunpack.c.h.b16 %v1553
    %v2137 = vunpack.c.l.b16 %v1554
    %v2138 = vunpack.c.h.b16 %v1554
    %v2139 = vunpack.c.l.b16 %v1555
    %v2140 = vunpack.c.h.b16 %v1555
    %v2141 = vunpack.c.l.b16 %v1556
    %v2142 = vunpack.c.h.b16 %v1556
    %v2143 = vunpack.c.l.b16 %v1557
    %v2144 = vunpack.c.h.b16 %v1557
    %v2145 = vunpack.c.l.b16 %v1558
    %v2146 = vunpack.c.h.b16 %v1558
    %v2147 = vunpack.c.l.b16 %v1559
    %v2148 = vunpack.c.h.b16 %v1559
    %v2149 = vunpack.c.l.b16 %v1560
    %v2150 = vunpack.c.h.b16 %v1560
    %v2151 = vunpack.c.l.b16 %v1561
    %v2152 = vunpack.c.h.b16 %v1561
    %v2153 = vunpack.c.l.b16 %v1562
    %v2154 = vunpack.c.h.b16 %v1562
    %v2155 = vunpack.c.l.b16 %v1563
    %v2156 = vunpack.c.h.b16 %v1563
    %v2157 = vunpack.c.l.b16 %v1564
    %v2158 = vunpack.c.h.b16 %v1564
    %v2159 = vunpack.c.l.b16 %v1565
    %v2160 = vunpack.c.h.b16 %v1565
    %v2161 = vunpack.c.l.b16 %v1566
    %v2162 = vunpack.c.h.b16 %v1566
    %v2163 = vunpack.c.l.b16 %v1567
    %v2164 = vunpack.c.h.b16 %v1567
    %v2165 = vunpack.c.l.b16 %v1568
    %v2166 = vunpack.c.h.b16 %v1568
    %v2167 = vunpack.c.l.b16 %v1569
    %v2168 = vunpack.c.h.b16 %v1569
    %v2169 = vunpack.c.l.b16 %v1570
    %v2170 = vunpack.c.h.b16 %v1570
    %v2171 = vunpack.c.l.b16 %v1571
    %v2172 = vunpack.c.h.b16 %v1571
    %v2173 = vunpack.c.l.b16 %v1572
    %v2174 = vunpack.c.h.b16 %v1572
    %v2175 = vunpack.c.l.b16 %v1573
    %v2176 = vunpack.c.h.b16 %v1573
    %v2177 = vunpack.c.l.b16 %v1574
    %v2178 = vunpack.c.h.b16 %v1574
    %v2179 = vunpack.c.l.b16 %v1575
    %v2180 = vunpack.c.h.b16 %v1575
    %v2181 = vunpack.c.l.b16 %v1576
    %v2182 = vunpack.c.h.b16 %v1576
    %v2183 = vunpack.c.l.b16 %v1577
    %v2184 = vunpack.c.h.b16 %v1577
    %v2185 = vunpack.c.l.b16 %v1578
    %v2186 = vunpack.c.h.b16 %v1578
    %v2187 = vunpack.c.l.b16 %v1579
    %v2188 = vunpack.c.h.b16 %v1579
    %v2189 = vunpack.c.l.b16 %v1580
    %v2190 = vunpack.c.h.b16 %v1580
    %v2191 = vunpack.c.l.b16 %v1581
    %v2192 = vunpack.c.h.b16 %v1581
    %v2193 = vunpack.c.l.b16 %v1582
    %v2194 = vunpack.c.h.b16 %v1582
    %v2195 = vunpack.c.l.b16 %v1583
    %v2196 = vunpack.c.h.b16 %v1583
    %v2197 = vunpack.c.l.b16 %v1584
    %v2198 = vunpack.c.h.b16 %v1584
    %v2199 = vunpack.c.l.b16 %v1585
    %v2200 = vunpack.c.h.b16 %v1585
    %v2201 = vunpack.c.l.b16 %v1586
    %v2202 = vunpack.c.h.b16 %v1586
    %v2203 = vunpack.c.l.b16 %v1587
    %v2204 = vunpack.c.h.b16 %v1587
    %v2205 = vunpack.c.l.b16 %v1588
    %v2206 = vunpack.c.h.b16 %v1588
    %v2207 = vunpack.c.l.b16 %v1589
    %v2208 = vunpack.c.h.b16 %v1589
    %v2209 = vunpack.c.l.b16 %v1590
    %v2210 = vunpack.c.h.b16 %v1590
    %v2211 = vunpack.c.l.b16 %v1591
    %v2212 = vunpack.c.h.b16 %v1591
    %v2213 = vunpack.c.l.b16 %v1592
    %v2214 = vunpack.c.h.b16 %v1592
    %v2215 = vunpack.c.l.b16 %v1593
    %v2216 = vunpack.c.h.b16 %v1593
    %v2217 = vunpack.c.l.b16 %v1594
    %v2218 = vunpack.c.h.b16 %v1594
    %v2219 = vunpack.c.l.b16 %v1595
    %v2220 = vunpack.c.h.b16 %v1595
    %v2221 = vunpack.c.l.b16 %v1596
    %v2222 = vunpack.c.h.b16 %v1596
    %v2223 = vunpack.c.l.b16 %v1597
    %v2224 = vunpack.c.h.b16 %v1597
    %v2225 = vunpack.c.l.b16 %v1598
    %v2226 = vunpack.c.h.b16 %v1598
    %v2227 = vunpack.c.l.b16 %v1599
    %v2228 = vunpack.c.h.b16 %v1599
    %v2229 = vunpack.c.l.b16 %v1600
    %v2230 = vunpack.c.h.b16 %v1600
    %v2231 = vunpack.c.l.b16 %v1601
    %v2232 = vunpack.c.h.b16 %v1601
    %v2233 = vunpack.c.l.b16 %v1602
    %v2234 = vunpack.c.h.b16 %v1602
    %v2235 = vunpack.c.l.b16 %v1603
    %v2236 = vunpack.c.h.b16 %v1603
    %v2237 = vunpack.c.l.b16 %v1604
    %v2238 = vunpack.c.h.b16 %v1604
    %v2239 = vunpack.c.l.b16 %v1605
    %v2240 = vunpack.c.h.b16 %v1605
    %v2241 = vunpack.c.l.b16 %v1606
    %v2242 = vunpack.c.h.b16 %v1606
    %v2243 = vunpack.c.l.b16 %v1607
    %v2244 = vunpack.c.h.b16 %v1607
    %v2245 = vunpack.c.l.b16 %v1608
    %v2246 = vunpack.c.h.b16 %v1608
    %v2247 = vunpack.c.l.b16 %v1609
    %v2248 = vunpack.c.h.b16 %v1609
    %v2249 = vunpack.c.l.b16 %v1610
    %v2250 = vunpack.c.h.b16 %v1610
    %v2251 = vunpack.c.l.b16 %v1611
    %v2252 = vunpack.c.h.b16 %v1611
    %v2253 = vunpack.c.l.b16 %v1612
    %v2254 = vunpack.c.h.b16 %v1612
    %v2255 = vunpack.c.l.b16 %v1613
    %v2256 = vunpack.c.h.b16 %v1613
    %v2257 = vunpack.c.l.b16 %v1614
    %v2258 = vunpack.c.h.b16 %v1614
    %v2259 = vunpack.c.l.b16 %v1615
    %v2260 = vunpack.c.h.b16 %v1615
    %v2261 = vunpack.c.l.b16 %v1616
    %v2262 = vunpack.c.h.b16 %v1616
    %v2263 = vunpack.c.l.b16 %v1617
    %v2264 = vunpack.c.h.b16 %v1617
    %v2265 = vunpack.c.l.b16 %v1618
    %v2266 = vunpack.c.h.b16 %v1618
    %v2267 = vunpack.c.l.b16 %v1619
    %v2268 = vunpack.c.h.b16 %v1619
    %v2269 = vunpack.c.l.b16 %v1620
    %v2270 = vunpack.c.h.b16 %v1620
    %v2271 = vunpack.c.l.b16 %v1621
    %v2272 = vunpack.c.h.b16 %v1621
    %v2273 = vunpack.c.l.b16 %v1622
    %v2274 = vunpack.c.h.b16 %v1622
    %v2275 = vunpack.c.l.b16 %v1623
    %v2276 = vunpack.c.h.b16 %v1623
    %v2277 = vunpack.c.l.b16 %v1624
    %v2278 = vunpack.c.h.b16 %v1624
    %v2279 = vunpack.c.l.b16 %v1625
    %v2280 = vunpack.c.h.b16 %v1625
    %v2281 = vunpack.c.l.b16 %v1626
    %v2282 = vunpack.c.h.b16 %v1626
    %v2283 = vunpack.c.l.b16 %v1627
    %v2284 = vunpack.c.h.b16 %v1627
    %v2285 = vunpack.c.l.b16 %v1628
    %v2286 = vunpack.c.h.b16 %v1628
    %v2287 = vunpack.c.l.b16 %v1629
    %v2288 = vunpack.c.h.b16 %v1629
    %v2289 = vunpack.c.l.b16 %v1630
    %v2290 = vunpack.c.h.b16 %v1630
    %v2291 = vunpack.c.l.b16 %v1631
    %v2292 = vunpack.c.h.b16 %v1631
    %v2293 = vunpack.c.l.b16 %v1632
    %v2294 = vunpack.c.h.b16 %v1632
    %v2295 = vunpack.c.l.b16 %v1633
    %v2296 = vunpack.c.h.b16 %v1633
    %v2297 = vunpack.c.l.b16 %v1634
    %v2298 = vunpack.c.h.b16 %v1634
    %v2299 = vunpack.c.l.b16 %v1635
    %v2300 = vunpack.c.h.b16 %v1635
    %v2301 = vunpack.c.l.b16 %v1636
    %v2302 = vunpack.c.h.b16 %v1636
    %v2303 = vunpack.c.l.b16 %v1637
    %v2304 = vunpack.c.h.b16 %v1637
    %v2305 = vunpack.c.l.b16 %v1638
    %v2306 = vunpack.c.h.b16 %v1638
    %v2307 = vunpack.c.l.b16 %v1639
    %v2308 = vunpack.c.h.b16 %v1639
    %v2309 = vunpack.c.l.b16 %v1640
    %v2310 = vunpack.c.h.b16 %v1640
    %v2311 = vunpack.c.l.b16 %v1641
    %v2312 = vunpack.c.h.b16 %v1641
    %v2313 = vunpack.c.l.b16 %v1642
    %v2314 = vunpack.c.h.b16 %v1642
    %v2315 = vunpack.c.l.b16 %v1643
    %v2316 = vunpack.c.h.b16 %v1643
    %v2317 = vunpack.c.l.b16 %v1644
    %v2318 = vunpack.c.h.b16 %v1644
    %v2319 = vunpack.c.l.b16 %v1645
    %v2320 = vunpack.c.h.b16 %v1645
    %v2321 = vunpack.c.l.b16 %v1646
    %v2322 = vunpack.c.h.b16 %v1646
    %v2323 = vunpack.c.l.b16 %v1647
    %v2324 = vunpack.c.h.b16 %v1647
    %v2325 = vunpack.c.l.b16 %v1648
    %v2326 = vunpack.c.h.b16 %v1648
    %v2327 = vunpack.c.l.b16 %v1649
    %v2328 = vunpack.c.h.b16 %v1649
    %v2329 = vunpack.c.l.b16 %v1650
    %v2330 = vunpack.c.h.b16 %v1650
    %v2331 = vunpack.c.l.b16 %v1651
    %v2332 = vunpack.c.h.b16 %v1651
    %v2333 = vunpack.c.l.b16 %v1652
    %v2334 = vunpack.c.h.b16 %v1652
    %v2335 = vunpack.c.l.b16 %v1653
    %v2336 = vunpack.c.h.b16 %v1653
    %v2337 = vunpack.c.l.b16 %v1654
    %v2338 = vunpack.c.h.b16 %v1654
    %v2339 = vunpack.c.l.b16 %v1655
    %v2340 = vunpack.c.h.b16 %v1655
    %v2341 = vunpack.c.l.b16 %v1656
    %v2342 = vunpack.c.h.b16 %v1656
    %v2343 = vunpack.c.l.b16 %v1657
    %v2344 = vunpack.c.h.b16 %v1657
    %v2345 = vunpack.c.l.b16 %v1658
    %v2346 = vunpack.c.h.b16 %v1658
    %v2347 = vunpack.c.l.b16 %v1659
    %v2348 = vunpack.c.h.b16 %v1659
    %v2349 = vunpack.c.l.b16 %v1660
    %v2350 = vunpack.c.h.b16 %v1660
    %v2351 = vunpack.c.l.b16 %v1661
    %v2352 = vunpack.c.h.b16 %v1661
    %v2353 = vunpack.c.l.b16 %v1662
    %v2354 = vunpack.c.h.b16 %v1662
    %v2355 = vunpack.c.l.b16 %v1663
    %v2356 = vunpack.c.h.b16 %v1663
    %v2357 = vunpack.c.l.b16 %v1664
    %v2358 = vunpack.c.h.b16 %v1664
    %v2359 = vunpack.c.l.b16 %v1665
    %v2360 = vunpack.c.h.b16 %v1665
    %v2361 = vunpack.c.l.b16 %v1666
    %v2362 = vunpack.c.h.b16 %v1666
    %v2363 = vunpack.c.l.b16 %v1667
    %v2364 = vunpack.c.h.b16 %v1667
    %v2365 = vunpack.c.l.b16 %v1668
    %v2366 = vunpack.c.h.b16 %v1668
    %v2367 = vunpack.c.l.b16 %v1669
    %v2368 = vunpack.c.h.b16 %v1669
    %v2369 = vunpack.c.l.b16 %v1670
    %v2370 = vunpack.c.h.b16 %v1670
    %v2371 = vunpack.c.l.b16 %v1671
    %v2372 = vunpack.c.h.b16 %v1671
    %v2373 = vunpack.c.l.b16 %v1672
    %v2374 = vunpack.c.h.b16 %v1672
    %v2375 = vunpack.c.l.b16 %v1673
    %v2376 = vunpack.c.h.b16 %v1673
    %v2377 = vunpack.c.l.b16 %v1674
    %v2378 = vunpack.c.h.b16 %v1674
    %v2379 = vunpack.c.l.b16 %v1675
    %v2380 = vunpack.c.h.b16 %v1675
    %v2381 = vunpack.c.l.b16 %v1676
    %v2382 = vunpack.c.h.b16 %v1676
    %v2383 = vunpack.c.l.b16 %v1677
    %v2384 = vunpack.c.h.b16 %v1677
    %v2385 = vunpack.c.l.b16 %v1678
    %v2386 = vunpack.c.h.b16 %v1678
    %v2387 = vunpack.c.l.b16 %v1679
    %v2388 = vunpack.c.h.b16 %v1679
    %v2389 = vunpack.c.l.b16 %v1680
    %v2390 = vunpack.c.h.b16 %v1680
    %v2391 = vunpack.c.l.b16 %v1681
    %v2392 = vunpack.c.h.b16 %v1681
    %v2393 = vunpack.c.l.b16 %v1682
    %v2394 = vunpack.c.h.b16 %v1682
    %v2395 = vunpack.c.l.b16 %v1683
    %v2396 = vunpack.c.h.b16 %v1683
    %v2397 = vunpack.c.l.b16 %v1684
    %v2398 = vunpack.c.h.b16 %v1684
    %v2399 = vunpack.c.l.b16 %v1685
    %v2400 = vunpack.c.h.b16 %v1685
    %v2401 = vunpack.c.l.b16 %v1686
    %v2402 = vunpack.c.h.b16 %v1686
    %v2403 = vunpack.c.l.b16 %v1687
    %v2404 = vunpack.c.h.b16 %v1687
    %v2405 = vunpack.c.l.b16 %v1688
    %v2406 = vunpack.c.h.b16 %v1688
    %v2407 = vunpack.c.l.b16 %v1689
    %v2408 = vunpack.c.h.b16 %v1689
    %v2409 = vunpack.c.l.b16 %v1690
    %v2410 = vunpack.c.h.b16 %v1690
    %v2411 = vunpack.c.l.b16 %v1691
    %v2412 = vunpack.c.h.b16 %v1691
    %v2413 = vunpack.c.l.b16 %v1692
    %v2414 = vunpack.c.h.b16 %v1692
    %v2415 = vunpack.c.l.b16 %v1693
    %v2416 = vunpack.c.h.b16 %v1693
    %v2417 = vunpack.c.l.b16 %v1694
    %v2418 = vunpack.c.h.b16 %v1694
    %v2419 = vunpack.c.l.b16 %v1695
    %v2420 = vunpack.c.h.b16 %v1695
    %v2421 = vunpack.c.l.b16 %v1696
    %v2422 = vunpack.c.h.b16 %v1696
    %v2423 = vunpack.c.l.b16 %v1697
    %v2424 = vunpack.c.h.b16 %v1697
    %v2425 = vunpack.c.l.b16 %v1698
    %v2426 = vunpack.c.h.b16 %v1698
    %v2427 = vunpack.c.l.b16 %v1699
    %v2428 = vunpack.c.h.b16 %v1699
    %v2429 = vunpack.c.l.b16 %v1700
    %v2430 = vunpack.c.h.b16 %v1700
    %v2431 = vunpack.c.l.b16 %v1701
    %v2432 = vunpack.c.h.b16 %v1701
    %v2433 = vunpack.c.l.b16 %v1702
    %v2434 = vunpack.c.h.b16 %v1702
    %v2435 = vunpack.c.l.b16 %v1703
    %v2436 = vunpack.c.h.b16 %v1703
    %v2437 = vunpack.c.l.b16 %v1704
    %v2438 = vunpack.c.h.b16 %v1704
    %v2439 = vunpack.c.l.b16 %v1705
    %v2440 = vunpack.c.h.b16 %v1705
    %v2441 = vunpack.c.l.b16 %v1706
    %v2442 = vunpack.c.h.b16 %v1706
    %v2443 = vunpack.c.l.b16 %v1707
    %v2444 = vunpack.c.h.b16 %v1707
    %v2445 = vunpack.c.l.b16 %v1708
    %v2446 = vunpack.c.h.b16 %v1708
    %v2447 = vunpack.c.l.b16 %v1709
    %v2448 = vunpack.c.h.b16 %v1709
    %v2449 = vunpack.c.l.b16 %v1710
    %v2450 = vunpack.c.h.b16 %v1710
    %v2451 = vunpack.c.l.b16 %v1711
    %v2452 = vunpack.c.h.b16 %v1711
    %v2453 = vunpack.c.l.b16 %v1712
    %v2454 = vunpack.c.h.b16 %v1712
    %v2455 = vunpack.c.l.b16 %v1713
    %v2456 = vunpack.c.h.b16 %v1713
    %v2457 = vunpack.c.l.b16 %v1714
    %v2458 = vunpack.c.h.b16 %v1714
    %v2459 = vunpack.c.l.b16 %v1715
    %v2460 = vunpack.c.h.b16 %v1715
    %v2461 = vunpack.c.l.b16 %v1716
    %v2462 = vunpack.c.h.b16 %v1716
    %v2463 = vunpack.c.l.b16 %v1717
    %v2464 = vunpack.c.h.b16 %v1717
    %v2465 = vunpack.c.l.b16 %v1718
    %v2466 = vunpack.c.h.b16 %v1718
    %v2467 = vunpack.c.l.b16 %v1719
    %v2468 = vunpack.c.h.b16 %v1719
    %v2469 = vunpack.c.l.b16 %v1720
    %v2470 = vunpack.c.h.b16 %v1720
    %v2471 = vunpack.c.l.b16 %v1721
    %v2472 = vunpack.c.h.b16 %v1721
    %v2473 = vunpack.c.l.b16 %v1722
    %v2474 = vunpack.c.h.b16 %v1722
    %v2475 = vunpack.c.l.b16 %v1723
    %v2476 = vunpack.c.h.b16 %v1723
    %v2477 = vunpack.c.l.b16 %v1724
    %v2478 = vunpack.c.h.b16 %v1724
    %v2479 = vunpack.c.l.b16 %v1725
    %v2480 = vunpack.c.h.b16 %v1725
    %v2481 = vunpack.c.l.b16 %v1726
    %v2482 = vunpack.c.h.b16 %v1726
    %v2483 = vunpack.c.l.b16 %v1727
    %v2484 = vunpack.c.h.b16 %v1727
    %v2485 = vunpack.c.l.b16 %v1728
    %v2486 = vunpack.c.h.b16 %v1728
    %v2487 = vunpack.c.l.b16 %v1729
    %v2488 = vunpack.c.h.b16 %v1729
    %v2489 = vunpack.c.l.b16 %v1730
    %v2490 = vunpack.c.h.b16 %v1730
    %v2491 = vunpack.c.l.b16 %v1731
    %v2492 = vunpack.c.h.b16 %v1731
    %v2493 = vunpack.c.l.b16 %v1732
    %v2494 = vunpack.c.h.b16 %v1732
    %v2495 = vunpack.c.l.b16 %v1733
    %v2496 = vunpack.c.h.b16 %v1733
    %v2497 = vunpack.c.l.b16 %v1734
    %v2498 = vunpack.c.h.b16 %v1734
    %v2499 = vunpack.c.l.b16 %v1735
    %v2500 = vunpack.c.h.b16 %v1735
    %v2501 = vunpack.c.l.b16 %v1736
    %v2502 = vunpack.c.h.b16 %v1736
    %v2503 = vunpack.c.l.b16 %v1737
    %v2504 = vunpack.c.h.b16 %v1737
    %v2505 = vunpack.c.l.b16 %v1738
    %v2506 = vunpack.c.h.b16 %v1738
    %v2507 = vunpack.c.l.b16 %v1739
    %v2508 = vunpack.c.h.b16 %v1739
    %v2509 = vunpack.c.l.b16 %v1740
    %v2510 = vunpack.c.h.b16 %v1740
    %v2511 = vunpack.c.l.b16 %v1741
    %v2512 = vunpack.c.h.b16 %v1741
    %v2513 = vunpack.c.l.b16 %v1742
    %v2514 = vunpack.c.h.b16 %v1742
    %v2515 = vunpack.c.l.b16 %v1743
    %v2516 = vunpack.c.h.b16 %v1743
    %v2517 = vunpack.c.l.b16 %v1744
    %v2518 = vunpack.c.h.b16 %v1744
    %v2519 = vunpack.c.l.b16 %v1745
    %v2520 = vunpack.c.h.b16 %v1745
    %v2521 = vunpack.c.l.b16 %v1746
    %v2522 = vunpack.c.h.b16 %v1746
    %v2523 = vunpack.c.l.b16 %v1747
    %v2524 = vunpack.c.h.b16 %v1747
    %v2525 = vunpack.c.l.b16 %v1748
    %v2526 = vunpack.c.h.b16 %v1748
    %v2527 = vunpack.c.l.b16 %v1749
    %v2528 = vunpack.c.h.b16 %v1749
    %v2529 = vunpack.c.l.b16 %v1750
    %v2530 = vunpack.c.h.b16 %v1750
    %v2531 = vunpack.c.l.b16 %v1751
    %v2532 = vunpack.c.h.b16 %v1751
    %v2533 = vunpack.c.l.b16 %v1752
    %v2534 = vunpack.c.h.b16 %v1752
    %v2535 = vunpack.c.l.b16 %v1753
    %v2536 = vunpack.c.h.b16 %v1753
    %v2537 = vunpack.c.l.b16 %v1754
    %v2538 = vunpack.c.h.b16 %v1754
    %v2539 = vunpack.c.l.b16 %v1755
    %v2540 = vunpack.c.h.b16 %v1755
    %v2541 = vunpack.c.l.b16 %v1756
    %v2542 = vunpack.c.h.b16 %v1756
    %v2543 = vunpack.c.l.b16 %v1757
    %v2544 = vunpack.c.h.b16 %v1757
    %v2545 = vunpack.c.l.b16 %v1758
    %v2546 = vunpack.c.h.b16 %v1758
    %v2547 = vunpack.c.l.b16 %v1759
    %v2548 = vunpack.c.h.b16 %v1759
    %v2549 = vunpack.c.l.b16 %v1760
    %v2550 = vunpack.c.h.b16 %v1760
    %v2551 = vunpack.c.l.b16 %v1761
    %v2552 = vunpack.c.h.b16 %v1761
    %v2553 = vunpack.c.l.b16 %v1762
    %v2554 = vunpack.c.h.b16 %v1762
    %v2555 = vunpack.c.l.b16 %v1763
    %v2556 = vunpack.c.h.b16 %v1763
    %v2557 = vunpack.c.l.b16 %v1764
    %v2558 = vunpack.c.h.b16 %v1764
    %v2559 = vunpack.c.l.b16 %v1765
    %v2560 = vunpack.c.h.b16 %v1765
    %v2561 = vunpack.c.l.b16 %v1766
    %v2562 = vunpack.c.h.b16 %v1766
    %v2563 = vunpack.c.l.b16 %v1767
    %v2564 = vunpack.c.h.b16 %v1767
    %v2565 = vunpack.c.l.b16 %v1768
    %v2566 = vunpack.c.h.b16 %v1768
    %v2567 = vunpack.c.l.b16 %v1769
    %v2568 = vunpack.c.h.b16 %v1769
    %v2569 = vunpack.c.l.b16 %v1770
    %v2570 = vunpack.c.h.b16 %v1770
    %v2571 = vunpack.c.l.b16 %v1771
    %v2572 = vunpack.c.h.b16 %v1771
    %v2573 = vunpack.c.l.b16 %v1772
    %v2574 = vunpack.c.h.b16 %v1772
    %v2575 = vunpack.c.l.b16 %v1773
    %v2576 = vunpack.c.h.b16 %v1773
    %v2577 = vunpack.c.l.b16 %v1774
    %v2578 = vunpack.c.h.b16 %v1774
    %v2579 = vunpack.c.l.b16 %v1775
    %v2580 = vunpack.c.h.b16 %v1775
    %v2581 = vunpack.c.l.b16 %v1776
    %v2582 = vunpack.c.h.b16 %v1776
    %v2583 = vunpack.c.l.b16 %v1777
    %v2584 = vunpack.c.h.b16 %v1777
    %v2585 = vunpack.c.l.b16 %v1778
    %v2586 = vunpack.c.h.b16 %v1778
    %v2587 = vunpack.c.l.b16 %v1779
    %v2588 = vunpack.c.h.b16 %v1779
    %v2589 = vunpack.c.l.b16 %v1780
    %v2590 = vunpack.c.h.b16 %v1780
    %v2591 = vpack.c.b16 %v2087, %v2079
    %v2592 = vpack.c.b16 %v2088, %v2080
    %v2593 = vpack.c.b16 %v2089, %v2081
    %v2594 = vpack.c.b16 %v2090, %v2082
    %v2595 = vpack.c.b16 %v2091, %v2083
    %v2596 = vpack.c.b16 %v2092, %v2084
    %v2597 = vpack.c.b16 %v2093, %v2085
    %v2598 = vpack.c.b16 %v2094, %v2086
    %v2599 = vpack.c.b16 %v2103, %v2095
    %v2600 = vpack.c.b16 %v2104, %v2096
    %v2601 = vpack.c.b16 %v2105, %v2097
    %v2602 = vpack.c.b16 %v2106, %v2098
    %v2603 = vpack.c.b16 %v2107, %v2099
    %v2604 = vpack.c.b16 %v2108, %v2100
    %v2605 = vpack.c.b16 %v2109, %v2101
    %v2606 = vpack.c.b16 %v2110, %v2102
    %v2607 = vpack.c.b16 %v2119, %v2111
    %v2608 = vpack.c.b16 %v2120, %v2112
    %v2609 = vpack.c.b16 %v2121, %v2113
    %v2610 = vpack.c.b16 %v2122, %v2114
    %v2611 = vpack.c.b16 %v2123, %v2115
    %v2612 = vpack.c.b16 %v2124, %v2116
    %v2613 = vpack.c.b16 %v2125, %v2117
    %v2614 = vpack.c.b16 %v2126, %v2118
    %v2615 = vpack.c.b16 %v2135, %v2127
    %v2616 = vpack.c.b16 %v2136, %v2128
    %v2617 = vpack.c.b16 %v2137, %v2129
    %v2618 = vpack.c.b16 %v2138, %v2130
    %v2619 = vpack.c.b16 %v2139, %v2131
    %v2620 = vpack.c.b16 %v2140, %v2132
    %v2621 = vpack.c.b16 %v2141, %v2133
    %v2622 = vpack.c.b16 %v2142, %v2134
    %v2623 = vpack.c.b16 %v2151, %v2143
    %v2624 = vpack.c.b16 %v2152, %v2144
    %v2625 = vpack.c.b16 %v2153, %v2145
    %v2626 = vpack.c.b16 %v2154, %v2146
    %v2627 = vpack.c.b16 %v2155, %v2147
    %v2628 = vpack.c.b16 %v2156, %v2148
    %v2629 = vpack.c.b16 %v2157, %v2149
    %v2630 = vpack.c.b16 %v2158, %v2150
    %v2631 = vpack.c.b16 %v2167, %v2159
    %v2632 = vpack.c.b16 %v2168, %v2160
    %v2633 = vpack.c.b16 %v2169, %v2161
    %v2634 = vpack.c.b16 %v2170, %v2162
    %v2635 = vpack.c.b16 %v2171, %v2163
    %v2636 = vpack.c.b16 %v2172, %v2164
    %v2637 = vpack.c.b16 %v2173, %v2165
    %v2638 = vpack.c.b16 %v2174, %v2166
    %v2639 = vpack.c.b16 %v2183, %v2175
    %v2640 = vpack.c.b16 %v2184, %v2176
    %v2641 = vpack.c.b16 %v2185, %v2177
    %v2642 = vpack.c.b16 %v2186, %v2178
    %v2643 = vpack.c.b16 %v2187, %v2179
    %v2644 = vpack.c.b16 %v2188, %v2180
    %v2645 = vpack.c.b16 %v2189, %v2181
    %v2646 = vpack.c.b16 %v2190, %v2182
    %v2647 = vpack.c.b16 %v2199, %v2191
    %v2648 = vpack.c.b16 %v2200, %v2192
    %v2649 = vpack.c.b16 %v2201, %v2193
    %v2650 = vpack.c.b16 %v2202, %v2194
    %v2651 = vpack.c.b16 %v2203, %v2195
    %v2652 = vpack.c.b16 %v2204, %v2196
    %v2653 = vpack.c.b16 %v2205, %v2197
    %v2654 = vpack.c.b16 %v2206, %v2198
    %v2655 = vpack.c.b16 %v2215, %v2207
    %v2656 = vpack.c.b16 %v2216, %v2208
    %v2657 = vpack.c.b16 %v2217, %v2209
    %v2658 = vpack.c.b16 %v2218, %v2210
    %v2659 = vpack.c.b16 %v2219, %v2211
    %v2660 = vpack.c.b16 %v2220, %v2212
    %v2661 = vpack.c.b16 %v2221, %v2213
    %v2662 = vpack.c.b16 %v2222, %v2214
    %v2663 = vpack.c.b16 %v2231, %v2223
    %v2664 = vpack.c.b16 %v2232, %v2224
    %v2665 = vpack.c.b16 %v2233, %v2225
    %v2666 = vpack.c.b16 %v2234, %v2226
    %v2667 = vpack.c.b16 %v2235, %v2227
    %v2668 = vpack.c.b16 %v2236, %v2228
    %v2669 = vpack.c.b16 %v2237, %v2229
    %v2670 = vpack.c.b16 %v2238, %v2230
    %v2671 = vpack.c.b16 %v2247, %v2239
    %v2672 = vpack.c.b16 %v2248, %v2240
    %v2673 = vpack.c.b16 %v2249, %v2241
    %v2674 = vpack.c.b16 %v2250, %v2242
    %v2675 = vpack.c.b16 %v2251, %v2243
    %v2676 = vpack.c.b16 %v2252, %v2244
    %v2677 = vpack.c.b16 %v2253, %v2245
    %v2678 = vpack.c.b16 %v2254, %v2246
    %v2679 = vpack.c.b16 %v2263, %v2255
    %v2680 = vpack.c.b16 %v2264, %v2256
    %v2681 = vpack.c.b16 %v2265, %v2257
    %v2682 = vpack.c.b16 %v2266, %v2258
    %v2683 = vpack.c.b16 %v2267, %v2259
    %v2684 = vpack.c.b16 %v2268, %v2260
    %v2685 = vpack.c.b16 %v2269, %v2261
    %v2686 = vpack.c.b16 %v2270, %v2262
    %v2687 = vpack.c.b16 %v2279, %v2271
    %v2688 = vpack.c.b16 %v2280, %v2272
    %v2689 = vpack.c.b16 %v2281, %v2273
    %v2690 = vpack.c.b16 %v2282, %v2274
    %v2691 = vpack.c.b16 %v2283, %v2275
    %v2692 = vpack.c.b16 %v2284, %v2276
    %v2693 = vpack.c.b16 %v2285, %v2277
    %v2694 = vpack.c.b16 %v2286, %v2278
    %v2695 = vpack.c.b16 %v2295, %v2287
    %v2696 = vpack.c.b16 %v2296, %v2288
    %v2697 = vpack.c.b16 %v2297, %v2289
    %v2698 = vpack.c.b16 %v2298, %v2290
    %v2699 = vpack.c.b16 %v2299, %v2291
    %v2700 = vpack.c.b16 %v2300, %v2292
    %v2701 = vpack.c.b16 %v2301, %v2293
    %v2702 = vpack.c.b16 %v2302, %v2294
    %v2703 = vpack.c.b16 %v2311, %v2303
    %v2704 = vpack.c.b16 %v2312, %v2304
    %v2705 = vpack.c.b16 %v2313, %v2305
    %v2706 = vpack.c.b16 %v2314, %v2306
    %v2707 = vpack.c.b16 %v2315, %v2307
    %v2708 = vpack.c.b16 %v2316, %v2308
    %v2709 = vpack.c.b16 %v2317, %v2309
    %v2710 = vpack.c.b16 %v2318, %v2310
    %v2711 = vpack.c.b16 %v2327, %v2319
    %v2712 = vpack.c.b16 %v2328, %v2320
    %v2713 = vpack.c.b16 %v2329, %v2321
    %v2714 = vpack.c.b16 %v2330, %v2322
    %v2715 = vpack.c.b16 %v2331, %v2323
    %v2716 = vpack.c.b16 %v2332, %v2324
    %v2717 = vpack.c.b16 %v2333, %v2325
    %v2718 = vpack.c.b16 %v2334, %v2326
    %v2719 = vpack.c.b16 %v2343, %v2335
    %v2720 = vpack.c.b16 %v2344, %v2336
    %v2721 = vpack.c.b16 %v2345, %v2337
    %v2722 = vpack.c.b16 %v2346, %v2338
    %v2723 = vpack.c.b16 %v2347, %v2339
    %v2724 = vpack.c.b16 %v2348, %v2340
    %v2725 = vpack.c.b16 %v2349, %v2341
    %v2726 = vpack.c.b16 %v2350, %v2342
    %v2727 = vpack.c.b16 %v2359, %v2351
    %v2728 = vpack.c.b16 %v2360, %v2352
    %v2729 = vpack.c.b16 %v2361, %v2353
    %v2730 = vpack.c.b16 %v2362, %v2354
    %v2731 = vpack.c.b16 %v2363, %v2355
    %v2732 = vpack.c.b16 %v2364, %v2356
    %v2733 = vpack.c.b16 %v2365, %v2357
    %v2734 = vpack.c.b16 %v2366, %v2358
    %v2735 = vpack.c.b16 %v2375, %v2367
    %v2736 = vpack.c.b16 %v2376, %v2368
    %v2737 = vpack.c.b16 %v2377, %v2369
    %v2738 = vpack.c.b16 %v2378, %v2370
    %v2739 = vpack.c.b16 %v2379, %v2371
    %v2740 = vpack.c.b16 %v2380, %v2372
    %v2741 = vpack.c.b16 %v2381, %v2373
    %v2742 = vpack.c.b16 %v2382, %v2374
    %v2743 = vpack.c.b16 %v2391, %v2383
    %v2744 = vpack.c.b16 %v2392, %v2384
    %v2745 = vpack.c.b16 %v2393, %v2385
    %v2746 = vpack.c.b16 %v2394, %v2386
    %v2747 = vpack.c.b16 %v2395, %v2387
    %v2748 = vpack.c.b16 %v2396, %v2388
    %v2749 = vpack.c.b16 %v2397, %v2389
    %v2750 = vpack.c.b16 %v2398, %v2390
    %v2751 = vpack.c.b16 %v2407, %v2399
    %v2752 = vpack.c.b16 %v2408, %v2400
    %v2753 = vpack.c.b16 %v2409, %v2401
    %v2754 = vpack.c.b16 %v2410, %v2402
    %v2755 = vpack.c.b16 %v2411, %v2403
    %v2756 = vpack.c.b16 %v2412, %v2404
    %v2757 = vpack.c.b16 %v2413, %v2405
    %v2758 = vpack.c.b16 %v2414, %v2406
    %v2759 = vpack.c.b16 %v2423, %v2415
    %v2760 = vpack.c.b16 %v2424, %v2416
    %v2761 = vpack.c.b16 %v2425, %v2417
    %v2762 = vpack.c.b16 %v2426, %v2418
    %v2763 = vpack.c.b16 %v2427, %v2419
    %v2764 = vpack.c.b16 %v2428, %v2420
    %v2765 = vpack.c.b16 %v2429, %v2421
    %v2766 = vpack.c.b16 %v2430, %v2422
    %v2767 = vpack.c.b16 %v2439, %v2431
    %v2768 = vpack.c.b16 %v2440, %v2432
    %v2769 = vpack.c.b16 %v2441, %v2433
    %v2770 = vpack.c.b16 %v2442, %v2434
    %v2771 = vpack.c.b16 %v2443, %v2435
    %v2772 = vpack.c.b16 %v2444, %v2436
    %v2773 = vpack.c.b16 %v2445, %v2437
    %v2774 = vpack.c.b16 %v2446, %v2438
    %v2775 = vpack.c.b16 %v2455, %v2447
    %v2776 = vpack.c.b16 %v2456, %v2448
    %v2777 = vpack.c.b16 %v2457, %v2449
    %v2778 = vpack.c.b16 %v2458, %v2450
    %v2779 = vpack.c.b16 %v2459, %v2451
    %v2780 = vpack.c.b16 %v2460, %v2452
    %v2781 = vpack.c.b16 %v2461, %v2453
    %v2782 = vpack.c.b16 %v2462, %v2454
    %v2783 = vpack.c.b16 %v2471, %v2463
    %v2784 = vpack.c.b16 %v2472, %v2464
    %v2785 = vpack.c.b16 %v2473, %v2465
    %v2786 = vpack.c.b16 %v2474, %v2466
    %v2787 = vpack.c.b16 %v2475, %v2467
    %v2788 = vpack.c.b16 %v2476, %v2468
    %v2789 = vpack.c.b16 %v2477, %v2469
    %v2790 = vpack.c.b16 %v2478, %v2470
    %v2791 = vpack.c.b16 %v2487, %v2479
    %v2792 = vpack.c.b16 %v2488, %v2480
    %v2793 = vpack.c.b16 %v2489, %v2481
    %v2794 = vpack.c.b16 %v2490, %v2482
    %v2795 = vpack.c.b16 %v2491, %v2483
    %v2796 = vpack.c.b16 %v2492, %v2484
    %v2797 = vpack.c.b16 %v2493, %v2485
    %v2798 = vpack.c.b16 %v2494, %v2486
    %v2799 = vpack.c.b16 %v2503, %v2495
    %v2800 = vpack.c.b16 %v2504, %v2496
    %v2801 = vpack.c.b16 %v2505, %v2497
    %v2802 = vpack.c.b16 %v2506, %v2498
    %v2803 = vpack.c.b16 %v2507, %v2499
    %v2804 = vpack.c.b16 %v2508, %v2500
    %v2805 = vpack.c.b16 %v2509, %v2501
    %v2806 = vpack.c.b16 %v2510, %v2502
    %v2807 = vpack.c.b16 %v2519, %v2511
    %v2808 = vpack.c.b16 %v2520, %v2512
    %v2809 = vpack.c.b16 %v2521, %v2513
    %v2810 = vpack.c.b16 %v2522, %v2514
    %v2811 = vpack.c.b16 %v2523, %v2515
    %v2812 = vpack.c.b16 %v2524, %v2516
    %v2813 = vpack.c.b16 %v2525, %v2517
    %v2814 = vpack.c.b16 %v2526, %v2518
    %v2815 = vpack.c.b16 %v2535, %v2527
    %v2816 = vpack.c.b16 %v2536, %v2528
    %v2817 = vpack.c.b16 %v2537, %v2529
    %v2818 = vpack.c.b16 %v2538, %v2530
    %v2819 = vpack.c.b16 %v2539, %v2531
    %v2820 = vpack.c.b16 %v2540, %v2532
    %v2821 = vpack.c.b16 %v2541, %v2533
    %v2822 = vpack.c.b16 %v2542, %v2534
    %v2823 = vpack.c.b16 %v2551, %v2543
    %v2824 = vpack.c.b16 %v2552, %v2544
    %v2825 = vpack.c.b16 %v2553, %v2545
    %v2826 = vpack.c.b16 %v2554, %v2546
    %v2827 = vpack.c.b16 %v2555, %v2547
    %v2828 = vpack.c.b16 %v2556, %v2548
    %v2829 = vpack.c.b16 %v2557, %v2549
    %v2830 = vpack.c.b16 %v2558, %v2550
    %v2831 = vpack.c.b16 %v2567, %v2559
    %v2832 = vpack.c.b16 %v2568, %v2560
    %v2833 = vpack.c.b16 %v2569, %v2561
    %v2834 = vpack.c.b16 %v2570, %v2562
    %v2835 = vpack.c.b16 %v2571, %v2563
    %v2836 = vpack.c.b16 %v2572, %v2564
    %v2837 = vpack.c.b16 %v2573, %v2565
    %v2838 = vpack.c.b16 %v2574, %v2566
    %v2839 = vpack.c.b16 %v2583, %v2575
    %v2840 = vpack.c.b16 %v2584, %v2576
    %v2841 = vpack.c.b16 %v2585, %v2577
    %v2842 = vpack.c.b16 %v2586, %v2578
    %v2843 = vpack.c.b16 %v2587, %v2579
    %v2844 = vpack.c.b16 %v2588, %v2580
    %v2845 = vpack.c.b16 %v2589, %v2581
    %v2846 = vpack.c.b16 %v2590, %v2582
    %3103 = vmatprep.subr.bf16.mxu0 %v2592
    %3104 = vmatpush1.bf16.msra.mxu0 %v2591
    %3105 = vmatprep.subr.bf16.mxu0 %v2600
    %3106 = vmatpush1.bf16.msra.mxu0 %v2599
    %3107 = vmatprep.subr.bf16.mxu0 %v2608
    %3108 = vmatpush1.bf16.msra.mxu0 %v2607
    %3109 = vmatprep.subr.bf16.mxu0 %v2616
    %3110 = vmatpush1.bf16.msra.mxu0 %v2615
    %3111 = vmatprep.subr.bf16.mxu0 %v2624
    %3112 = vmatpush1.bf16.msra.mxu0 %v2623
    %3113 = vmatprep.subr.bf16.mxu0 %v2632
    %3114 = vmatpush1.bf16.msra.mxu0 %v2631
    %3115 = vmatprep.subr.bf16.mxu0 %v2640
    %3116 = vmatpush1.bf16.msra.mxu0 %v2639
    %3117 = vmatprep.subr.bf16.mxu0 %v2648
    %3118 = vmatpush1.bf16.msra.mxu0 %v2647
    %3119 = vmatprep.subr.bf16.mxu0 %v2656
    %3120 = vmatpush1.bf16.msra.mxu0 %v2655
    %3121 = vmatprep.subr.bf16.mxu0 %v2664
    %3122 = vmatpush1.bf16.msra.mxu0 %v2663
    %3123 = vmatprep.subr.bf16.mxu0 %v2672
    %3124 = vmatpush1.bf16.msra.mxu0 %v2671
    %3125 = vmatprep.subr.bf16.mxu0 %v2680
    %3126 = vmatpush1.bf16.msra.mxu0 %v2679
    %3127 = vmatprep.subr.bf16.mxu0 %v2688
    %3128 = vmatpush1.bf16.msra.mxu0 %v2687
    %3129 = vmatprep.subr.bf16.mxu0 %v2696
    %3130 = vmatpush1.bf16.msra.mxu0 %v2695
    %3131 = vmatprep.subr.bf16.mxu0 %v2704
    %3132 = vmatpush1.bf16.msra.mxu0 %v2703
    %3133 = vmatprep.subr.bf16.mxu0 %v2712
    %3134 = vmatpush1.bf16.msra.mxu0 %v2711
    %3135 = vmatprep.mubr.bf16.mxu0 %v1522
    %3136 = vmatmul.mubr.bf16.gmra.mrb[0].mxu0 %v1521
    %v3137 = vpop.f32.mrb[0].mxu0
    %v3138 = vadd.f32 %v1786, %v3137
    %v3139 = vpop.f32.mrb[0].mxu0
    %v3140 = vadd.f32 %v1790, %v3139
    %v3141 = vpop.f32.mrb[0].mxu0
    %v3142 = vpop.f32.mrb[0].mxu0
    %3143 = vdwg.mxu0
    %3144 = vmatprep.subr.bf16.mxu0 %v2720
    %3145 = vmatpush1.bf16.msra.mxu0 %v2719
    %3146 = vmatprep.subr.bf16.mxu0 %v2728
    %3147 = vmatpush1.bf16.msra.mxu0 %v2727
    %3148 = vmatprep.subr.bf16.mxu0 %v2736
    %3149 = vmatpush1.bf16.msra.mxu0 %v2735
    %3150 = vmatprep.subr.bf16.mxu0 %v2744
    %3151 = vmatpush1.bf16.msra.mxu0 %v2743
    %3152 = vmatprep.subr.bf16.mxu0 %v2752
    %3153 = vmatpush1.bf16.msra.mxu0 %v2751
    %3154 = vmatprep.subr.bf16.mxu0 %v2760
    %3155 = vmatpush1.bf16.msra.mxu0 %v2759
    %3156 = vmatprep.subr.bf16.mxu0 %v2768
    %3157 = vmatpush1.bf16.msra.mxu0 %v2767
    %3158 = vmatprep.subr.bf16.mxu0 %v2776
    %3159 = vmatpush1.bf16.msra.mxu0 %v2775
    %3160 = vmatprep.subr.bf16.mxu0 %v2784
    %3161 = vmatpush1.bf16.msra.mxu0 %v2783
    %3162 = vmatprep.subr.bf16.mxu0 %v2792
    %3163 = vmatpush1.bf16.msra.mxu0 %v2791
    %3164 = vmatprep.subr.bf16.mxu0 %v2800
    %3165 = vmatpush1.bf16.msra.mxu0 %v2799
    %3166 = vmatprep.subr.bf16.mxu0 %v2808
    %3167 = vmatpush1.bf16.msra.mxu0 %v2807
    %3168 = vmatprep.subr.bf16.mxu0 %v2816
    %3169 = vmatpush1.bf16.msra.mxu0 %v2815
    %3170 = vmatprep.subr.bf16.mxu0 %v2824
    %3171 = vmatpush1.bf16.msra.mxu0 %v2823
    %3172 = vmatprep.subr.bf16.mxu0 %v2832
    %3173 = vmatpush1.bf16.msra.mxu0 %v2831
    %3174 = vmatprep.subr.bf16.mxu0 %v2840
    %3175 = vmatpush1.bf16.msra.mxu0 %v2839
    %3176 = vmatprep.mubr.bf16.mxu0 %v1524
    %3177 = vmatmul.mubr.bf16.gmra.mrb[0].mxu0 %v1523
    %v3178 = vpop.f32.mrb[0].mxu0
    %v3179 = vadd.f32 %v3138, %v3178
    %v3180 = vpop.f32.mrb[0].mxu0
    %v3181 = vadd.f32 %v3140, %v3180
    %v3182 = vpop.f32.mrb[0].mxu0
    %v3183 = vpop.f32.mrb[0].mxu0
    %3184 = vdwg.mxu0
    %3185 = vmatprep.subr.bf16.mxu0 %v2594
    %3186 = vmatpush1.bf16.msra.mxu0 %v2593
    %3187 = vmatprep.subr.bf16.mxu0 %v2602
    %3188 = vmatpush1.bf16.msra.mxu0 %v2601
    %3189 = vmatprep.subr.bf16.mxu0 %v2610
    %3190 = vmatpush1.bf16.msra.mxu0 %v2609
    %3191 = vmatprep.subr.bf16.mxu0 %v2618
    %3192 = vmatpush1.bf16.msra.mxu0 %v2617
    %3193 = vmatprep.subr.bf16.mxu0 %v2626
    %3194 = vmatpush1.bf16.msra.mxu0 %v2625
    %3195 = vmatprep.subr.bf16.mxu0 %v2634
    %3196 = vmatpush1.bf16.msra.mxu0 %v2633
    %3197 = vmatprep.subr.bf16.mxu0 %v2642
    %3198 = vmatpush1.bf16.msra.mxu0 %v2641
    %3199 = vmatprep.subr.bf16.mxu0 %v2650
    %3200 = vmatpush1.bf16.msra.mxu0 %v2649
    %3201 = vmatprep.subr.bf16.mxu0 %v2658
    %3202 = vmatpush1.bf16.msra.mxu0 %v2657
    %3203 = vmatprep.subr.bf16.mxu0 %v2666
    %3204 = vmatpush1.bf16.msra.mxu0 %v2665
    %3205 = vmatprep.subr.bf16.mxu0 %v2674
    %3206 = vmatpush1.bf16.msra.mxu0 %v2673
    %3207 = vmatprep.subr.bf16.mxu0 %v2682
    %3208 = vmatpush1.bf16.msra.mxu0 %v2681
    %3209 = vmatprep.subr.bf16.mxu0 %v2690
    %3210 = vmatpush1.bf16.msra.mxu0 %v2689
    %3211 = vmatprep.subr.bf16.mxu0 %v2698
    %3212 = vmatpush1.bf16.msra.mxu0 %v2697
    %3213 = vmatprep.subr.bf16.mxu0 %v2706
    %3214 = vmatpush1.bf16.msra.mxu0 %v2705
    %3215 = vmatprep.subr.bf16.mxu0 %v2714
    %3216 = vmatpush1.bf16.msra.mxu0 %v2713
    %3217 = vmatprep.mubr.bf16.mxu0 %v1522
    %3218 = vmatmul.mubr.bf16.gmra.mrb[0].mxu0 %v1521
    %v3219 = vpop.f32.mrb[0].mxu0
    %v3220 = vadd.f32 %v1794, %v3219
    %v3221 = vpop.f32.mrb[0].mxu0
    %v3222 = vadd.f32 %v1798, %v3221
    %v3223 = vpop.f32.mrb[0].mxu0
    %v3224 = vpop.f32.mrb[0].mxu0
    %3225 = vdwg.mxu0
    %3226 = vmatprep.subr.bf16.mxu0 %v2722
    %3227 = vmatpush1.bf16.msra.mxu0 %v2721
    %3228 = vmatprep.subr.bf16.mxu0 %v2730
    %3229 = vmatpush1.bf16.msra.mxu0 %v2729
    %3230 = vmatprep.subr.bf16.mxu0 %v2738
    %3231 = vmatpush1.bf16.msra.mxu0 %v2737
    %3232 = vmatprep.subr.bf16.mxu0 %v2746
    %3233 = vmatpush1.bf16.msra.mxu0 %v2745
    %3234 = vmatprep.subr.bf16.mxu0 %v2754
    %3235 = vmatpush1.bf16.msra.mxu0 %v2753
    %3236 = vmatprep.subr.bf16.mxu0 %v2762
    %3237 = vmatpush1.bf16.msra.mxu0 %v2761
    %3238 = vmatprep.subr.bf16.mxu0 %v2770
    %3239 = vmatpush1.bf16.msra.mxu0 %v2769
    %3240 = vmatprep.subr.bf16.mxu0 %v2778
    %3241 = vmatpush1.bf16.msra.mxu0 %v2777
    %3242 = vmatprep.subr.bf16.mxu0 %v2786
    %3243 = vmatpush1.bf16.msra.mxu0 %v2785
    %3244 = vmatprep.subr.bf16.mxu0 %v2794
    %3245 = vmatpush1.bf16.msra.mxu0 %v2793
    %3246 = vmatprep.subr.bf16.mxu0 %v2802
    %3247 = vmatpush1.bf16.msra.mxu0 %v2801
    %3248 = vmatprep.subr.bf16.mxu0 %v2810
    %3249 = vmatpush1.bf16.msra.mxu0 %v2809
    %3250 = vmatprep.subr.bf16.mxu0 %v2818
    %3251 = vmatpush1.bf16.msra.mxu0 %v2817
    %3252 = vmatprep.subr.bf16.mxu0 %v2826
    %3253 = vmatpush1.bf16.msra.mxu0 %v2825
    %3254 = vmatprep.subr.bf16.mxu0 %v2834
    %3255 = vmatpush1.bf16.msra.mxu0 %v2833
    %3256 = vmatprep.subr.bf16.mxu0 %v2842
    %3257 = vmatpush1.bf16.msra.mxu0 %v2841
    %3258 = vmatprep.mubr.bf16.mxu0 %v1524
    %3259 = vmatmul.mubr.bf16.gmra.mrb[0].mxu0 %v1523
    %v3260 = vpop.f32.mrb[0].mxu0
    %v3261 = vadd.f32 %v3220, %v3260
    %v3262 = vpop.f32.mrb[0].mxu0
    %v3263 = vadd.f32 %v3222, %v3262
    %v3264 = vpop.f32.mrb[0].mxu0
    %v3265 = vpop.f32.mrb[0].mxu0
    %3266 = vdwg.mxu0
    %3267 = vmatprep.subr.bf16.mxu0 %v2596
    %3268 = vmatpush1.bf16.msra.mxu0 %v2595
    %3269 = vmatprep.subr.bf16.mxu0 %v2604
    %3270 = vmatpush1.bf16.msra.mxu0 %v2603
    %3271 = vmatprep.subr.bf16.mxu0 %v2612
    %3272 = vmatpush1.bf16.msra.mxu0 %v2611
    %3273 = vmatprep.subr.bf16.mxu0 %v2620
    %3274 = vmatpush1.bf16.msra.mxu0 %v2619
    %3275 = vmatprep.subr.bf16.mxu0 %v2628
    %3276 = vmatpush1.bf16.msra.mxu0 %v2627
    %3277 = vmatprep.subr.bf16.mxu0 %v2636
    %3278 = vmatpush1.bf16.msra.mxu0 %v2635
    %3279 = vmatprep.subr.bf16.mxu0 %v2644
    %3280 = vmatpush1.bf16.msra.mxu0 %v2643
    %3281 = vmatprep.subr.bf16.mxu0 %v2652
    %3282 = vmatpush1.bf16.msra.mxu0 %v2651
    %3283 = vmatprep.subr.bf16.mxu0 %v2660
    %3284 = vmatpush1.bf16.msra.mxu0 %v2659
    %3285 = vmatprep.subr.bf16.mxu0 %v2668
    %3286 = vmatpush1.bf16.msra.mxu0 %v2667
    %3287 = vmatprep.subr.bf16.mxu0 %v2676
    %3288 = vmatpush1.bf16.msra.mxu0 %v2675
    %3289 = vmatprep.subr.bf16.mxu0 %v2684
    %3290 = vmatpush1.bf16.msra.mxu0 %v2683
    %3291 = vmatprep.subr.bf16.mxu0 %v2692
    %3292 = vmatpush1.bf16.msra.mxu0 %v2691
    %3293 = vmatprep.subr.bf16.mxu0 %v2700
    %3294 = vmatpush1.bf16.msra.mxu0 %v2699
    %3295 = vmatprep.subr.bf16.mxu0 %v2708
    %3296 = vmatpush1.bf16.msra.mxu0 %v2707
    %3297 = vmatprep.subr.bf16.mxu0 %v2716
    %3298 = vmatpush1.bf16.msra.mxu0 %v2715
    %3299 = vmatprep.mubr.bf16.mxu0 %v1522
    %3300 = vmatmul.mubr.bf16.gmra.mrb[0].mxu0 %v1521
    %v3301 = vpop.f32.mrb[0].mxu0
    %v3302 = vadd.f32 %v1802, %v3301
    %v3303 = vpop.f32.mrb[0].mxu0
    %v3304 = vadd.f32 %v1806, %v3303
    %v3305 = vpop.f32.mrb[0].mxu0
    %v3306 = vpop.f32.mrb[0].mxu0
    %3307 = vdwg.mxu0
    %3308 = vmatprep.subr.bf16.mxu0 %v2724
    %3309 = vmatpush1.bf16.msra.mxu0 %v2723
    %3310 = vmatprep.subr.bf16.mxu0 %v2732
    %3311 = vmatpush1.bf16.msra.mxu0 %v2731
    %3312 = vmatprep.subr.bf16.mxu0 %v2740
    %3313 = vmatpush1.bf16.msra.mxu0 %v2739
    %3314 = vmatprep.subr.bf16.mxu0 %v2748
    %3315 = vmatpush1.bf16.msra.mxu0 %v2747
    %3316 = vmatprep.subr.bf16.mxu0 %v2756
    %3317 = vmatpush1.bf16.msra.mxu0 %v2755
    %3318 = vmatprep.subr.bf16.mxu0 %v2764
    %3319 = vmatpush1.bf16.msra.mxu0 %v2763
    %3320 = vmatprep.subr.bf16.mxu0 %v2772
    %3321 = vmatpush1.bf16.msra.mxu0 %v2771
    %3322 = vmatprep.subr.bf16.mxu0 %v2780
    %3323 = vmatpush1.bf16.msra.mxu0 %v2779
    %3324 = vmatprep.subr.bf16.mxu0 %v2788
    %3325 = vmatpush1.bf16.msra.mxu0 %v2787
    %3326 = vmatprep.subr.bf16.mxu0 %v2796
    %3327 = vmatpush1.bf16.msra.mxu0 %v2795
    %3328 = vmatprep.subr.bf16.mxu0 %v2804
    %3329 = vmatpush1.bf16.msra.mxu0 %v2803
    %3330 = vmatprep.subr.bf16.mxu0 %v2812
    %3331 = vmatpush1.bf16.msra.mxu0 %v2811
    %3332 = vmatprep.subr.bf16.mxu0 %v2820
    %3333 = vmatpush1.bf16.msra.mxu0 %v2819
    %3334 = vmatprep.subr.bf16.mxu0 %v2828
    %3335 = vmatpush1.bf16.msra.mxu0 %v2827
    %3336 = vmatprep.subr.bf16.mxu0 %v2836
    %3337 = vmatpush1.bf16.msra.mxu0 %v2835
    %3338 = vmatprep.subr.bf16.mxu0 %v2844
    %3339 = vmatpush1.bf16.msra.mxu0 %v2843
    %3340 = vmatprep.mubr.bf16.mxu0 %v1524
    %3341 = vmatmul.mubr.bf16.gmra.mrb[0].mxu0 %v1523
    %v3342 = vpop.f32.mrb[0].mxu0
    %v3343 = vadd.f32 %v3302, %v3342
    %v3344 = vpop.f32.mrb[0].mxu0
    %v3345 = vadd.f32 %v3304, %v3344
    %v3346 = vpop.f32.mrb[0].mxu0
    %v3347 = vpop.f32.mrb[0].mxu0
    %3348 = vdwg.mxu0
    %3349 = vmatprep.subr.bf16.mxu0 %v2598
    %3350 = vmatpush1.bf16.msra.mxu0 %v2597
    %3351 = vmatprep.subr.bf16.mxu0 %v2606
    %3352 = vmatpush1.bf16.msra.mxu0 %v2605
    %3353 = vmatprep.subr.bf16.mxu0 %v2614
    %3354 = vmatpush1.bf16.msra.mxu0 %v2613
    %3355 = vmatprep.subr.bf16.mxu0 %v2622
    %3356 = vmatpush1.bf16.msra.mxu0 %v2621
    %3357 = vmatprep.subr.bf16.mxu0 %v2630
    %3358 = vmatpush1.bf16.msra.mxu0 %v2629
    %3359 = vmatprep.subr.bf16.mxu0 %v2638
    %3360 = vmatpush1.bf16.msra.mxu0 %v2637
    %3361 = vmatprep.subr.bf16.mxu0 %v2646
    %3362 = vmatpush1.bf16.msra.mxu0 %v2645
    %3363 = vmatprep.subr.bf16.mxu0 %v2654
    %3364 = vmatpush1.bf16.msra.mxu0 %v2653
    %3365 = vmatprep.subr.bf16.mxu0 %v2662
    %3366 = vmatpush1.bf16.msra.mxu0 %v2661
    %3367 = vmatprep.subr.bf16.mxu0 %v2670
    %3368 = vmatpush1.bf16.msra.mxu0 %v2669
    %3369 = vmatprep.subr.bf16.mxu0 %v2678
    %3370 = vmatpush1.bf16.msra.mxu0 %v2677
    %3371 = vmatprep.subr.bf16.mxu0 %v2686
    %3372 = vmatpush1.bf16.msra.mxu0 %v2685
    %3373 = vmatprep.subr.bf16.mxu0 %v2694
    %3374 = vmatpush1.bf16.msra.mxu0 %v2693
    %3375 = vmatprep.subr.bf16.mxu0 %v2702
    %3376 = vmatpush1.bf16.msra.mxu0 %v2701
    %3377 = vmatprep.subr.bf16.mxu0 %v2710
    %3378 = vmatpush1.bf16.msra.mxu0 %v2709
    %3379 = vmatprep.subr.bf16.mxu0 %v2718
    %3380 = vmatpush1.bf16.msra.mxu0 %v2717
    %3381 = vmatprep.mubr.bf16.mxu0 %v1522
    %3382 = vmatmul.mubr.bf16.gmra.mrb[0].mxu0 %v1521
    %v3383 = vpop.f32.mrb[0].mxu0
    %v3384 = vadd.f32 %v1810, %v3383
    %v3385 = vpop.f32.mrb[0].mxu0
    %v3386 = vadd.f32 %v1814, %v3385
    %v3387 = vpop.f32.mrb[0].mxu0
    %v3388 = vpop.f32.mrb[0].mxu0
    %3389 = vdwg.mxu0
    %3390 = vmatprep.subr.bf16.mxu0 %v2726
    %3391 = vmatpush1.bf16.msra.mxu0 %v2725
    %3392 = vmatprep.subr.bf16.mxu0 %v2734
    %3393 = vmatpush1.bf16.msra.mxu0 %v2733
    %3394 = vmatprep.subr.bf16.mxu0 %v2742
    %3395 = vmatpush1.bf16.msra.mxu0 %v2741
    %3396 = vmatprep.subr.bf16.mxu0 %v2750
    %3397 = vmatpush1.bf16.msra.mxu0 %v2749
    %3398 = vmatprep.subr.bf16.mxu0 %v2758
    %3399 = vmatpush1.bf16.msra.mxu0 %v2757
    %3400 = vmatprep.subr.bf16.mxu0 %v2766
    %3401 = vmatpush1.bf16.msra.mxu0 %v2765
    %3402 = vmatprep.subr.bf16.mxu0 %v2774
    %3403 = vmatpush1.bf16.msra.mxu0 %v2773
    %3404 = vmatprep.subr.bf16.mxu0 %v2782
    %3405 = vmatpush1.bf16.msra.mxu0 %v2781
    %3406 = vmatprep.subr.bf16.mxu0 %v2790
    %3407 = vmatpush1.bf16.msra.mxu0 %v2789
    %3408 = vmatprep.subr.bf16.mxu0 %v2798
    %3409 = vmatpush1.bf16.msra.mxu0 %v2797
    %3410 = vmatprep.subr.bf16.mxu0 %v2806
    %3411 = vmatpush1.bf16.msra.mxu0 %v2805
    %3412 = vmatprep.subr.bf16.mxu0 %v2814
    %3413 = vmatpush1.bf16.msra.mxu0 %v2813
    %3414 = vmatprep.subr.bf16.mxu0 %v2822
    %3415 = vmatpush1.bf16.msra.mxu0 %v2821
    %3416 = vmatprep.subr.bf16.mxu0 %v2830
    %3417 = vmatpush1.bf16.msra.mxu0 %v2829
    %3418 = vmatprep.subr.bf16.mxu0 %v2838
    %3419 = vmatpush1.bf16.msra.mxu0 %v2837
    %3420 = vmatprep.subr.bf16.mxu0 %v2846
    %3421 = vmatpush1.bf16.msra.mxu0 %v2845
    %3422 = vmatprep.mubr.bf16.mxu0 %v1524
    %3423 = vmatmul.mubr.bf16.gmra.mrb[0].mxu0 %v1523
    %v3424 = vpop.f32.mrb[0].mxu0
    %v3425 = vadd.f32 %v3384, %v3424
    %v3426 = vpop.f32.mrb[0].mxu0
    %v3427 = vadd.f32 %v3386, %v3426
    %v3428 = vpop.f32.mrb[0].mxu0
    %v3429 = vpop.f32.mrb[0].mxu0
    %3430 = vdwg.mxu0
    %v3431 = vmax.f32 %v3179, 0.0
    %v3432 = vmax.f32 %v3181, 0.0
    %v3433 = vmax.f32 %v3261, 0.0
    %v3434 = vmax.f32 %v3263, 0.0
    %v3435 = vmax.f32 %v3343, 0.0
    %v3436 = vmax.f32 %v3345, 0.0
    %v3437 = vmax.f32 %v3425, 0.0
    %v3438 = vmax.f32 %v3427, 0.0
    %v3439 = vpack.c.bf16 %v3431, %v3431
    %v3440 = vpack.c.bf16 %v3432, %v3432
    %v3441 = vpack.c.bf16 %v3433, %v3433
    %v3442 = vpack.c.bf16 %v3434, %v3434
    %v3443 = vpack.c.bf16 %v3435, %v3435
    %v3444 = vpack.c.bf16 %v3436, %v3436
    %v3445 = vpack.c.bf16 %v3437, %v3437
    %v3446 = vpack.c.bf16 %v3438, %v3438
    %v3447 = vld [vmem:[#allocation2 + $0x600] sm:$0xff]
    %v3448 = vld [vmem:[#allocation2 + $0x608] sm:$0xff]
    %v3449 = vld [vmem:[#allocation2 + $0x610] sm:$0xff]
    %v3450 = vld [vmem:[#allocation2 + $0x618] sm:$0xff]
    %v3451 = vld [vmem:[#allocation2 + $0x620] sm:$0xff]
    %v3452 = vld [vmem:[#allocation2 + $0x628] sm:$0xff]
    %v3453 = vld [vmem:[#allocation2 + $0x630] sm:$0xff]
    %v3454 = vld [vmem:[#allocation2 + $0x638] sm:$0xff]
    %v3455 = vld [vmem:[#allocation2 + $0x640] sm:$0xff]
    %v3456 = vld [vmem:[#allocation2 + $0x648] sm:$0xff]
    %v3457 = vld [vmem:[#allocation2 + $0x650] sm:$0xff]
    %v3458 = vld [vmem:[#allocation2 + $0x658] sm:$0xff]
    %v3459 = vld [vmem:[#allocation2 + $0x660] sm:$0xff]
    %v3460 = vld [vmem:[#allocation2 + $0x668] sm:$0xff]
    %v3461 = vld [vmem:[#allocation2 + $0x670] sm:$0xff]
    %v3462 = vld [vmem:[#allocation2 + $0x678] sm:$0xff]
    %v3463 = vld [vmem:[#allocation2 + $0x680] sm:$0xff]
    %v3464 = vld [vmem:[#allocation2 + $0x688] sm:$0xff]
    %v3465 = vld [vmem:[#allocation2 + $0x690] sm:$0xff]
    %v3466 = vld [vmem:[#allocation2 + $0x698] sm:$0xff]
    %v3467 = vld [vmem:[#allocation2 + $0x6a0] sm:$0xff]
    %v3468 = vld [vmem:[#allocation2 + $0x6a8] sm:$0xff]
    %v3469 = vld [vmem:[#allocation2 + $0x6b0] sm:$0xff]
    %v3470 = vld [vmem:[#allocation2 + $0x6b8] sm:$0xff]
    %v3471 = vld [vmem:[#allocation2 + $0x6c0] sm:$0xff]
    %v3472 = vld [vmem:[#allocation2 + $0x6c8] sm:$0xff]
    %v3473 = vld [vmem:[#allocation2 + $0x6d0] sm:$0xff]
    %v3474 = vld [vmem:[#allocation2 + $0x6d8] sm:$0xff]
    %v3475 = vld [vmem:[#allocation2 + $0x6e0] sm:$0xff]
    %v3476 = vld [vmem:[#allocation2 + $0x6e8] sm:$0xff]
    %v3477 = vld [vmem:[#allocation2 + $0x6f0] sm:$0xff]
    %v3478 = vld [vmem:[#allocation2 + $0x6f8] sm:$0xff]
    %v3479 = vld [vmem:[#allocation2 + $0x700] sm:$0xff]
    %v3480 = vld [vmem:[#allocation2 + $0x708] sm:$0xff]
    %v3481 = vld [vmem:[#allocation2 + $0x710] sm:$0xff]
    %v3482 = vld [vmem:[#allocation2 + $0x718] sm:$0xff]
    %v3483 = vld [vmem:[#allocation2 + $0x720] sm:$0xff]
    %v3484 = vld [vmem:[#allocation2 + $0x728] sm:$0xff]
    %v3485 = vld [vmem:[#allocation2 + $0x730] sm:$0xff]
    %v3486 = vld [vmem:[#allocation2 + $0x738] sm:$0xff]
    %v3487 = vld [vmem:[#allocation2 + $0x740] sm:$0xff]
    %v3488 = vld [vmem:[#allocation2 + $0x748] sm:$0xff]
    %v3489 = vld [vmem:[#allocation2 + $0x750] sm:$0xff]
    %v3490 = vld [vmem:[#allocation2 + $0x758] sm:$0xff]
    %v3491 = vld [vmem:[#allocation2 + $0x760] sm:$0xff]
    %v3492 = vld [vmem:[#allocation2 + $0x768] sm:$0xff]
    %v3493 = vld [vmem:[#allocation2 + $0x770] sm:$0xff]
    %v3494 = vld [vmem:[#allocation2 + $0x778] sm:$0xff]
    %v3495 = vld [vmem:[#allocation2 + $0x780] sm:$0xff]
    %v3496 = vld [vmem:[#allocation2 + $0x788] sm:$0xff]
    %v3497 = vld [vmem:[#allocation2 + $0x790] sm:$0xff]
    %v3498 = vld [vmem:[#allocation2 + $0x798] sm:$0xff]
    %v3499 = vld [vmem:[#allocation2 + $0x7a0] sm:$0xff]
    %v3500 = vld [vmem:[#allocation2 + $0x7a8] sm:$0xff]
    %v3501 = vld [vmem:[#allocation2 + $0x7b0] sm:$0xff]
    %v3502 = vld [vmem:[#allocation2 + $0x7b8] sm:$0xff]
    %v3503 = vld [vmem:[#allocation2 + $0x7c0] sm:$0xff]
    %v3504 = vld [vmem:[#allocation2 + $0x7c8] sm:$0xff]
    %v3505 = vld [vmem:[#allocation2 + $0x7d0] sm:$0xff]
    %v3506 = vld [vmem:[#allocation2 + $0x7d8] sm:$0xff]
    %v3507 = vld [vmem:[#allocation2 + $0x7e0] sm:$0xff]
    %v3508 = vld [vmem:[#allocation2 + $0x7e8] sm:$0xff]
    %v3509 = vld [vmem:[#allocation2 + $0x7f0] sm:$0xff]
    %v3510 = vld [vmem:[#allocation2 + $0x7f8] sm:$0xff]
    %v3511 = vld [vmem:[#allocation2 + $0x800] sm:$0xff]
    %v3512 = vld [vmem:[#allocation2 + $0x808] sm:$0xff]
    %v3513 = vld [vmem:[#allocation2 + $0x810] sm:$0xff]
    %v3514 = vld [vmem:[#allocation2 + $0x818] sm:$0xff]
    %v3515 = vld [vmem:[#allocation2 + $0x820] sm:$0xff]
    %v3516 = vld [vmem:[#allocation2 + $0x828] sm:$0xff]
    %v3517 = vld [vmem:[#allocation2 + $0x830] sm:$0xff]
    %v3518 = vld [vmem:[#allocation2 + $0x838] sm:$0xff]
    %v3519 = vld [vmem:[#allocation2 + $0x840] sm:$0xff]
    %v3520 = vld [vmem:[#allocation2 + $0x848] sm:$0xff]
    %v3521 = vld [vmem:[#allocation2 + $0x850] sm:$0xff]
    %v3522 = vld [vmem:[#allocation2 + $0x858] sm:$0xff]
    %v3523 = vld [vmem:[#allocation2 + $0x860] sm:$0xff]
    %v3524 = vld [vmem:[#allocation2 + $0x868] sm:$0xff]
    %v3525 = vld [vmem:[#allocation2 + $0x870] sm:$0xff]
    %v3526 = vld [vmem:[#allocation2 + $0x878] sm:$0xff]
    %v3527 = vld [vmem:[#allocation2 + $0x880] sm:$0xff]
    %v3528 = vld [vmem:[#allocation2 + $0x888] sm:$0xff]
    %v3529 = vld [vmem:[#allocation2 + $0x890] sm:$0xff]
    %v3530 = vld [vmem:[#allocation2 + $0x898] sm:$0xff]
    %v3531 = vld [vmem:[#allocation2 + $0x8a0] sm:$0xff]
    %v3532 = vld [vmem:[#allocation2 + $0x8a8] sm:$0xff]
    %v3533 = vld [vmem:[#allocation2 + $0x8b0] sm:$0xff]
    %v3534 = vld [vmem:[#allocation2 + $0x8b8] sm:$0xff]
    %v3535 = vld [vmem:[#allocation2 + $0x8c0] sm:$0xff]
    %v3536 = vld [vmem:[#allocation2 + $0x8c8] sm:$0xff]
    %v3537 = vld [vmem:[#allocation2 + $0x8d0] sm:$0xff]
    %v3538 = vld [vmem:[#allocation2 + $0x8d8] sm:$0xff]
    %v3539 = vld [vmem:[#allocation2 + $0x8e0] sm:$0xff]
    %v3540 = vld [vmem:[#allocation2 + $0x8e8] sm:$0xff]
    %v3541 = vld [vmem:[#allocation2 + $0x8f0] sm:$0xff]
    %v3542 = vld [vmem:[#allocation2 + $0x8f8] sm:$0xff]
    %v3543 = vld [vmem:[#allocation2 + $0x900] sm:$0xff]
    %v3544 = vld [vmem:[#allocation2 + $0x908] sm:$0xff]
    %v3545 = vld [vmem:[#allocation2 + $0x910] sm:$0xff]
    %v3546 = vld [vmem:[#allocation2 + $0x918] sm:$0xff]
    %v3547 = vld [vmem:[#allocation2 + $0x920] sm:$0xff]
    %v3548 = vld [vmem:[#allocation2 + $0x928] sm:$0xff]
    %v3549 = vld [vmem:[#allocation2 + $0x930] sm:$0xff]
    %v3550 = vld [vmem:[#allocation2 + $0x938] sm:$0xff]
    %v3551 = vld [vmem:[#allocation2 + $0x940] sm:$0xff]
    %v3552 = vld [vmem:[#allocation2 + $0x948] sm:$0xff]
    %v3553 = vld [vmem:[#allocation2 + $0x950] sm:$0xff]
    %v3554 = vld [vmem:[#allocation2 + $0x958] sm:$0xff]
    %v3555 = vld [vmem:[#allocation2 + $0x960] sm:$0xff]
    %v3556 = vld [vmem:[#allocation2 + $0x968] sm:$0xff]
    %v3557 = vld [vmem:[#allocation2 + $0x970] sm:$0xff]
    %v3558 = vld [vmem:[#allocation2 + $0x978] sm:$0xff]
    %v3559 = vld [vmem:[#allocation2 + $0x980] sm:$0xff]
    %v3560 = vld [vmem:[#allocation2 + $0x988] sm:$0xff]
    %v3561 = vld [vmem:[#allocation2 + $0x990] sm:$0xff]
    %v3562 = vld [vmem:[#allocation2 + $0x998] sm:$0xff]
    %v3563 = vld [vmem:[#allocation2 + $0x9a0] sm:$0xff]
    %v3564 = vld [vmem:[#allocation2 + $0x9a8] sm:$0xff]
    %v3565 = vld [vmem:[#allocation2 + $0x9b0] sm:$0xff]
    %v3566 = vld [vmem:[#allocation2 + $0x9b8] sm:$0xff]
    %v3567 = vld [vmem:[#allocation2 + $0x9c0] sm:$0xff]
    %v3568 = vld [vmem:[#allocation2 + $0x9c8] sm:$0xff]
    %v3569 = vld [vmem:[#allocation2 + $0x9d0] sm:$0xff]
    %v3570 = vld [vmem:[#allocation2 + $0x9d8] sm:$0xff]
    %v3571 = vld [vmem:[#allocation2 + $0x9e0] sm:$0xff]
    %v3572 = vld [vmem:[#allocation2 + $0x9e8] sm:$0xff]
    %v3573 = vld [vmem:[#allocation2 + $0x9f0] sm:$0xff]
    %v3574 = vld [vmem:[#allocation2 + $0x9f8] sm:$0xff]
    %v3575 = vld [vmem:[#allocation2 + $0xa00] sm:$0xff]
    %v3576 = vld [vmem:[#allocation2 + $0xa08] sm:$0xff]
    %v3577 = vld [vmem:[#allocation2 + $0xa10] sm:$0xff]
    %v3578 = vld [vmem:[#allocation2 + $0xa18] sm:$0xff]
    %v3579 = vld [vmem:[#allocation2 + $0xa20] sm:$0xff]
    %v3580 = vld [vmem:[#allocation2 + $0xa28] sm:$0xff]
    %v3581 = vld [vmem:[#allocation2 + $0xa30] sm:$0xff]
    %v3582 = vld [vmem:[#allocation2 + $0xa38] sm:$0xff]
    %v3583 = vld [vmem:[#allocation2 + $0xa40] sm:$0xff]
    %v3584 = vld [vmem:[#allocation2 + $0xa48] sm:$0xff]
    %v3585 = vld [vmem:[#allocation2 + $0xa50] sm:$0xff]
    %v3586 = vld [vmem:[#allocation2 + $0xa58] sm:$0xff]
    %v3587 = vld [vmem:[#allocation2 + $0xa60] sm:$0xff]
    %v3588 = vld [vmem:[#allocation2 + $0xa68] sm:$0xff]
    %v3589 = vld [vmem:[#allocation2 + $0xa70] sm:$0xff]
    %v3590 = vld [vmem:[#allocation2 + $0xa78] sm:$0xff]
    %v3591 = vld [vmem:[#allocation2 + $0xa80] sm:$0xff]
    %v3592 = vld [vmem:[#allocation2 + $0xa88] sm:$0xff]
    %v3593 = vld [vmem:[#allocation2 + $0xa90] sm:$0xff]
    %v3594 = vld [vmem:[#allocation2 + $0xa98] sm:$0xff]
    %v3595 = vld [vmem:[#allocation2 + $0xaa0] sm:$0xff]
    %v3596 = vld [vmem:[#allocation2 + $0xaa8] sm:$0xff]
    %v3597 = vld [vmem:[#allocation2 + $0xab0] sm:$0xff]
    %v3598 = vld [vmem:[#allocation2 + $0xab8] sm:$0xff]
    %v3599 = vld [vmem:[#allocation2 + $0xac0] sm:$0xff]
    %v3600 = vld [vmem:[#allocation2 + $0xac8] sm:$0xff]
    %v3601 = vld [vmem:[#allocation2 + $0xad0] sm:$0xff]
    %v3602 = vld [vmem:[#allocation2 + $0xad8] sm:$0xff]
    %v3603 = vld [vmem:[#allocation2 + $0xae0] sm:$0xff]
    %v3604 = vld [vmem:[#allocation2 + $0xae8] sm:$0xff]
    %v3605 = vld [vmem:[#allocation2 + $0xaf0] sm:$0xff]
    %v3606 = vld [vmem:[#allocation2 + $0xaf8] sm:$0xff]
    %v3607 = vld [vmem:[#allocation2 + $0xb00] sm:$0xff]
    %v3608 = vld [vmem:[#allocation2 + $0xb08] sm:$0xff]
    %v3609 = vld [vmem:[#allocation2 + $0xb10] sm:$0xff]
    %v3610 = vld [vmem:[#allocation2 + $0xb18] sm:$0xff]
    %v3611 = vld [vmem:[#allocation2 + $0xb20] sm:$0xff]
    %v3612 = vld [vmem:[#allocation2 + $0xb28] sm:$0xff]
    %v3613 = vld [vmem:[#allocation2 + $0xb30] sm:$0xff]
    %v3614 = vld [vmem:[#allocation2 + $0xb38] sm:$0xff]
    %v3615 = vld [vmem:[#allocation2 + $0xb40] sm:$0xff]
    %v3616 = vld [vmem:[#allocation2 + $0xb48] sm:$0xff]
    %v3617 = vld [vmem:[#allocation2 + $0xb50] sm:$0xff]
    %v3618 = vld [vmem:[#allocation2 + $0xb58] sm:$0xff]
    %v3619 = vld [vmem:[#allocation2 + $0xb60] sm:$0xff]
    %v3620 = vld [vmem:[#allocation2 + $0xb68] sm:$0xff]
    %v3621 = vld [vmem:[#allocation2 + $0xb70] sm:$0xff]
    %v3622 = vld [vmem:[#allocation2 + $0xb78] sm:$0xff]
    %v3623 = vld [vmem:[#allocation2 + $0xb80] sm:$0xff]
    %v3624 = vld [vmem:[#allocation2 + $0xb88] sm:$0xff]
    %v3625 = vld [vmem:[#allocation2 + $0xb90] sm:$0xff]
    %v3626 = vld [vmem:[#allocation2 + $0xb98] sm:$0xff]
    %v3627 = vld [vmem:[#allocation2 + $0xba0] sm:$0xff]
    %v3628 = vld [vmem:[#allocation2 + $0xba8] sm:$0xff]
    %v3629 = vld [vmem:[#allocation2 + $0xbb0] sm:$0xff]
    %v3630 = vld [vmem:[#allocation2 + $0xbb8] sm:$0xff]
    %v3631 = vld [vmem:[#allocation2 + $0xbc0] sm:$0xff]
    %v3632 = vld [vmem:[#allocation2 + $0xbc8] sm:$0xff]
    %v3633 = vld [vmem:[#allocation2 + $0xbd0] sm:$0xff]
    %v3634 = vld [vmem:[#allocation2 + $0xbd8] sm:$0xff]
    %v3635 = vld [vmem:[#allocation2 + $0xbe0] sm:$0xff]
    %v3636 = vld [vmem:[#allocation2 + $0xbe8] sm:$0xff]
    %v3637 = vld [vmem:[#allocation2 + $0xbf0] sm:$0xff]
    %v3638 = vld [vmem:[#allocation2 + $0xbf8] sm:$0xff]
    %v3639 = vld [vmem:[#allocation2 + $0xc00] sm:$0xff]
    %v3640 = vld [vmem:[#allocation2 + $0xc08] sm:$0xff]
    %v3641 = vld [vmem:[#allocation2 + $0xc10] sm:$0xff]
    %v3642 = vld [vmem:[#allocation2 + $0xc18] sm:$0xff]
    %v3643 = vld [vmem:[#allocation2 + $0xc20] sm:$0xff]
    %v3644 = vld [vmem:[#allocation2 + $0xc28] sm:$0xff]
    %v3645 = vld [vmem:[#allocation2 + $0xc30] sm:$0xff]
    %v3646 = vld [vmem:[#allocation2 + $0xc38] sm:$0xff]
    %v3647 = vld [vmem:[#allocation2 + $0xc40] sm:$0xff]
    %v3648 = vld [vmem:[#allocation2 + $0xc48] sm:$0xff]
    %v3649 = vld [vmem:[#allocation2 + $0xc50] sm:$0xff]
    %v3650 = vld [vmem:[#allocation2 + $0xc58] sm:$0xff]
    %v3651 = vld [vmem:[#allocation2 + $0xc60] sm:$0xff]
    %v3652 = vld [vmem:[#allocation2 + $0xc68] sm:$0xff]
    %v3653 = vld [vmem:[#allocation2 + $0xc70] sm:$0xff]
    %v3654 = vld [vmem:[#allocation2 + $0xc78] sm:$0xff]
    %v3655 = vld [vmem:[#allocation2 + $0xc80] sm:$0xff]
    %v3656 = vld [vmem:[#allocation2 + $0xc88] sm:$0xff]
    %v3657 = vld [vmem:[#allocation2 + $0xc90] sm:$0xff]
    %v3658 = vld [vmem:[#allocation2 + $0xc98] sm:$0xff]
    %v3659 = vld [vmem:[#allocation2 + $0xca0] sm:$0xff]
    %v3660 = vld [vmem:[#allocation2 + $0xca8] sm:$0xff]
    %v3661 = vld [vmem:[#allocation2 + $0xcb0] sm:$0xff]
    %v3662 = vld [vmem:[#allocation2 + $0xcb8] sm:$0xff]
    %v3663 = vld [vmem:[#allocation2 + $0xcc0] sm:$0xff]
    %v3664 = vld [vmem:[#allocation2 + $0xcc8] sm:$0xff]
    %v3665 = vld [vmem:[#allocation2 + $0xcd0] sm:$0xff]
    %v3666 = vld [vmem:[#allocation2 + $0xcd8] sm:$0xff]
    %v3667 = vld [vmem:[#allocation2 + $0xce0] sm:$0xff]
    %v3668 = vld [vmem:[#allocation2 + $0xce8] sm:$0xff]
    %v3669 = vld [vmem:[#allocation2 + $0xcf0] sm:$0xff]
    %v3670 = vld [vmem:[#allocation2 + $0xcf8] sm:$0xff]
    %v3671 = vld [vmem:[#allocation2 + $0xd00] sm:$0xff]
    %v3672 = vld [vmem:[#allocation2 + $0xd08] sm:$0xff]
    %v3673 = vld [vmem:[#allocation2 + $0xd10] sm:$0xff]
    %v3674 = vld [vmem:[#allocation2 + $0xd18] sm:$0xff]
    %v3675 = vld [vmem:[#allocation2 + $0xd20] sm:$0xff]
    %v3676 = vld [vmem:[#allocation2 + $0xd28] sm:$0xff]
    %v3677 = vld [vmem:[#allocation2 + $0xd30] sm:$0xff]
    %v3678 = vld [vmem:[#allocation2 + $0xd38] sm:$0xff]
    %v3679 = vld [vmem:[#allocation2 + $0xd40] sm:$0xff]
    %v3680 = vld [vmem:[#allocation2 + $0xd48] sm:$0xff]
    %v3681 = vld [vmem:[#allocation2 + $0xd50] sm:$0xff]
    %v3682 = vld [vmem:[#allocation2 + $0xd58] sm:$0xff]
    %v3683 = vld [vmem:[#allocation2 + $0xd60] sm:$0xff]
    %v3684 = vld [vmem:[#allocation2 + $0xd68] sm:$0xff]
    %v3685 = vld [vmem:[#allocation2 + $0xd70] sm:$0xff]
    %v3686 = vld [vmem:[#allocation2 + $0xd78] sm:$0xff]
    %v3687 = vld [vmem:[#allocation2 + $0xd80] sm:$0xff]
    %v3688 = vld [vmem:[#allocation2 + $0xd88] sm:$0xff]
    %v3689 = vld [vmem:[#allocation2 + $0xd90] sm:$0xff]
    %v3690 = vld [vmem:[#allocation2 + $0xd98] sm:$0xff]
    %v3691 = vld [vmem:[#allocation2 + $0xda0] sm:$0xff]
    %v3692 = vld [vmem:[#allocation2 + $0xda8] sm:$0xff]
    %v3693 = vld [vmem:[#allocation2 + $0xdb0] sm:$0xff]
    %v3694 = vld [vmem:[#allocation2 + $0xdb8] sm:$0xff]
    %v3695 = vld [vmem:[#allocation2 + $0xdc0] sm:$0xff]
    %v3696 = vld [vmem:[#allocation2 + $0xdc8] sm:$0xff]
    %v3697 = vld [vmem:[#allocation2 + $0xdd0] sm:$0xff]
    %v3698 = vld [vmem:[#allocation2 + $0xdd8] sm:$0xff]
    %v3699 = vld [vmem:[#allocation2 + $0xde0] sm:$0xff]
    %v3700 = vld [vmem:[#allocation2 + $0xde8] sm:$0xff]
    %v3701 = vld [vmem:[#allocation2 + $0xdf0] sm:$0xff]
    %v3702 = vld [vmem:[#allocation2 + $0xdf8] sm:$0xff]
    %v3703 = vld [vmem:[#allocation6 + $0x10] sm:$0xf]
    %v3705 = vlaneseq
    %v3706 = vshrl.u32 %v3705, 7
    %v3707 = vsub.s32 0, %v3706
    %v3708 = vrot.slane %v3703, %v3707
    %v3709 = vlaneseq
    %v3710 = vshrl.u32 %v3709, 7
    %v3711 = vsub.s32 1, %v3710
    %v3712 = vrot.slane %v3703, %v3711
    %v3713 = vlaneseq
    %v3714 = vshrl.u32 %v3713, 7
    %v3715 = vsub.s32 2, %v3714
    %v3716 = vrot.slane %v3703, %v3715
    %v3717 = vlaneseq
    %v3718 = vshrl.u32 %v3717, 7
    %v3719 = vsub.s32 3, %v3718
    %v3720 = vrot.slane %v3703, %v3719
    %v3981 = vunpack.c.l.b16 %v3447
    %v3982 = vunpack.c.h.b16 %v3447
    %v3983 = vunpack.c.l.b16 %v3448
    %v3984 = vunpack.c.h.b16 %v3448
    %v3985 = vunpack.c.l.b16 %v3449
    %v3986 = vunpack.c.h.b16 %v3449
    %v3987 = vunpack.c.l.b16 %v3450
    %v3988 = vunpack.c.h.b16 %v3450
    %v3989 = vunpack.c.l.b16 %v3451
    %v3990 = vunpack.c.h.b16 %v3451
    %v3991 = vunpack.c.l.b16 %v3452
    %v3992 = vunpack.c.h.b16 %v3452
    %v3993 = vunpack.c.l.b16 %v3453
    %v3994 = vunpack.c.h.b16 %v3453
    %v3995 = vunpack.c.l.b16 %v3454
    %v3996 = vunpack.c.h.b16 %v3454
    %v3997 = vunpack.c.l.b16 %v3455
    %v3998 = vunpack.c.h.b16 %v3455
    %v3999 = vunpack.c.l.b16 %v3456
    %v4000 = vunpack.c.h.b16 %v3456
    %v4001 = vunpack.c.l.b16 %v3457
    %v4002 = vunpack.c.h.b16 %v3457
    %v4003 = vunpack.c.l.b16 %v3458
    %v4004 = vunpack.c.h.b16 %v3458
    %v4005 = vunpack.c.l.b16 %v3459
    %v4006 = vunpack.c.h.b16 %v3459
    %v4007 = vunpack.c.l.b16 %v3460
    %v4008 = vunpack.c.h.b16 %v3460
    %v4009 = vunpack.c.l.b16 %v3461
    %v4010 = vunpack.c.h.b16 %v3461
    %v4011 = vunpack.c.l.b16 %v3462
    %v4012 = vunpack.c.h.b16 %v3462
    %v4013 = vunpack.c.l.b16 %v3463
    %v4014 = vunpack.c.h.b16 %v3463
    %v4015 = vunpack.c.l.b16 %v3464
    %v4016 = vunpack.c.h.b16 %v3464
    %v4017 = vunpack.c.l.b16 %v3465
    %v4018 = vunpack.c.h.b16 %v3465
    %v4019 = vunpack.c.l.b16 %v3466
    %v4020 = vunpack.c.h.b16 %v3466
    %v4021 = vunpack.c.l.b16 %v3467
    %v4022 = vunpack.c.h.b16 %v3467
    %v4023 = vunpack.c.l.b16 %v3468
    %v4024 = vunpack.c.h.b16 %v3468
    %v4025 = vunpack.c.l.b16 %v3469
    %v4026 = vunpack.c.h.b16 %v3469
    %v4027 = vunpack.c.l.b16 %v3470
    %v4028 = vunpack.c.h.b16 %v3470
    %v4029 = vunpack.c.l.b16 %v3471
    %v4030 = vunpack.c.h.b16 %v3471
    %v4031 = vunpack.c.l.b16 %v3472
    %v4032 = vunpack.c.h.b16 %v3472
    %v4033 = vunpack.c.l.b16 %v3473
    %v4034 = vunpack.c.h.b16 %v3473
    %v4035 = vunpack.c.l.b16 %v3474
    %v4036 = vunpack.c.h.b16 %v3474
    %v4037 = vunpack.c.l.b16 %v3475
    %v4038 = vunpack.c.h.b16 %v3475
    %v4039 = vunpack.c.l.b16 %v3476
    %v4040 = vunpack.c.h.b16 %v3476
    %v4041 = vunpack.c.l.b16 %v3477
    %v4042 = vunpack.c.h.b16 %v3477
    %v4043 = vunpack.c.l.b16 %v3478
    %v4044 = vunpack.c.h.b16 %v3478
    %v4045 = vunpack.c.l.b16 %v3479
    %v4046 = vunpack.c.h.b16 %v3479
    %v4047 = vunpack.c.l.b16 %v3480
    %v4048 = vunpack.c.h.b16 %v3480
    %v4049 = vunpack.c.l.b16 %v3481
    %v4050 = vunpack.c.h.b16 %v3481
    %v4051 = vunpack.c.l.b16 %v3482
    %v4052 = vunpack.c.h.b16 %v3482
    %v4053 = vunpack.c.l.b16 %v3483
    %v4054 = vunpack.c.h.b16 %v3483
    %v4055 = vunpack.c.l.b16 %v3484
    %v4056 = vunpack.c.h.b16 %v3484
    %v4057 = vunpack.c.l.b16 %v3485
    %v4058 = vunpack.c.h.b16 %v3485
    %v4059 = vunpack.c.l.b16 %v3486
    %v4060 = vunpack.c.h.b16 %v3486
    %v4061 = vunpack.c.l.b16 %v3487
    %v4062 = vunpack.c.h.b16 %v3487
    %v4063 = vunpack.c.l.b16 %v3488
    %v4064 = vunpack.c.h.b16 %v3488
    %v4065 = vunpack.c.l.b16 %v3489
    %v4066 = vunpack.c.h.b16 %v3489
    %v4067 = vunpack.c.l.b16 %v3490
    %v4068 = vunpack.c.h.b16 %v3490
    %v4069 = vunpack.c.l.b16 %v3491
    %v4070 = vunpack.c.h.b16 %v3491
    %v4071 = vunpack.c.l.b16 %v3492
    %v4072 = vunpack.c.h.b16 %v3492
    %v4073 = vunpack.c.l.b16 %v3493
    %v4074 = vunpack.c.h.b16 %v3493
    %v4075 = vunpack.c.l.b16 %v3494
    %v4076 = vunpack.c.h.b16 %v3494
    %v4077 = vunpack.c.l.b16 %v3495
    %v4078 = vunpack.c.h.b16 %v3495
    %v4079 = vunpack.c.l.b16 %v3496
    %v4080 = vunpack.c.h.b16 %v3496
    %v4081 = vunpack.c.l.b16 %v3497
    %v4082 = vunpack.c.h.b16 %v3497
    %v4083 = vunpack.c.l.b16 %v3498
    %v4084 = vunpack.c.h.b16 %v3498
    %v4085 = vunpack.c.l.b16 %v3499
    %v4086 = vunpack.c.h.b16 %v3499
    %v4087 = vunpack.c.l.b16 %v3500
    %v4088 = vunpack.c.h.b16 %v3500
    %v4089 = vunpack.c.l.b16 %v3501
    %v4090 = vunpack.c.h.b16 %v3501
    %v4091 = vunpack.c.l.b16 %v3502
    %v4092 = vunpack.c.h.b16 %v3502
    %v4093 = vunpack.c.l.b16 %v3503
    %v4094 = vunpack.c.h.b16 %v3503
    %v4095 = vunpack.c.l.b16 %v3504
    %v4096 = vunpack.c.h.b16 %v3504
    %v4097 = vunpack.c.l.b16 %v3505
    %v4098 = vunpack.c.h.b16 %v3505
    %v4099 = vunpack.c.l.b16 %v3506
    %v4100 = vunpack.c.h.b16 %v3506
    %v4101 = vunpack.c.l.b16 %v3507
    %v4102 = vunpack.c.h.b16 %v3507
    %v4103 = vunpack.c.l.b16 %v3508
    %v4104 = vunpack.c.h.b16 %v3508
    %v4105 = vunpack.c.l.b16 %v3509
    %v4106 = vunpack.c.h.b16 %v3509
    %v4107 = vunpack.c.l.b16 %v3510
    %v4108 = vunpack.c.h.b16 %v3510
    %v4109 = vunpack.c.l.b16 %v3511
    %v4110 = vunpack.c.h.b16 %v3511
    %v4111 = vunpack.c.l.b16 %v3512
    %v4112 = vunpack.c.h.b16 %v3512
    %v4113 = vunpack.c.l.b16 %v3513
    %v4114 = vunpack.c.h.b16 %v3513
    %v4115 = vunpack.c.l.b16 %v3514
    %v4116 = vunpack.c.h.b16 %v3514
    %v4117 = vunpack.c.l.b16 %v3515
    %v4118 = vunpack.c.h.b16 %v3515
    %v4119 = vunpack.c.l.b16 %v3516
    %v4120 = vunpack.c.h.b16 %v3516
    %v4121 = vunpack.c.l.b16 %v3517
    %v4122 = vunpack.c.h.b16 %v3517
    %v4123 = vunpack.c.l.b16 %v3518
    %v4124 = vunpack.c.h.b16 %v3518
    %v4125 = vunpack.c.l.b16 %v3519
    %v4126 = vunpack.c.h.b16 %v3519
    %v4127 = vunpack.c.l.b16 %v3520
    %v4128 = vunpack.c.h.b16 %v3520
    %v4129 = vunpack.c.l.b16 %v3521
    %v4130 = vunpack.c.h.b16 %v3521
    %v4131 = vunpack.c.l.b16 %v3522
    %v4132 = vunpack.c.h.b16 %v3522
    %v4133 = vunpack.c.l.b16 %v3523
    %v4134 = vunpack.c.h.b16 %v3523
    %v4135 = vunpack.c.l.b16 %v3524
    %v4136 = vunpack.c.h.b16 %v3524
    %v4137 = vunpack.c.l.b16 %v3525
    %v4138 = vunpack.c.h.b16 %v3525
    %v4139 = vunpack.c.l.b16 %v3526
    %v4140 = vunpack.c.h.b16 %v3526
    %v4141 = vunpack.c.l.b16 %v3527
    %v4142 = vunpack.c.h.b16 %v3527
    %v4143 = vunpack.c.l.b16 %v3528
    %v4144 = vunpack.c.h.b16 %v3528
    %v4145 = vunpack.c.l.b16 %v3529
    %v4146 = vunpack.c.h.b16 %v3529
    %v4147 = vunpack.c.l.b16 %v3530
    %v4148 = vunpack.c.h.b16 %v3530
    %v4149 = vunpack.c.l.b16 %v3531
    %v4150 = vunpack.c.h.b16 %v3531
    %v4151 = vunpack.c.l.b16 %v3532
    %v4152 = vunpack.c.h.b16 %v3532
    %v4153 = vunpack.c.l.b16 %v3533
    %v4154 = vunpack.c.h.b16 %v3533
    %v4155 = vunpack.c.l.b16 %v3534
    %v4156 = vunpack.c.h.b16 %v3534
    %v4157 = vunpack.c.l.b16 %v3535
    %v4158 = vunpack.c.h.b16 %v3535
    %v4159 = vunpack.c.l.b16 %v3536
    %v4160 = vunpack.c.h.b16 %v3536
    %v4161 = vunpack.c.l.b16 %v3537
    %v4162 = vunpack.c.h.b16 %v3537
    %v4163 = vunpack.c.l.b16 %v3538
    %v4164 = vunpack.c.h.b16 %v3538
    %v4165 = vunpack.c.l.b16 %v3539
    %v4166 = vunpack.c.h.b16 %v3539
    %v4167 = vunpack.c.l.b16 %v3540
    %v4168 = vunpack.c.h.b16 %v3540
    %v4169 = vunpack.c.l.b16 %v3541
    %v4170 = vunpack.c.h.b16 %v3541
    %v4171 = vunpack.c.l.b16 %v3542
    %v4172 = vunpack.c.h.b16 %v3542
    %v4173 = vunpack.c.l.b16 %v3543
    %v4174 = vunpack.c.h.b16 %v3543
    %v4175 = vunpack.c.l.b16 %v3544
    %v4176 = vunpack.c.h.b16 %v3544
    %v4177 = vunpack.c.l.b16 %v3545
    %v4178 = vunpack.c.h.b16 %v3545
    %v4179 = vunpack.c.l.b16 %v3546
    %v4180 = vunpack.c.h.b16 %v3546
    %v4181 = vunpack.c.l.b16 %v3547
    %v4182 = vunpack.c.h.b16 %v3547
    %v4183 = vunpack.c.l.b16 %v3548
    %v4184 = vunpack.c.h.b16 %v3548
    %v4185 = vunpack.c.l.b16 %v3549
    %v4186 = vunpack.c.h.b16 %v3549
    %v4187 = vunpack.c.l.b16 %v3550
    %v4188 = vunpack.c.h.b16 %v3550
    %v4189 = vunpack.c.l.b16 %v3551
    %v4190 = vunpack.c.h.b16 %v3551
    %v4191 = vunpack.c.l.b16 %v3552
    %v4192 = vunpack.c.h.b16 %v3552
    %v4193 = vunpack.c.l.b16 %v3553
    %v4194 = vunpack.c.h.b16 %v3553
    %v4195 = vunpack.c.l.b16 %v3554
    %v4196 = vunpack.c.h.b16 %v3554
    %v4197 = vunpack.c.l.b16 %v3555
    %v4198 = vunpack.c.h.b16 %v3555
    %v4199 = vunpack.c.l.b16 %v3556
    %v4200 = vunpack.c.h.b16 %v3556
    %v4201 = vunpack.c.l.b16 %v3557
    %v4202 = vunpack.c.h.b16 %v3557
    %v4203 = vunpack.c.l.b16 %v3558
    %v4204 = vunpack.c.h.b16 %v3558
    %v4205 = vunpack.c.l.b16 %v3559
    %v4206 = vunpack.c.h.b16 %v3559
    %v4207 = vunpack.c.l.b16 %v3560
    %v4208 = vunpack.c.h.b16 %v3560
    %v4209 = vunpack.c.l.b16 %v3561
    %v4210 = vunpack.c.h.b16 %v3561
    %v4211 = vunpack.c.l.b16 %v3562
    %v4212 = vunpack.c.h.b16 %v3562
    %v4213 = vunpack.c.l.b16 %v3563
    %v4214 = vunpack.c.h.b16 %v3563
    %v4215 = vunpack.c.l.b16 %v3564
    %v4216 = vunpack.c.h.b16 %v3564
    %v4217 = vunpack.c.l.b16 %v3565
    %v4218 = vunpack.c.h.b16 %v3565
    %v4219 = vunpack.c.l.b16 %v3566
    %v4220 = vunpack.c.h.b16 %v3566
    %v4221 = vunpack.c.l.b16 %v3567
    %v4222 = vunpack.c.h.b16 %v3567
    %v4223 = vunpack.c.l.b16 %v3568
    %v4224 = vunpack.c.h.b16 %v3568
    %v4225 = vunpack.c.l.b16 %v3569
    %v4226 = vunpack.c.h.b16 %v3569
    %v4227 = vunpack.c.l.b16 %v3570
    %v4228 = vunpack.c.h.b16 %v3570
    %v4229 = vunpack.c.l.b16 %v3571
    %v4230 = vunpack.c.h.b16 %v3571
    %v4231 = vunpack.c.l.b16 %v3572
    %v4232 = vunpack.c.h.b16 %v3572
    %v4233 = vunpack.c.l.b16 %v3573
    %v4234 = vunpack.c.h.b16 %v3573
    %v4235 = vunpack.c.l.b16 %v3574
    %v4236 = vunpack.c.h.b16 %v3574
    %v4237 = vunpack.c.l.b16 %v3575
    %v4238 = vunpack.c.h.b16 %v3575
    %v4239 = vunpack.c.l.b16 %v3576
    %v4240 = vunpack.c.h.b16 %v3576
    %v4241 = vunpack.c.l.b16 %v3577
    %v4242 = vunpack.c.h.b16 %v3577
    %v4243 = vunpack.c.l.b16 %v3578
    %v4244 = vunpack.c.h.b16 %v3578
    %v4245 = vunpack.c.l.b16 %v3579
    %v4246 = vunpack.c.h.b16 %v3579
    %v4247 = vunpack.c.l.b16 %v3580
    %v4248 = vunpack.c.h.b16 %v3580
    %v4249 = vunpack.c.l.b16 %v3581
    %v4250 = vunpack.c.h.b16 %v3581
    %v4251 = vunpack.c.l.b16 %v3582
    %v4252 = vunpack.c.h.b16 %v3582
    %v4253 = vunpack.c.l.b16 %v3583
    %v4254 = vunpack.c.h.b16 %v3583
    %v4255 = vunpack.c.l.b16 %v3584
    %v4256 = vunpack.c.h.b16 %v3584
    %v4257 = vunpack.c.l.b16 %v3585
    %v4258 = vunpack.c.h.b16 %v3585
    %v4259 = vunpack.c.l.b16 %v3586
    %v4260 = vunpack.c.h.b16 %v3586
    %v4261 = vunpack.c.l.b16 %v3587
    %v4262 = vunpack.c.h.b16 %v3587
    %v4263 = vunpack.c.l.b16 %v3588
    %v4264 = vunpack.c.h.b16 %v3588
    %v4265 = vunpack.c.l.b16 %v3589
    %v4266 = vunpack.c.h.b16 %v3589
    %v4267 = vunpack.c.l.b16 %v3590
    %v4268 = vunpack.c.h.b16 %v3590
    %v4269 = vunpack.c.l.b16 %v3591
    %v4270 = vunpack.c.h.b16 %v3591
    %v4271 = vunpack.c.l.b16 %v3592
    %v4272 = vunpack.c.h.b16 %v3592
    %v4273 = vunpack.c.l.b16 %v3593
    %v4274 = vunpack.c.h.b16 %v3593
    %v4275 = vunpack.c.l.b16 %v3594
    %v4276 = vunpack.c.h.b16 %v3594
    %v4277 = vunpack.c.l.b16 %v3595
    %v4278 = vunpack.c.h.b16 %v3595
    %v4279 = vunpack.c.l.b16 %v3596
    %v4280 = vunpack.c.h.b16 %v3596
    %v4281 = vunpack.c.l.b16 %v3597
    %v4282 = vunpack.c.h.b16 %v3597
    %v4283 = vunpack.c.l.b16 %v3598
    %v4284 = vunpack.c.h.b16 %v3598
    %v4285 = vunpack.c.l.b16 %v3599
    %v4286 = vunpack.c.h.b16 %v3599
    %v4287 = vunpack.c.l.b16 %v3600
    %v4288 = vunpack.c.h.b16 %v3600
    %v4289 = vunpack.c.l.b16 %v3601
    %v4290 = vunpack.c.h.b16 %v3601
    %v4291 = vunpack.c.l.b16 %v3602
    %v4292 = vunpack.c.h.b16 %v3602
    %v4293 = vunpack.c.l.b16 %v3603
    %v4294 = vunpack.c.h.b16 %v3603
    %v4295 = vunpack.c.l.b16 %v3604
    %v4296 = vunpack.c.h.b16 %v3604
    %v4297 = vunpack.c.l.b16 %v3605
    %v4298 = vunpack.c.h.b16 %v3605
    %v4299 = vunpack.c.l.b16 %v3606
    %v4300 = vunpack.c.h.b16 %v3606
    %v4301 = vunpack.c.l.b16 %v3607
    %v4302 = vunpack.c.h.b16 %v3607
    %v4303 = vunpack.c.l.b16 %v3608
    %v4304 = vunpack.c.h.b16 %v3608
    %v4305 = vunpack.c.l.b16 %v3609
    %v4306 = vunpack.c.h.b16 %v3609
    %v4307 = vunpack.c.l.b16 %v3610
    %v4308 = vunpack.c.h.b16 %v3610
    %v4309 = vunpack.c.l.b16 %v3611
    %v4310 = vunpack.c.h.b16 %v3611
    %v4311 = vunpack.c.l.b16 %v3612
    %v4312 = vunpack.c.h.b16 %v3612
    %v4313 = vunpack.c.l.b16 %v3613
    %v4314 = vunpack.c.h.b16 %v3613
    %v4315 = vunpack.c.l.b16 %v3614
    %v4316 = vunpack.c.h.b16 %v3614
    %v4317 = vunpack.c.l.b16 %v3615
    %v4318 = vunpack.c.h.b16 %v3615
    %v4319 = vunpack.c.l.b16 %v3616
    %v4320 = vunpack.c.h.b16 %v3616
    %v4321 = vunpack.c.l.b16 %v3617
    %v4322 = vunpack.c.h.b16 %v3617
    %v4323 = vunpack.c.l.b16 %v3618
    %v4324 = vunpack.c.h.b16 %v3618
    %v4325 = vunpack.c.l.b16 %v3619
    %v4326 = vunpack.c.h.b16 %v3619
    %v4327 = vunpack.c.l.b16 %v3620
    %v4328 = vunpack.c.h.b16 %v3620
    %v4329 = vunpack.c.l.b16 %v3621
    %v4330 = vunpack.c.h.b16 %v3621
    %v4331 = vunpack.c.l.b16 %v3622
    %v4332 = vunpack.c.h.b16 %v3622
    %v4333 = vunpack.c.l.b16 %v3623
    %v4334 = vunpack.c.h.b16 %v3623
    %v4335 = vunpack.c.l.b16 %v3624
    %v4336 = vunpack.c.h.b16 %v3624
    %v4337 = vunpack.c.l.b16 %v3625
    %v4338 = vunpack.c.h.b16 %v3625
    %v4339 = vunpack.c.l.b16 %v3626
    %v4340 = vunpack.c.h.b16 %v3626
    %v4341 = vunpack.c.l.b16 %v3627
    %v4342 = vunpack.c.h.b16 %v3627
    %v4343 = vunpack.c.l.b16 %v3628
    %v4344 = vunpack.c.h.b16 %v3628
    %v4345 = vunpack.c.l.b16 %v3629
    %v4346 = vunpack.c.h.b16 %v3629
    %v4347 = vunpack.c.l.b16 %v3630
    %v4348 = vunpack.c.h.b16 %v3630
    %v4349 = vunpack.c.l.b16 %v3631
    %v4350 = vunpack.c.h.b16 %v3631
    %v4351 = vunpack.c.l.b16 %v3632
    %v4352 = vunpack.c.h.b16 %v3632
    %v4353 = vunpack.c.l.b16 %v3633
    %v4354 = vunpack.c.h.b16 %v3633
    %v4355 = vunpack.c.l.b16 %v3634
    %v4356 = vunpack.c.h.b16 %v3634
    %v4357 = vunpack.c.l.b16 %v3635
    %v4358 = vunpack.c.h.b16 %v3635
    %v4359 = vunpack.c.l.b16 %v3636
    %v4360 = vunpack.c.h.b16 %v3636
    %v4361 = vunpack.c.l.b16 %v3637
    %v4362 = vunpack.c.h.b16 %v3637
    %v4363 = vunpack.c.l.b16 %v3638
    %v4364 = vunpack.c.h.b16 %v3638
    %v4365 = vunpack.c.l.b16 %v3639
    %v4366 = vunpack.c.h.b16 %v3639
    %v4367 = vunpack.c.l.b16 %v3640
    %v4368 = vunpack.c.h.b16 %v3640
    %v4369 = vunpack.c.l.b16 %v3641
    %v4370 = vunpack.c.h.b16 %v3641
    %v4371 = vunpack.c.l.b16 %v3642
    %v4372 = vunpack.c.h.b16 %v3642
    %v4373 = vunpack.c.l.b16 %v3643
    %v4374 = vunpack.c.h.b16 %v3643
    %v4375 = vunpack.c.l.b16 %v3644
    %v4376 = vunpack.c.h.b16 %v3644
    %v4377 = vunpack.c.l.b16 %v3645
    %v4378 = vunpack.c.h.b16 %v3645
    %v4379 = vunpack.c.l.b16 %v3646
    %v4380 = vunpack.c.h.b16 %v3646
    %v4381 = vunpack.c.l.b16 %v3647
    %v4382 = vunpack.c.h.b16 %v3647
    %v4383 = vunpack.c.l.b16 %v3648
    %v4384 = vunpack.c.h.b16 %v3648
    %v4385 = vunpack.c.l.b16 %v3649
    %v4386 = vunpack.c.h.b16 %v3649
    %v4387 = vunpack.c.l.b16 %v3650
    %v4388 = vunpack.c.h.b16 %v3650
    %v4389 = vunpack.c.l.b16 %v3651
    %v4390 = vunpack.c.h.b16 %v3651
    %v4391 = vunpack.c.l.b16 %v3652
    %v4392 = vunpack.c.h.b16 %v3652
    %v4393 = vunpack.c.l.b16 %v3653
    %v4394 = vunpack.c.h.b16 %v3653
    %v4395 = vunpack.c.l.b16 %v3654
    %v4396 = vunpack.c.h.b16 %v3654
    %v4397 = vunpack.c.l.b16 %v3655
    %v4398 = vunpack.c.h.b16 %v3655
    %v4399 = vunpack.c.l.b16 %v3656
    %v4400 = vunpack.c.h.b16 %v3656
    %v4401 = vunpack.c.l.b16 %v3657
    %v4402 = vunpack.c.h.b16 %v3657
    %v4403 = vunpack.c.l.b16 %v3658
    %v4404 = vunpack.c.h.b16 %v3658
    %v4405 = vunpack.c.l.b16 %v3659
    %v4406 = vunpack.c.h.b16 %v3659
    %v4407 = vunpack.c.l.b16 %v3660
    %v4408 = vunpack.c.h.b16 %v3660
    %v4409 = vunpack.c.l.b16 %v3661
    %v4410 = vunpack.c.h.b16 %v3661
    %v4411 = vunpack.c.l.b16 %v3662
    %v4412 = vunpack.c.h.b16 %v3662
    %v4413 = vunpack.c.l.b16 %v3663
    %v4414 = vunpack.c.h.b16 %v3663
    %v4415 = vunpack.c.l.b16 %v3664
    %v4416 = vunpack.c.h.b16 %v3664
    %v4417 = vunpack.c.l.b16 %v3665
    %v4418 = vunpack.c.h.b16 %v3665
    %v4419 = vunpack.c.l.b16 %v3666
    %v4420 = vunpack.c.h.b16 %v3666
    %v4421 = vunpack.c.l.b16 %v3667
    %v4422 = vunpack.c.h.b16 %v3667
    %v4423 = vunpack.c.l.b16 %v3668
    %v4424 = vunpack.c.h.b16 %v3668
    %v4425 = vunpack.c.l.b16 %v3669
    %v4426 = vunpack.c.h.b16 %v3669
    %v4427 = vunpack.c.l.b16 %v3670
    %v4428 = vunpack.c.h.b16 %v3670
    %v4429 = vunpack.c.l.b16 %v3671
    %v4430 = vunpack.c.h.b16 %v3671
    %v4431 = vunpack.c.l.b16 %v3672
    %v4432 = vunpack.c.h.b16 %v3672
    %v4433 = vunpack.c.l.b16 %v3673
    %v4434 = vunpack.c.h.b16 %v3673
    %v4435 = vunpack.c.l.b16 %v3674
    %v4436 = vunpack.c.h.b16 %v3674
    %v4437 = vunpack.c.l.b16 %v3675
    %v4438 = vunpack.c.h.b16 %v3675
    %v4439 = vunpack.c.l.b16 %v3676
    %v4440 = vunpack.c.h.b16 %v3676
    %v4441 = vunpack.c.l.b16 %v3677
    %v4442 = vunpack.c.h.b16 %v3677
    %v4443 = vunpack.c.l.b16 %v3678
    %v4444 = vunpack.c.h.b16 %v3678
    %v4445 = vunpack.c.l.b16 %v3679
    %v4446 = vunpack.c.h.b16 %v3679
    %v4447 = vunpack.c.l.b16 %v3680
    %v4448 = vunpack.c.h.b16 %v3680
    %v4449 = vunpack.c.l.b16 %v3681
    %v4450 = vunpack.c.h.b16 %v3681
    %v4451 = vunpack.c.l.b16 %v3682
    %v4452 = vunpack.c.h.b16 %v3682
    %v4453 = vunpack.c.l.b16 %v3683
    %v4454 = vunpack.c.h.b16 %v3683
    %v4455 = vunpack.c.l.b16 %v3684
    %v4456 = vunpack.c.h.b16 %v3684
    %v4457 = vunpack.c.l.b16 %v3685
    %v4458 = vunpack.c.h.b16 %v3685
    %v4459 = vunpack.c.l.b16 %v3686
    %v4460 = vunpack.c.h.b16 %v3686
    %v4461 = vunpack.c.l.b16 %v3687
    %v4462 = vunpack.c.h.b16 %v3687
    %v4463 = vunpack.c.l.b16 %v3688
    %v4464 = vunpack.c.h.b16 %v3688
    %v4465 = vunpack.c.l.b16 %v3689
    %v4466 = vunpack.c.h.b16 %v3689
    %v4467 = vunpack.c.l.b16 %v3690
    %v4468 = vunpack.c.h.b16 %v3690
    %v4469 = vunpack.c.l.b16 %v3691
    %v4470 = vunpack.c.h.b16 %v3691
    %v4471 = vunpack.c.l.b16 %v3692
    %v4472 = vunpack.c.h.b16 %v3692
    %v4473 = vunpack.c.l.b16 %v3693
    %v4474 = vunpack.c.h.b16 %v3693
    %v4475 = vunpack.c.l.b16 %v3694
    %v4476 = vunpack.c.h.b16 %v3694
    %v4477 = vunpack.c.l.b16 %v3695
    %v4478 = vunpack.c.h.b16 %v3695
    %v4479 = vunpack.c.l.b16 %v3696
    %v4480 = vunpack.c.h.b16 %v3696
    %v4481 = vunpack.c.l.b16 %v3697
    %v4482 = vunpack.c.h.b16 %v3697
    %v4483 = vunpack.c.l.b16 %v3698
    %v4484 = vunpack.c.h.b16 %v3698
    %v4485 = vunpack.c.l.b16 %v3699
    %v4486 = vunpack.c.h.b16 %v3699
    %v4487 = vunpack.c.l.b16 %v3700
    %v4488 = vunpack.c.h.b16 %v3700
    %v4489 = vunpack.c.l.b16 %v3701
    %v4490 = vunpack.c.h.b16 %v3701
    %v4491 = vunpack.c.l.b16 %v3702
    %v4492 = vunpack.c.h.b16 %v3702
    %v4493 = vpack.c.b16 %v3985, %v3981
    %v4494 = vpack.c.b16 %v3986, %v3982
    %v4495 = vpack.c.b16 %v3987, %v3983
    %v4496 = vpack.c.b16 %v3988, %v3984
    %v4497 = vpack.c.b16 %v3993, %v3989
    %v4498 = vpack.c.b16 %v3994, %v3990
    %v4499 = vpack.c.b16 %v3995, %v3991
    %v4500 = vpack.c.b16 %v3996, %v3992
    %v4501 = vpack.c.b16 %v4001, %v3997
    %v4502 = vpack.c.b16 %v4002, %v3998
    %v4503 = vpack.c.b16 %v4003, %v3999
    %v4504 = vpack.c.b16 %v4004, %v4000
    %v4505 = vpack.c.b16 %v4009, %v4005
    %v4506 = vpack.c.b16 %v4010, %v4006
    %v4507 = vpack.c.b16 %v4011, %v4007
    %v4508 = vpack.c.b16 %v4012, %v4008
    %v4509 = vpack.c.b16 %v4017, %v4013
    %v4510 = vpack.c.b16 %v4018, %v4014
    %v4511 = vpack.c.b16 %v4019, %v4015
    %v4512 = vpack.c.b16 %v4020, %v4016
    %v4513 = vpack.c.b16 %v4025, %v4021
    %v4514 = vpack.c.b16 %v4026, %v4022
    %v4515 = vpack.c.b16 %v4027, %v4023
    %v4516 = vpack.c.b16 %v4028, %v4024
    %v4517 = vpack.c.b16 %v4033, %v4029
    %v4518 = vpack.c.b16 %v4034, %v4030
    %v4519 = vpack.c.b16 %v4035, %v4031
    %v4520 = vpack.c.b16 %v4036, %v4032
    %v4521 = vpack.c.b16 %v4041, %v4037
    %v4522 = vpack.c.b16 %v4042, %v4038
    %v4523 = vpack.c.b16 %v4043, %v4039
    %v4524 = vpack.c.b16 %v4044, %v4040
    %v4525 = vpack.c.b16 %v4049, %v4045
    %v4526 = vpack.c.b16 %v4050, %v4046
    %v4527 = vpack.c.b16 %v4051, %v4047
    %v4528 = vpack.c.b16 %v4052, %v4048
    %v4529 = vpack.c.b16 %v4057, %v4053
    %v4530 = vpack.c.b16 %v4058, %v4054
    %v4531 = vpack.c.b16 %v4059, %v4055
    %v4532 = vpack.c.b16 %v4060, %v4056
    %v4533 = vpack.c.b16 %v4065, %v4061
    %v4534 = vpack.c.b16 %v4066, %v4062
    %v4535 = vpack.c.b16 %v4067, %v4063
    %v4536 = vpack.c.b16 %v4068, %v4064
    %v4537 = vpack.c.b16 %v4073, %v4069
    %v4538 = vpack.c.b16 %v4074, %v4070
    %v4539 = vpack.c.b16 %v4075, %v4071
    %v4540 = vpack.c.b16 %v4076, %v4072
    %v4541 = vpack.c.b16 %v4081, %v4077
    %v4542 = vpack.c.b16 %v4082, %v4078
    %v4543 = vpack.c.b16 %v4083, %v4079
    %v4544 = vpack.c.b16 %v4084, %v4080
    %v4545 = vpack.c.b16 %v4089, %v4085
    %v4546 = vpack.c.b16 %v4090, %v4086
    %v4547 = vpack.c.b16 %v4091, %v4087
    %v4548 = vpack.c.b16 %v4092, %v4088
    %v4549 = vpack.c.b16 %v4097, %v4093
    %v4550 = vpack.c.b16 %v4098, %v4094
    %v4551 = vpack.c.b16 %v4099, %v4095
    %v4552 = vpack.c.b16 %v4100, %v4096
    %v4553 = vpack.c.b16 %v4105, %v4101
    %v4554 = vpack.c.b16 %v4106, %v4102
    %v4555 = vpack.c.b16 %v4107, %v4103
    %v4556 = vpack.c.b16 %v4108, %v4104
    %v4557 = vpack.c.b16 %v4113, %v4109
    %v4558 = vpack.c.b16 %v4114, %v4110
    %v4559 = vpack.c.b16 %v4115, %v4111
    %v4560 = vpack.c.b16 %v4116, %v4112
    %v4561 = vpack.c.b16 %v4121, %v4117
    %v4562 = vpack.c.b16 %v4122, %v4118
    %v4563 = vpack.c.b16 %v4123, %v4119
    %v4564 = vpack.c.b16 %v4124, %v4120
    %v4565 = vpack.c.b16 %v4129, %v4125
    %v4566 = vpack.c.b16 %v4130, %v4126
    %v4567 = vpack.c.b16 %v4131, %v4127
    %v4568 = vpack.c.b16 %v4132, %v4128
    %v4569 = vpack.c.b16 %v4137, %v4133
    %v4570 = vpack.c.b16 %v4138, %v4134
    %v4571 = vpack.c.b16 %v4139, %v4135
    %v4572 = vpack.c.b16 %v4140, %v4136
    %v4573 = vpack.c.b16 %v4145, %v4141
    %v4574 = vpack.c.b16 %v4146, %v4142
    %v4575 = vpack.c.b16 %v4147, %v4143
    %v4576 = vpack.c.b16 %v4148, %v4144
    %v4577 = vpack.c.b16 %v4153, %v4149
    %v4578 = vpack.c.b16 %v4154, %v4150
    %v4579 = vpack.c.b16 %v4155, %v4151
    %v4580 = vpack.c.b16 %v4156, %v4152
    %v4581 = vpack.c.b16 %v4161, %v4157
    %v4582 = vpack.c.b16 %v4162, %v4158
    %v4583 = vpack.c.b16 %v4163, %v4159
    %v4584 = vpack.c.b16 %v4164, %v4160
    %v4585 = vpack.c.b16 %v4169, %v4165
    %v4586 = vpack.c.b16 %v4170, %v4166
    %v4587 = vpack.c.b16 %v4171, %v4167
    %v4588 = vpack.c.b16 %v4172, %v4168
    %v4589 = vpack.c.b16 %v4177, %v4173
    %v4590 = vpack.c.b16 %v4178, %v4174
    %v4591 = vpack.c.b16 %v4179, %v4175
    %v4592 = vpack.c.b16 %v4180, %v4176
    %v4593 = vpack.c.b16 %v4185, %v4181
    %v4594 = vpack.c.b16 %v4186, %v4182
    %v4595 = vpack.c.b16 %v4187, %v4183
    %v4596 = vpack.c.b16 %v4188, %v4184
    %v4597 = vpack.c.b16 %v4193, %v4189
    %v4598 = vpack.c.b16 %v4194, %v4190
    %v4599 = vpack.c.b16 %v4195, %v4191
    %v4600 = vpack.c.b16 %v4196, %v4192
    %v4601 = vpack.c.b16 %v4201, %v4197
    %v4602 = vpack.c.b16 %v4202, %v4198
    %v4603 = vpack.c.b16 %v4203, %v4199
    %v4604 = vpack.c.b16 %v4204, %v4200
    %v4605 = vpack.c.b16 %v4209, %v4205
    %v4606 = vpack.c.b16 %v4210, %v4206
    %v4607 = vpack.c.b16 %v4211, %v4207
    %v4608 = vpack.c.b16 %v4212, %v4208
    %v4609 = vpack.c.b16 %v4217, %v4213
    %v4610 = vpack.c.b16 %v4218, %v4214
    %v4611 = vpack.c.b16 %v4219, %v4215
    %v4612 = vpack.c.b16 %v4220, %v4216
    %v4613 = vpack.c.b16 %v4225, %v4221
    %v4614 = vpack.c.b16 %v4226, %v4222
    %v4615 = vpack.c.b16 %v4227, %v4223
    %v4616 = vpack.c.b16 %v4228, %v4224
    %v4617 = vpack.c.b16 %v4233, %v4229
    %v4618 = vpack.c.b16 %v4234, %v4230
    %v4619 = vpack.c.b16 %v4235, %v4231
    %v4620 = vpack.c.b16 %v4236, %v4232
    %v4621 = vpack.c.b16 %v4241, %v4237
    %v4622 = vpack.c.b16 %v4242, %v4238
    %v4623 = vpack.c.b16 %v4243, %v4239
    %v4624 = vpack.c.b16 %v4244, %v4240
    %v4625 = vpack.c.b16 %v4249, %v4245
    %v4626 = vpack.c.b16 %v4250, %v4246
    %v4627 = vpack.c.b16 %v4251, %v4247
    %v4628 = vpack.c.b16 %v4252, %v4248
    %v4629 = vpack.c.b16 %v4257, %v4253
    %v4630 = vpack.c.b16 %v4258, %v4254
    %v4631 = vpack.c.b16 %v4259, %v4255
    %v4632 = vpack.c.b16 %v4260, %v4256
    %v4633 = vpack.c.b16 %v4265, %v4261
    %v4634 = vpack.c.b16 %v4266, %v4262
    %v4635 = vpack.c.b16 %v4267, %v4263
    %v4636 = vpack.c.b16 %v4268, %v4264
    %v4637 = vpack.c.b16 %v4273, %v4269
    %v4638 = vpack.c.b16 %v4274, %v4270
    %v4639 = vpack.c.b16 %v4275, %v4271
    %v4640 = vpack.c.b16 %v4276, %v4272
    %v4641 = vpack.c.b16 %v4281, %v4277
    %v4642 = vpack.c.b16 %v4282, %v4278
    %v4643 = vpack.c.b16 %v4283, %v4279
    %v4644 = vpack.c.b16 %v4284, %v4280
    %v4645 = vpack.c.b16 %v4289, %v4285
    %v4646 = vpack.c.b16 %v4290, %v4286
    %v4647 = vpack.c.b16 %v4291, %v4287
    %v4648 = vpack.c.b16 %v4292, %v4288
    %v4649 = vpack.c.b16 %v4297, %v4293
    %v4650 = vpack.c.b16 %v4298, %v4294
    %v4651 = vpack.c.b16 %v4299, %v4295
    %v4652 = vpack.c.b16 %v4300, %v4296
    %v4653 = vpack.c.b16 %v4305, %v4301
    %v4654 = vpack.c.b16 %v4306, %v4302
    %v4655 = vpack.c.b16 %v4307, %v4303
    %v4656 = vpack.c.b16 %v4308, %v4304
    %v4657 = vpack.c.b16 %v4313, %v4309
    %v4658 = vpack.c.b16 %v4314, %v4310
    %v4659 = vpack.c.b16 %v4315, %v4311
    %v4660 = vpack.c.b16 %v4316, %v4312
    %v4661 = vpack.c.b16 %v4321, %v4317
    %v4662 = vpack.c.b16 %v4322, %v4318
    %v4663 = vpack.c.b16 %v4323, %v4319
    %v4664 = vpack.c.b16 %v4324, %v4320
    %v4665 = vpack.c.b16 %v4329, %v4325
    %v4666 = vpack.c.b16 %v4330, %v4326
    %v4667 = vpack.c.b16 %v4331, %v4327
    %v4668 = vpack.c.b16 %v4332, %v4328
    %v4669 = vpack.c.b16 %v4337, %v4333
    %v4670 = vpack.c.b16 %v4338, %v4334
    %v4671 = vpack.c.b16 %v4339, %v4335
    %v4672 = vpack.c.b16 %v4340, %v4336
    %v4673 = vpack.c.b16 %v4345, %v4341
    %v4674 = vpack.c.b16 %v4346, %v4342
    %v4675 = vpack.c.b16 %v4347, %v4343
    %v4676 = vpack.c.b16 %v4348, %v4344
    %v4677 = vpack.c.b16 %v4353, %v4349
    %v4678 = vpack.c.b16 %v4354, %v4350
    %v4679 = vpack.c.b16 %v4355, %v4351
    %v4680 = vpack.c.b16 %v4356, %v4352
    %v4681 = vpack.c.b16 %v4361, %v4357
    %v4682 = vpack.c.b16 %v4362, %v4358
    %v4683 = vpack.c.b16 %v4363, %v4359
    %v4684 = vpack.c.b16 %v4364, %v4360
    %v4685 = vpack.c.b16 %v4369, %v4365
    %v4686 = vpack.c.b16 %v4370, %v4366
    %v4687 = vpack.c.b16 %v4371, %v4367
    %v4688 = vpack.c.b16 %v4372, %v4368
    %v4689 = vpack.c.b16 %v4377, %v4373
    %v4690 = vpack.c.b16 %v4378, %v4374
    %v4691 = vpack.c.b16 %v4379, %v4375
    %v4692 = vpack.c.b16 %v4380, %v4376
    %v4693 = vpack.c.b16 %v4385, %v4381
    %v4694 = vpack.c.b16 %v4386, %v4382
    %v4695 = vpack.c.b16 %v4387, %v4383
    %v4696 = vpack.c.b16 %v4388, %v4384
    %v4697 = vpack.c.b16 %v4393, %v4389
    %v4698 = vpack.c.b16 %v4394, %v4390
    %v4699 = vpack.c.b16 %v4395, %v4391
    %v4700 = vpack.c.b16 %v4396, %v4392
    %v4701 = vpack.c.b16 %v4401, %v4397
    %v4702 = vpack.c.b16 %v4402, %v4398
    %v4703 = vpack.c.b16 %v4403, %v4399
    %v4704 = vpack.c.b16 %v4404, %v4400
    %v4705 = vpack.c.b16 %v4409, %v4405
    %v4706 = vpack.c.b16 %v4410, %v4406
    %v4707 = vpack.c.b16 %v4411, %v4407
    %v4708 = vpack.c.b16 %v4412, %v4408
    %v4709 = vpack.c.b16 %v4417, %v4413
    %v4710 = vpack.c.b16 %v4418, %v4414
    %v4711 = vpack.c.b16 %v4419, %v4415
    %v4712 = vpack.c.b16 %v4420, %v4416
    %v4713 = vpack.c.b16 %v4425, %v4421
    %v4714 = vpack.c.b16 %v4426, %v4422
    %v4715 = vpack.c.b16 %v4427, %v4423
    %v4716 = vpack.c.b16 %v4428, %v4424
    %v4717 = vpack.c.b16 %v4433, %v4429
    %v4718 = vpack.c.b16 %v4434, %v4430
    %v4719 = vpack.c.b16 %v4435, %v4431
    %v4720 = vpack.c.b16 %v4436, %v4432
    %v4721 = vpack.c.b16 %v4441, %v4437
    %v4722 = vpack.c.b16 %v4442, %v4438
    %v4723 = vpack.c.b16 %v4443, %v4439
    %v4724 = vpack.c.b16 %v4444, %v4440
    %v4725 = vpack.c.b16 %v4449, %v4445
    %v4726 = vpack.c.b16 %v4450, %v4446
    %v4727 = vpack.c.b16 %v4451, %v4447
    %v4728 = vpack.c.b16 %v4452, %v4448
    %v4729 = vpack.c.b16 %v4457, %v4453
    %v4730 = vpack.c.b16 %v4458, %v4454
    %v4731 = vpack.c.b16 %v4459, %v4455
    %v4732 = vpack.c.b16 %v4460, %v4456
    %v4733 = vpack.c.b16 %v4465, %v4461
    %v4734 = vpack.c.b16 %v4466, %v4462
    %v4735 = vpack.c.b16 %v4467, %v4463
    %v4736 = vpack.c.b16 %v4468, %v4464
    %v4737 = vpack.c.b16 %v4473, %v4469
    %v4738 = vpack.c.b16 %v4474, %v4470
    %v4739 = vpack.c.b16 %v4475, %v4471
    %v4740 = vpack.c.b16 %v4476, %v4472
    %v4741 = vpack.c.b16 %v4481, %v4477
    %v4742 = vpack.c.b16 %v4482, %v4478
    %v4743 = vpack.c.b16 %v4483, %v4479
    %v4744 = vpack.c.b16 %v4484, %v4480
    %v4745 = vpack.c.b16 %v4489, %v4485
    %v4746 = vpack.c.b16 %v4490, %v4486
    %v4747 = vpack.c.b16 %v4491, %v4487
    %v4748 = vpack.c.b16 %v4492, %v4488
    %5005 = vmatprep.subr.bf16.mxu0 %v4494
    %5006 = vmatpush1.bf16.msra.mxu0 %v4493
    %5007 = vmatprep.subr.bf16.mxu0 %v4498
    %5008 = vmatpush1.bf16.msra.mxu0 %v4497
    %5009 = vmatprep.subr.bf16.mxu0 %v4502
    %5010 = vmatpush1.bf16.msra.mxu0 %v4501
    %5011 = vmatprep.subr.bf16.mxu0 %v4506
    %5012 = vmatpush1.bf16.msra.mxu0 %v4505
    %5013 = vmatprep.subr.bf16.mxu0 %v4510
    %5014 = vmatpush1.bf16.msra.mxu0 %v4509
    %5015 = vmatprep.subr.bf16.mxu0 %v4514
    %5016 = vmatpush1.bf16.msra.mxu0 %v4513
    %5017 = vmatprep.subr.bf16.mxu0 %v4518
    %5018 = vmatpush1.bf16.msra.mxu0 %v4517
    %5019 = vmatprep.subr.bf16.mxu0 %v4522
    %5020 = vmatpush1.bf16.msra.mxu0 %v4521
    %5021 = vmatprep.subr.bf16.mxu0 %v4526
    %5022 = vmatpush1.bf16.msra.mxu0 %v4525
    %5023 = vmatprep.subr.bf16.mxu0 %v4530
    %5024 = vmatpush1.bf16.msra.mxu0 %v4529
    %5025 = vmatprep.subr.bf16.mxu0 %v4534
    %5026 = vmatpush1.bf16.msra.mxu0 %v4533
    %5027 = vmatprep.subr.bf16.mxu0 %v4538
    %5028 = vmatpush1.bf16.msra.mxu0 %v4537
    %5029 = vmatprep.subr.bf16.mxu0 %v4542
    %5030 = vmatpush1.bf16.msra.mxu0 %v4541
    %5031 = vmatprep.subr.bf16.mxu0 %v4546
    %5032 = vmatpush1.bf16.msra.mxu0 %v4545
    %5033 = vmatprep.subr.bf16.mxu0 %v4550
    %5034 = vmatpush1.bf16.msra.mxu0 %v4549
    %5035 = vmatprep.subr.bf16.mxu0 %v4554
    %5036 = vmatpush1.bf16.msra.mxu0 %v4553
    %5037 = vmatprep.mubr.bf16.mxu0 %v3440
    %5038 = vmatmul.mubr.bf16.gmra.mrb[0].mxu0 %v3439
    %v5039 = vpop.f32.mrb[0].mxu0
    %v5040 = vadd.f32 %v3708, %v5039
    %v5041 = vpop.f32.mrb[0].mxu0
    %v5042 = vadd.f32 %v3712, %v5041
    %v5043 = vpop.f32.mrb[0].mxu0
    %v5044 = vpop.f32.mrb[0].mxu0
    %5045 = vdwg.mxu0
    %5046 = vmatprep.subr.bf16.mxu0 %v4558
    %5047 = vmatpush1.bf16.msra.mxu0 %v4557
    %5048 = vmatprep.subr.bf16.mxu0 %v4562
    %5049 = vmatpush1.bf16.msra.mxu0 %v4561
    %5050 = vmatprep.subr.bf16.mxu0 %v4566
    %5051 = vmatpush1.bf16.msra.mxu0 %v4565
    %5052 = vmatprep.subr.bf16.mxu0 %v4570
    %5053 = vmatpush1.bf16.msra.mxu0 %v4569
    %5054 = vmatprep.subr.bf16.mxu0 %v4574
    %5055 = vmatpush1.bf16.msra.mxu0 %v4573
    %5056 = vmatprep.subr.bf16.mxu0 %v4578
    %5057 = vmatpush1.bf16.msra.mxu0 %v4577
    %5058 = vmatprep.subr.bf16.mxu0 %v4582
    %5059 = vmatpush1.bf16.msra.mxu0 %v4581
    %5060 = vmatprep.subr.bf16.mxu0 %v4586
    %5061 = vmatpush1.bf16.msra.mxu0 %v4585
    %5062 = vmatprep.subr.bf16.mxu0 %v4590
    %5063 = vmatpush1.bf16.msra.mxu0 %v4589
    %5064 = vmatprep.subr.bf16.mxu0 %v4594
    %5065 = vmatpush1.bf16.msra.mxu0 %v4593
    %5066 = vmatprep.subr.bf16.mxu0 %v4598
    %5067 = vmatpush1.bf16.msra.mxu0 %v4597
    %5068 = vmatprep.subr.bf16.mxu0 %v4602
    %5069 = vmatpush1.bf16.msra.mxu0 %v4601
    %5070 = vmatprep.subr.bf16.mxu0 %v4606
    %5071 = vmatpush1.bf16.msra.mxu0 %v4605
    %5072 = vmatprep.subr.bf16.mxu0 %v4610
    %5073 = vmatpush1.bf16.msra.mxu0 %v4609
    %5074 = vmatprep.subr.bf16.mxu0 %v4614
    %5075 = vmatpush1.bf16.msra.mxu0 %v4613
    %5076 = vmatprep.subr.bf16.mxu0 %v4618
    %5077 = vmatpush1.bf16.msra.mxu0 %v4617
    %5078 = vmatprep.mubr.bf16.mxu0 %v3442
    %5079 = vmatmul.mubr.bf16.gmra.mrb[0].mxu0 %v3441
    %v5080 = vpop.f32.mrb[0].mxu0
    %v5081 = vadd.f32 %v5040, %v5080
    %v5082 = vpop.f32.mrb[0].mxu0
    %v5083 = vadd.f32 %v5042, %v5082
    %v5084 = vpop.f32.mrb[0].mxu0
    %v5085 = vpop.f32.mrb[0].mxu0
    %5086 = vdwg.mxu0
    %5087 = vmatprep.subr.bf16.mxu0 %v4622
    %5088 = vmatpush1.bf16.msra.mxu0 %v4621
    %5089 = vmatprep.subr.bf16.mxu0 %v4626
    %5090 = vmatpush1.bf16.msra.mxu0 %v4625
    %5091 = vmatprep.subr.bf16.mxu0 %v4630
    %5092 = vmatpush1.bf16.msra.mxu0 %v4629
    %5093 = vmatprep.subr.bf16.mxu0 %v4634
    %5094 = vmatpush1.bf16.msra.mxu0 %v4633
    %5095 = vmatprep.subr.bf16.mxu0 %v4638
    %5096 = vmatpush1.bf16.msra.mxu0 %v4637
    %5097 = vmatprep.subr.bf16.mxu0 %v4642
    %5098 = vmatpush1.bf16.msra.mxu0 %v4641
    %5099 = vmatprep.subr.bf16.mxu0 %v4646
    %5100 = vmatpush1.bf16.msra.mxu0 %v4645
    %5101 = vmatprep.subr.bf16.mxu0 %v4650
    %5102 = vmatpush1.bf16.msra.mxu0 %v4649
    %5103 = vmatprep.subr.bf16.mxu0 %v4654
    %5104 = vmatpush1.bf16.msra.mxu0 %v4653
    %5105 = vmatprep.subr.bf16.mxu0 %v4658
    %5106 = vmatpush1.bf16.msra.mxu0 %v4657
    %5107 = vmatprep.subr.bf16.mxu0 %v4662
    %5108 = vmatpush1.bf16.msra.mxu0 %v4661
    %5109 = vmatprep.subr.bf16.mxu0 %v4666
    %5110 = vmatpush1.bf16.msra.mxu0 %v4665
    %5111 = vmatprep.subr.bf16.mxu0 %v4670
    %5112 = vmatpush1.bf16.msra.mxu0 %v4669
    %5113 = vmatprep.subr.bf16.mxu0 %v4674
    %5114 = vmatpush1.bf16.msra.mxu0 %v4673
    %5115 = vmatprep.subr.bf16.mxu0 %v4678
    %5116 = vmatpush1.bf16.msra.mxu0 %v4677
    %5117 = vmatprep.subr.bf16.mxu0 %v4682
    %5118 = vmatpush1.bf16.msra.mxu0 %v4681
    %5119 = vmatprep.mubr.bf16.mxu0 %v3444
    %5120 = vmatmul.mubr.bf16.gmra.mrb[0].mxu0 %v3443
    %v5121 = vpop.f32.mrb[0].mxu0
    %v5122 = vadd.f32 %v5081, %v5121
    %v5123 = vpop.f32.mrb[0].mxu0
    %v5124 = vadd.f32 %v5083, %v5123
    %v5125 = vpop.f32.mrb[0].mxu0
    %v5126 = vpop.f32.mrb[0].mxu0
    %5127 = vdwg.mxu0
    %5128 = vmatprep.subr.bf16.mxu0 %v4686
    %5129 = vmatpush1.bf16.msra.mxu0 %v4685
    %5130 = vmatprep.subr.bf16.mxu0 %v4690
    %5131 = vmatpush1.bf16.msra.mxu0 %v4689
    %5132 = vmatprep.subr.bf16.mxu0 %v4694
    %5133 = vmatpush1.bf16.msra.mxu0 %v4693
    %5134 = vmatprep.subr.bf16.mxu0 %v4698
    %5135 = vmatpush1.bf16.msra.mxu0 %v4697
    %5136 = vmatprep.subr.bf16.mxu0 %v4702
    %5137 = vmatpush1.bf16.msra.mxu0 %v4701
    %5138 = vmatprep.subr.bf16.mxu0 %v4706
    %5139 = vmatpush1.bf16.msra.mxu0 %v4705
    %5140 = vmatprep.subr.bf16.mxu0 %v4710
    %5141 = vmatpush1.bf16.msra.mxu0 %v4709
    %5142 = vmatprep.subr.bf16.mxu0 %v4714
    %5143 = vmatpush1.bf16.msra.mxu0 %v4713
    %5144 = vmatprep.subr.bf16.mxu0 %v4718
    %5145 = vmatpush1.bf16.msra.mxu0 %v4717
    %5146 = vmatprep.subr.bf16.mxu0 %v4722
    %5147 = vmatpush1.bf16.msra.mxu0 %v4721
    %5148 = vmatprep.subr.bf16.mxu0 %v4726
    %5149 = vmatpush1.bf16.msra.mxu0 %v4725
    %5150 = vmatprep.subr.bf16.mxu0 %v4730
    %5151 = vmatpush1.bf16.msra.mxu0 %v4729
    %5152 = vmatprep.subr.bf16.mxu0 %v4734
    %5153 = vmatpush1.bf16.msra.mxu0 %v4733
    %5154 = vmatprep.subr.bf16.mxu0 %v4738
    %5155 = vmatpush1.bf16.msra.mxu0 %v4737
    %5156 = vmatprep.subr.bf16.mxu0 %v4742
    %5157 = vmatpush1.bf16.msra.mxu0 %v4741
    %5158 = vmatprep.subr.bf16.mxu0 %v4746
    %5159 = vmatpush1.bf16.msra.mxu0 %v4745
    %5160 = vmatprep.mubr.bf16.mxu0 %v3446
    %5161 = vmatmul.mubr.bf16.gmra.mrb[0].mxu0 %v3445
    %v5162 = vpop.f32.mrb[0].mxu0
    %v5163 = vadd.f32 %v5122, %v5162
    %v5164 = vpop.f32.mrb[0].mxu0
    %v5165 = vadd.f32 %v5124, %v5164
    %v5166 = vpop.f32.mrb[0].mxu0
    %v5167 = vpop.f32.mrb[0].mxu0
    %5168 = vdwg.mxu0
    %5169 = vmatprep.subr.bf16.mxu0 %v4496
    %5170 = vmatpush1.bf16.msra.mxu0 %v4495
    %5171 = vmatprep.subr.bf16.mxu0 %v4500
    %5172 = vmatpush1.bf16.msra.mxu0 %v4499
    %5173 = vmatprep.subr.bf16.mxu0 %v4504
    %5174 = vmatpush1.bf16.msra.mxu0 %v4503
    %5175 = vmatprep.subr.bf16.mxu0 %v4508
    %5176 = vmatpush1.bf16.msra.mxu0 %v4507
    %5177 = vmatprep.subr.bf16.mxu0 %v4512
    %5178 = vmatpush1.bf16.msra.mxu0 %v4511
    %5179 = vmatprep.subr.bf16.mxu0 %v4516
    %5180 = vmatpush1.bf16.msra.mxu0 %v4515
    %5181 = vmatprep.subr.bf16.mxu0 %v4520
    %5182 = vmatpush1.bf16.msra.mxu0 %v4519
    %5183 = vmatprep.subr.bf16.mxu0 %v4524
    %5184 = vmatpush1.bf16.msra.mxu0 %v4523
    %5185 = vmatprep.subr.bf16.mxu0 %v4528
    %5186 = vmatpush1.bf16.msra.mxu0 %v4527
    %5187 = vmatprep.subr.bf16.mxu0 %v4532
    %5188 = vmatpush1.bf16.msra.mxu0 %v4531
    %5189 = vmatprep.subr.bf16.mxu0 %v4536
    %5190 = vmatpush1.bf16.msra.mxu0 %v4535
    %5191 = vmatprep.subr.bf16.mxu0 %v4540
    %5192 = vmatpush1.bf16.msra.mxu0 %v4539
    %5193 = vmatprep.subr.bf16.mxu0 %v4544
    %5194 = vmatpush1.bf16.msra.mxu0 %v4543
    %5195 = vmatprep.subr.bf16.mxu0 %v4548
    %5196 = vmatpush1.bf16.msra.mxu0 %v4547
    %5197 = vmatprep.subr.bf16.mxu0 %v4552
    %5198 = vmatpush1.bf16.msra.mxu0 %v4551
    %5199 = vmatprep.subr.bf16.mxu0 %v4556
    %5200 = vmatpush1.bf16.msra.mxu0 %v4555
    %5201 = vmatprep.mubr.bf16.mxu0 %v3440
    %5202 = vmatmul.mubr.bf16.gmra.mrb[0].mxu0 %v3439
    %v5203 = vpop.f32.mrb[0].mxu0
    %v5204 = vadd.f32 %v3716, %v5203
    %v5205 = vpop.f32.mrb[0].mxu0
    %v5206 = vadd.f32 %v3720, %v5205
    %v5207 = vpop.f32.mrb[0].mxu0
    %v5208 = vpop.f32.mrb[0].mxu0
    %5209 = vdwg.mxu0
    %5210 = vmatprep.subr.bf16.mxu0 %v4560
    %5211 = vmatpush1.bf16.msra.mxu0 %v4559
    %5212 = vmatprep.subr.bf16.mxu0 %v4564
    %5213 = vmatpush1.bf16.msra.mxu0 %v4563
    %5214 = vmatprep.subr.bf16.mxu0 %v4568
    %5215 = vmatpush1.bf16.msra.mxu0 %v4567
    %5216 = vmatprep.subr.bf16.mxu0 %v4572
    %5217 = vmatpush1.bf16.msra.mxu0 %v4571
    %5218 = vmatprep.subr.bf16.mxu0 %v4576
    %5219 = vmatpush1.bf16.msra.mxu0 %v4575
    %5220 = vmatprep.subr.bf16.mxu0 %v4580
    %5221 = vmatpush1.bf16.msra.mxu0 %v4579
    %5222 = vmatprep.subr.bf16.mxu0 %v4584
    %5223 = vmatpush1.bf16.msra.mxu0 %v4583
    %5224 = vmatprep.subr.bf16.mxu0 %v4588
    %5225 = vmatpush1.bf16.msra.mxu0 %v4587
    %5226 = vmatprep.subr.bf16.mxu0 %v4592
    %5227 = vmatpush1.bf16.msra.mxu0 %v4591
    %5228 = vmatprep.subr.bf16.mxu0 %v4596
    %5229 = vmatpush1.bf16.msra.mxu0 %v4595
    %5230 = vmatprep.subr.bf16.mxu0 %v4600
    %5231 = vmatpush1.bf16.msra.mxu0 %v4599
    %5232 = vmatprep.subr.bf16.mxu0 %v4604
    %5233 = vmatpush1.bf16.msra.mxu0 %v4603
    %5234 = vmatprep.subr.bf16.mxu0 %v4608
    %5235 = vmatpush1.bf16.msra.mxu0 %v4607
    %5236 = vmatprep.subr.bf16.mxu0 %v4612
    %5237 = vmatpush1.bf16.msra.mxu0 %v4611
    %5238 = vmatprep.subr.bf16.mxu0 %v4616
    %5239 = vmatpush1.bf16.msra.mxu0 %v4615
    %5240 = vmatprep.subr.bf16.mxu0 %v4620
    %5241 = vmatpush1.bf16.msra.mxu0 %v4619
    %5242 = vmatprep.mubr.bf16.mxu0 %v3442
    %5243 = vmatmul.mubr.bf16.gmra.mrb[0].mxu0 %v3441
    %v5244 = vpop.f32.mrb[0].mxu0
    %v5245 = vadd.f32 %v5204, %v5244
    %v5246 = vpop.f32.mrb[0].mxu0
    %v5247 = vadd.f32 %v5206, %v5246
    %v5248 = vpop.f32.mrb[0].mxu0
    %v5249 = vpop.f32.mrb[0].mxu0
    %5250 = vdwg.mxu0
    %5251 = vmatprep.subr.bf16.mxu0 %v4624
    %5252 = vmatpush1.bf16.msra.mxu0 %v4623
    %5253 = vmatprep.subr.bf16.mxu0 %v4628
    %5254 = vmatpush1.bf16.msra.mxu0 %v4627
    %5255 = vmatprep.subr.bf16.mxu0 %v4632
    %5256 = vmatpush1.bf16.msra.mxu0 %v4631
    %5257 = vmatprep.subr.bf16.mxu0 %v4636
    %5258 = vmatpush1.bf16.msra.mxu0 %v4635
    %5259 = vmatprep.subr.bf16.mxu0 %v4640
    %5260 = vmatpush1.bf16.msra.mxu0 %v4639
    %5261 = vmatprep.subr.bf16.mxu0 %v4644
    %5262 = vmatpush1.bf16.msra.mxu0 %v4643
    %5263 = vmatprep.subr.bf16.mxu0 %v4648
    %5264 = vmatpush1.bf16.msra.mxu0 %v4647
    %5265 = vmatprep.subr.bf16.mxu0 %v4652
    %5266 = vmatpush1.bf16.msra.mxu0 %v4651
    %5267 = vmatprep.subr.bf16.mxu0 %v4656
    %5268 = vmatpush1.bf16.msra.mxu0 %v4655
    %5269 = vmatprep.subr.bf16.mxu0 %v4660
    %5270 = vmatpush1.bf16.msra.mxu0 %v4659
    %5271 = vmatprep.subr.bf16.mxu0 %v4664
    %5272 = vmatpush1.bf16.msra.mxu0 %v4663
    %5273 = vmatprep.subr.bf16.mxu0 %v4668
    %5274 = vmatpush1.bf16.msra.mxu0 %v4667
    %5275 = vmatprep.subr.bf16.mxu0 %v4672
    %5276 = vmatpush1.bf16.msra.mxu0 %v4671
    %5277 = vmatprep.subr.bf16.mxu0 %v4676
    %5278 = vmatpush1.bf16.msra.mxu0 %v4675
    %5279 = vmatprep.subr.bf16.mxu0 %v4680
    %5280 = vmatpush1.bf16.msra.mxu0 %v4679
    %5281 = vmatprep.subr.bf16.mxu0 %v4684
    %5282 = vmatpush1.bf16.msra.mxu0 %v4683
    %5283 = vmatprep.mubr.bf16.mxu0 %v3444
    %5284 = vmatmul.mubr.bf16.gmra.mrb[0].mxu0 %v3443
    %v5285 = vpop.f32.mrb[0].mxu0
    %v5286 = vadd.f32 %v5245, %v5285
    %v5287 = vpop.f32.mrb[0].mxu0
    %v5288 = vadd.f32 %v5247, %v5287
    %v5289 = vpop.f32.mrb[0].mxu0
    %v5290 = vpop.f32.mrb[0].mxu0
    %5291 = vdwg.mxu0
    %5292 = vmatprep.subr.bf16.mxu0 %v4688
    %5293 = vmatpush1.bf16.msra.mxu0 %v4687
    %5294 = vmatprep.subr.bf16.mxu0 %v4692
    %5295 = vmatpush1.bf16.msra.mxu0 %v4691
    %5296 = vmatprep.subr.bf16.mxu0 %v4696
    %5297 = vmatpush1.bf16.msra.mxu0 %v4695
    %5298 = vmatprep.subr.bf16.mxu0 %v4700
    %5299 = vmatpush1.bf16.msra.mxu0 %v4699
    %5300 = vmatprep.subr.bf16.mxu0 %v4704
    %5301 = vmatpush1.bf16.msra.mxu0 %v4703
    %5302 = vmatprep.subr.bf16.mxu0 %v4708
    %5303 = vmatpush1.bf16.msra.mxu0 %v4707
    %5304 = vmatprep.subr.bf16.mxu0 %v4712
    %5305 = vmatpush1.bf16.msra.mxu0 %v4711
    %5306 = vmatprep.subr.bf16.mxu0 %v4716
    %5307 = vmatpush1.bf16.msra.mxu0 %v4715
    %5308 = vmatprep.subr.bf16.mxu0 %v4720
    %5309 = vmatpush1.bf16.msra.mxu0 %v4719
    %5310 = vmatprep.subr.bf16.mxu0 %v4724
    %5311 = vmatpush1.bf16.msra.mxu0 %v4723
    %5312 = vmatprep.subr.bf16.mxu0 %v4728
    %5313 = vmatpush1.bf16.msra.mxu0 %v4727
    %5314 = vmatprep.subr.bf16.mxu0 %v4732
    %5315 = vmatpush1.bf16.msra.mxu0 %v4731
    %5316 = vmatprep.subr.bf16.mxu0 %v4736
    %5317 = vmatpush1.bf16.msra.mxu0 %v4735
    %5318 = vmatprep.subr.bf16.mxu0 %v4740
    %5319 = vmatpush1.bf16.msra.mxu0 %v4739
    %5320 = vmatprep.subr.bf16.mxu0 %v4744
    %5321 = vmatpush1.bf16.msra.mxu0 %v4743
    %5322 = vmatprep.subr.bf16.mxu0 %v4748
    %5323 = vmatpush1.bf16.msra.mxu0 %v4747
    %5324 = vmatprep.mubr.bf16.mxu0 %v3446
    %5325 = vmatmul.mubr.bf16.gmra.mrb[0].mxu0 %v3445
    %v5326 = vpop.f32.mrb[0].mxu0
    %v5327 = vadd.f32 %v5286, %v5326
    %v5328 = vpop.f32.mrb[0].mxu0
    %v5329 = vadd.f32 %v5288, %v5328
    %v5330 = vpop.f32.mrb[0].mxu0
    %v5331 = vpop.f32.mrb[0].mxu0
    %5332 = vdwg.mxu0
    %v5333 = vmax.f32 %v5163, 0.0
    %v5334 = vmax.f32 %v5165, 0.0
    %v5335 = vmax.f32 %v5327, 0.0
    %v5336 = vmax.f32 %v5329, 0.0
    %5337 = vst [vmem:[%s4] sm:$0xff] %v5333
    %5338 = vst [vmem:[%s4 + $0x8] sm:$0xff] %v5334
    %5339 = vst [vmem:[%s4 + $0x10] sm:$0xff] %v5335
    %5340 = vst [vmem:[%s4 + $0x18] sm:$0xff] %v5336
    %v5341 = vpack.c.bf16 %v5333, %v5333
    %v5342 = vpack.c.bf16 %v5334, %v5334
    %v5343 = vpack.c.bf16 %v5335, %v5335
    %v5344 = vpack.c.bf16 %v5336, %v5336
    %v5345 = vld [vmem:[#allocation2 + $0xe00] sm:$0xff]
    %v5346 = vld [vmem:[#allocation2 + $0xe08] sm:$0xff]
    %v5347 = vld [vmem:[#allocation2 + $0xe10] sm:$0xff]
    %v5348 = vld [vmem:[#allocation2 + $0xe18] sm:$0xff]
    %v5349 = vld [vmem:[#allocation2 + $0xe20] sm:$0xff]
    %v5350 = vld [vmem:[#allocation2 + $0xe28] sm:$0xff]
    %v5351 = vld [vmem:[#allocation2 + $0xe30] sm:$0xff]
    %v5352 = vld [vmem:[#allocation2 + $0xe38] sm:$0xff]
    %v5353 = vld [vmem:[#allocation2 + $0xe40] sm:$0xff]
    %v5354 = vld [vmem:[#allocation2 + $0xe48] sm:$0xff]
    %v5355 = vld [vmem:[#allocation2 + $0xe50] sm:$0xff]
    %v5356 = vld [vmem:[#allocation2 + $0xe58] sm:$0xff]
    %v5357 = vld [vmem:[#allocation2 + $0xe60] sm:$0xff]
    %v5358 = vld [vmem:[#allocation2 + $0xe68] sm:$0xff]
    %v5359 = vld [vmem:[#allocation2 + $0xe70] sm:$0xff]
    %v5360 = vld [vmem:[#allocation2 + $0xe78] sm:$0xff]
    %v5361 = vld [vmem:[#allocation2 + $0xe80] sm:$0xff]
    %v5362 = vld [vmem:[#allocation2 + $0xe88] sm:$0xff]
    %v5363 = vld [vmem:[#allocation2 + $0xe90] sm:$0xff]
    %v5364 = vld [vmem:[#allocation2 + $0xe98] sm:$0xff]
    %v5365 = vld [vmem:[#allocation2 + $0xea0] sm:$0xff]
    %v5366 = vld [vmem:[#allocation2 + $0xea8] sm:$0xff]
    %v5367 = vld [vmem:[#allocation2 + $0xeb0] sm:$0xff]
    %v5368 = vld [vmem:[#allocation2 + $0xeb8] sm:$0xff]
    %v5369 = vld [vmem:[#allocation2 + $0xec0] sm:$0xff]
    %v5370 = vld [vmem:[#allocation2 + $0xec8] sm:$0xff]
    %v5371 = vld [vmem:[#allocation2 + $0xed0] sm:$0xff]
    %v5372 = vld [vmem:[#allocation2 + $0xed8] sm:$0xff]
    %v5373 = vld [vmem:[#allocation2 + $0xee0] sm:$0xff]
    %v5374 = vld [vmem:[#allocation2 + $0xee8] sm:$0xff]
    %v5375 = vld [vmem:[#allocation2 + $0xef0] sm:$0xff]
    %v5376 = vld [vmem:[#allocation2 + $0xef8] sm:$0xff]
    %v5377 = vld [vmem:[#allocation2 + $0xf00] sm:$0xff]
    %v5378 = vld [vmem:[#allocation2 + $0xf08] sm:$0xff]
    %v5379 = vld [vmem:[#allocation2 + $0xf10] sm:$0xff]
    %v5380 = vld [vmem:[#allocation2 + $0xf18] sm:$0xff]
    %v5381 = vld [vmem:[#allocation2 + $0xf20] sm:$0xff]
    %v5382 = vld [vmem:[#allocation2 + $0xf28] sm:$0xff]
    %v5383 = vld [vmem:[#allocation2 + $0xf30] sm:$0xff]
    %v5384 = vld [vmem:[#allocation2 + $0xf38] sm:$0xff]
    %v5385 = vld [vmem:[#allocation2 + $0xf40] sm:$0xff]
    %v5386 = vld [vmem:[#allocation2 + $0xf48] sm:$0xff]
    %v5387 = vld [vmem:[#allocation2 + $0xf50] sm:$0xff]
    %v5388 = vld [vmem:[#allocation2 + $0xf58] sm:$0xff]
    %v5389 = vld [vmem:[#allocation2 + $0xf60] sm:$0xff]
    %v5390 = vld [vmem:[#allocation2 + $0xf68] sm:$0xff]
    %v5391 = vld [vmem:[#allocation2 + $0xf70] sm:$0xff]
    %v5392 = vld [vmem:[#allocation2 + $0xf78] sm:$0xff]
    %v5393 = vld [vmem:[#allocation2 + $0xf80] sm:$0xff]
    %v5394 = vld [vmem:[#allocation2 + $0xf88] sm:$0xff]
    %v5395 = vld [vmem:[#allocation2 + $0xf90] sm:$0xff]
    %v5396 = vld [vmem:[#allocation2 + $0xf98] sm:$0xff]
    %v5397 = vld [vmem:[#allocation2 + $0xfa0] sm:$0xff]
    %v5398 = vld [vmem:[#allocation2 + $0xfa8] sm:$0xff]
    %v5399 = vld [vmem:[#allocation2 + $0xfb0] sm:$0xff]
    %v5400 = vld [vmem:[#allocation2 + $0xfb8] sm:$0xff]
    %v5401 = vld [vmem:[#allocation2 + $0xfc0] sm:$0xff]
    %v5402 = vld [vmem:[#allocation2 + $0xfc8] sm:$0xff]
    %v5403 = vld [vmem:[#allocation2 + $0xfd0] sm:$0xff]
    %v5404 = vld [vmem:[#allocation2 + $0xfd8] sm:$0xff]
    %v5405 = vld [vmem:[#allocation2 + $0xfe0] sm:$0xff]
    %v5406 = vld [vmem:[#allocation2 + $0xfe8] sm:$0xff]
    %v5407 = vld [vmem:[#allocation2 + $0xff0] sm:$0xff]
    %v5408 = vld [vmem:[#allocation2 + $0xff8] sm:$0xff]
    %v5409 = vld [vmem:[#allocation2 + $0x1000] sm:$0xff]
    %v5410 = vld [vmem:[#allocation2 + $0x1008] sm:$0xff]
    %v5411 = vld [vmem:[#allocation2 + $0x1010] sm:$0xff]
    %v5412 = vld [vmem:[#allocation2 + $0x1018] sm:$0xff]
    %v5413 = vld [vmem:[#allocation2 + $0x1020] sm:$0xff]
    %v5414 = vld [vmem:[#allocation2 + $0x1028] sm:$0xff]
    %v5415 = vld [vmem:[#allocation2 + $0x1030] sm:$0xff]
    %v5416 = vld [vmem:[#allocation2 + $0x1038] sm:$0xff]
    %v5417 = vld [vmem:[#allocation2 + $0x1040] sm:$0xff]
    %v5418 = vld [vmem:[#allocation2 + $0x1048] sm:$0xff]
    %v5419 = vld [vmem:[#allocation2 + $0x1050] sm:$0xff]
    %v5420 = vld [vmem:[#allocation2 + $0x1058] sm:$0xff]
    %v5421 = vld [vmem:[#allocation2 + $0x1060] sm:$0xff]
    %v5422 = vld [vmem:[#allocation2 + $0x1068] sm:$0xff]
    %v5423 = vld [vmem:[#allocation2 + $0x1070] sm:$0xff]
    %v5424 = vld [vmem:[#allocation2 + $0x1078] sm:$0xff]
    %v5425 = vld [vmem:[#allocation2 + $0x1080] sm:$0xff]
    %v5426 = vld [vmem:[#allocation2 + $0x1088] sm:$0xff]
    %v5427 = vld [vmem:[#allocation2 + $0x1090] sm:$0xff]
    %v5428 = vld [vmem:[#allocation2 + $0x1098] sm:$0xff]
    %v5429 = vld [vmem:[#allocation2 + $0x10a0] sm:$0xff]
    %v5430 = vld [vmem:[#allocation2 + $0x10a8] sm:$0xff]
    %v5431 = vld [vmem:[#allocation2 + $0x10b0] sm:$0xff]
    %v5432 = vld [vmem:[#allocation2 + $0x10b8] sm:$0xff]
    %v5433 = vld [vmem:[#allocation2 + $0x10c0] sm:$0xff]
    %v5434 = vld [vmem:[#allocation2 + $0x10c8] sm:$0xff]
    %v5435 = vld [vmem:[#allocation2 + $0x10d0] sm:$0xff]
    %v5436 = vld [vmem:[#allocation2 + $0x10d8] sm:$0xff]
    %v5437 = vld [vmem:[#allocation2 + $0x10e0] sm:$0xff]
    %v5438 = vld [vmem:[#allocation2 + $0x10e8] sm:$0xff]
    %v5439 = vld [vmem:[#allocation2 + $0x10f0] sm:$0xff]
    %v5440 = vld [vmem:[#allocation2 + $0x10f8] sm:$0xff]
    %v5441 = vld [vmem:[#allocation2 + $0x1100] sm:$0xff]
    %v5442 = vld [vmem:[#allocation2 + $0x1108] sm:$0xff]
    %v5443 = vld [vmem:[#allocation2 + $0x1110] sm:$0xff]
    %v5444 = vld [vmem:[#allocation2 + $0x1118] sm:$0xff]
    %v5445 = vld [vmem:[#allocation2 + $0x1120] sm:$0xff]
    %v5446 = vld [vmem:[#allocation2 + $0x1128] sm:$0xff]
    %v5447 = vld [vmem:[#allocation2 + $0x1130] sm:$0xff]
    %v5448 = vld [vmem:[#allocation2 + $0x1138] sm:$0xff]
    %v5449 = vld [vmem:[#allocation2 + $0x1140] sm:$0xff]
    %v5450 = vld [vmem:[#allocation2 + $0x1148] sm:$0xff]
    %v5451 = vld [vmem:[#allocation2 + $0x1150] sm:$0xff]
    %v5452 = vld [vmem:[#allocation2 + $0x1158] sm:$0xff]
    %v5453 = vld [vmem:[#allocation2 + $0x1160] sm:$0xff]
    %v5454 = vld [vmem:[#allocation2 + $0x1168] sm:$0xff]
    %v5455 = vld [vmem:[#allocation2 + $0x1170] sm:$0xff]
    %v5456 = vld [vmem:[#allocation2 + $0x1178] sm:$0xff]
    %v5457 = vld [vmem:[#allocation2 + $0x1180] sm:$0xff]
    %v5458 = vld [vmem:[#allocation2 + $0x1188] sm:$0xff]
    %v5459 = vld [vmem:[#allocation2 + $0x1190] sm:$0xff]
    %v5460 = vld [vmem:[#allocation2 + $0x1198] sm:$0xff]
    %v5461 = vld [vmem:[#allocation2 + $0x11a0] sm:$0xff]
    %v5462 = vld [vmem:[#allocation2 + $0x11a8] sm:$0xff]
    %v5463 = vld [vmem:[#allocation2 + $0x11b0] sm:$0xff]
    %v5464 = vld [vmem:[#allocation2 + $0x11b8] sm:$0xff]
    %v5465 = vld [vmem:[#allocation2 + $0x11c0] sm:$0xff]
    %v5466 = vld [vmem:[#allocation2 + $0x11c8] sm:$0xff]
    %v5467 = vld [vmem:[#allocation2 + $0x11d0] sm:$0xff]
    %v5468 = vld [vmem:[#allocation2 + $0x11d8] sm:$0xff]
    %v5469 = vld [vmem:[#allocation2 + $0x11e0] sm:$0xff]
    %v5470 = vld [vmem:[#allocation2 + $0x11e8] sm:$0xff]
    %v5471 = vld [vmem:[#allocation2 + $0x11f0] sm:$0xff]
    %v5472 = vld [vmem:[#allocation2 + $0x11f8] sm:$0xff]
    %v5473 = vld [vmem:[#allocation6 + $0x14] sm:$0xf]
    %v5475 = vlaneseq
    %v5476 = vshrl.u32 %v5475, 7
    %v5477 = vsub.s32 0, %v5476
    %v5478 = vrot.slane %v5473, %v5477
    %v5479 = vlaneseq
    %v5480 = vshrl.u32 %v5479, 7
    %v5481 = vsub.s32 1, %v5480
    %v5482 = vrot.slane %v5473, %v5481
    %v5483 = vlaneseq
    %v5484 = vshrl.u32 %v5483, 7
    %v5485 = vsub.s32 2, %v5484
    %v5486 = vrot.slane %v5473, %v5485
    %v5487 = vlaneseq
    %v5488 = vshrl.u32 %v5487, 7
    %v5489 = vsub.s32 3, %v5488
    %v5490 = vrot.slane %v5473, %v5489
    %v5623 = vunpack.c.l.b16 %v5345
    %v5624 = vunpack.c.h.b16 %v5345
    %v5625 = vunpack.c.l.b16 %v5346
    %v5626 = vunpack.c.h.b16 %v5346
    %v5627 = vunpack.c.l.b16 %v5347
    %v5628 = vunpack.c.h.b16 %v5347
    %v5629 = vunpack.c.l.b16 %v5348
    %v5630 = vunpack.c.h.b16 %v5348
    %v5631 = vunpack.c.l.b16 %v5349
    %v5632 = vunpack.c.h.b16 %v5349
    %v5633 = vunpack.c.l.b16 %v5350
    %v5634 = vunpack.c.h.b16 %v5350
    %v5635 = vunpack.c.l.b16 %v5351
    %v5636 = vunpack.c.h.b16 %v5351
    %v5637 = vunpack.c.l.b16 %v5352
    %v5638 = vunpack.c.h.b16 %v5352
    %v5639 = vunpack.c.l.b16 %v5353
    %v5640 = vunpack.c.h.b16 %v5353
    %v5641 = vunpack.c.l.b16 %v5354
    %v5642 = vunpack.c.h.b16 %v5354
    %v5643 = vunpack.c.l.b16 %v5355
    %v5644 = vunpack.c.h.b16 %v5355
    %v5645 = vunpack.c.l.b16 %v5356
    %v5646 = vunpack.c.h.b16 %v5356
    %v5647 = vunpack.c.l.b16 %v5357
    %v5648 = vunpack.c.h.b16 %v5357
    %v5649 = vunpack.c.l.b16 %v5358
    %v5650 = vunpack.c.h.b16 %v5358
    %v5651 = vunpack.c.l.b16 %v5359
    %v5652 = vunpack.c.h.b16 %v5359
    %v5653 = vunpack.c.l.b16 %v5360
    %v5654 = vunpack.c.h.b16 %v5360
    %v5655 = vunpack.c.l.b16 %v5361
    %v5656 = vunpack.c.h.b16 %v5361
    %v5657 = vunpack.c.l.b16 %v5362
    %v5658 = vunpack.c.h.b16 %v5362
    %v5659 = vunpack.c.l.b16 %v5363
    %v5660 = vunpack.c.h.b16 %v5363
    %v5661 = vunpack.c.l.b16 %v5364
    %v5662 = vunpack.c.h.b16 %v5364
    %v5663 = vunpack.c.l.b16 %v5365
    %v5664 = vunpack.c.h.b16 %v5365
    %v5665 = vunpack.c.l.b16 %v5366
    %v5666 = vunpack.c.h.b16 %v5366
    %v5667 = vunpack.c.l.b16 %v5367
    %v5668 = vunpack.c.h.b16 %v5367
    %v5669 = vunpack.c.l.b16 %v5368
    %v5670 = vunpack.c.h.b16 %v5368
    %v5671 = vunpack.c.l.b16 %v5369
    %v5672 = vunpack.c.h.b16 %v5369
    %v5673 = vunpack.c.l.b16 %v5370
    %v5674 = vunpack.c.h.b16 %v5370
    %v5675 = vunpack.c.l.b16 %v5371
    %v5676 = vunpack.c.h.b16 %v5371
    %v5677 = vunpack.c.l.b16 %v5372
    %v5678 = vunpack.c.h.b16 %v5372
    %v5679 = vunpack.c.l.b16 %v5373
    %v5680 = vunpack.c.h.b16 %v5373
    %v5681 = vunpack.c.l.b16 %v5374
    %v5682 = vunpack.c.h.b16 %v5374
    %v5683 = vunpack.c.l.b16 %v5375
    %v5684 = vunpack.c.h.b16 %v5375
    %v5685 = vunpack.c.l.b16 %v5376
    %v5686 = vunpack.c.h.b16 %v5376
    %v5687 = vunpack.c.l.b16 %v5377
    %v5688 = vunpack.c.h.b16 %v5377
    %v5689 = vunpack.c.l.b16 %v5378
    %v5690 = vunpack.c.h.b16 %v5378
    %v5691 = vunpack.c.l.b16 %v5379
    %v5692 = vunpack.c.h.b16 %v5379
    %v5693 = vunpack.c.l.b16 %v5380
    %v5694 = vunpack.c.h.b16 %v5380
    %v5695 = vunpack.c.l.b16 %v5381
    %v5696 = vunpack.c.h.b16 %v5381
    %v5697 = vunpack.c.l.b16 %v5382
    %v5698 = vunpack.c.h.b16 %v5382
    %v5699 = vunpack.c.l.b16 %v5383
    %v5700 = vunpack.c.h.b16 %v5383
    %v5701 = vunpack.c.l.b16 %v5384
    %v5702 = vunpack.c.h.b16 %v5384
    %v5703 = vunpack.c.l.b16 %v5385
    %v5704 = vunpack.c.h.b16 %v5385
    %v5705 = vunpack.c.l.b16 %v5386
    %v5706 = vunpack.c.h.b16 %v5386
    %v5707 = vunpack.c.l.b16 %v5387
    %v5708 = vunpack.c.h.b16 %v5387
    %v5709 = vunpack.c.l.b16 %v5388
    %v5710 = vunpack.c.h.b16 %v5388
    %v5711 = vunpack.c.l.b16 %v5389
    %v5712 = vunpack.c.h.b16 %v5389
    %v5713 = vunpack.c.l.b16 %v5390
    %v5714 = vunpack.c.h.b16 %v5390
    %v5715 = vunpack.c.l.b16 %v5391
    %v5716 = vunpack.c.h.b16 %v5391
    %v5717 = vunpack.c.l.b16 %v5392
    %v5718 = vunpack.c.h.b16 %v5392
    %v5719 = vunpack.c.l.b16 %v5393
    %v5720 = vunpack.c.h.b16 %v5393
    %v5721 = vunpack.c.l.b16 %v5394
    %v5722 = vunpack.c.h.b16 %v5394
    %v5723 = vunpack.c.l.b16 %v5395
    %v5724 = vunpack.c.h.b16 %v5395
    %v5725 = vunpack.c.l.b16 %v5396
    %v5726 = vunpack.c.h.b16 %v5396
    %v5727 = vunpack.c.l.b16 %v5397
    %v5728 = vunpack.c.h.b16 %v5397
    %v5729 = vunpack.c.l.b16 %v5398
    %v5730 = vunpack.c.h.b16 %v5398
    %v5731 = vunpack.c.l.b16 %v5399
    %v5732 = vunpack.c.h.b16 %v5399
    %v5733 = vunpack.c.l.b16 %v5400
    %v5734 = vunpack.c.h.b16 %v5400
    %v5735 = vunpack.c.l.b16 %v5401
    %v5736 = vunpack.c.h.b16 %v5401
    %v5737 = vunpack.c.l.b16 %v5402
    %v5738 = vunpack.c.h.b16 %v5402
    %v5739 = vunpack.c.l.b16 %v5403
    %v5740 = vunpack.c.h.b16 %v5403
    %v5741 = vunpack.c.l.b16 %v5404
    %v5742 = vunpack.c.h.b16 %v5404
    %v5743 = vunpack.c.l.b16 %v5405
    %v5744 = vunpack.c.h.b16 %v5405
    %v5745 = vunpack.c.l.b16 %v5406
    %v5746 = vunpack.c.h.b16 %v5406
    %v5747 = vunpack.c.l.b16 %v5407
    %v5748 = vunpack.c.h.b16 %v5407
    %v5749 = vunpack.c.l.b16 %v5408
    %v5750 = vunpack.c.h.b16 %v5408
    %v5751 = vunpack.c.l.b16 %v5409
    %v5752 = vunpack.c.h.b16 %v5409
    %v5753 = vunpack.c.l.b16 %v5410
    %v5754 = vunpack.c.h.b16 %v5410
    %v5755 = vunpack.c.l.b16 %v5411
    %v5756 = vunpack.c.h.b16 %v5411
    %v5757 = vunpack.c.l.b16 %v5412
    %v5758 = vunpack.c.h.b16 %v5412
    %v5759 = vunpack.c.l.b16 %v5413
    %v5760 = vunpack.c.h.b16 %v5413
    %v5761 = vunpack.c.l.b16 %v5414
    %v5762 = vunpack.c.h.b16 %v5414
    %v5763 = vunpack.c.l.b16 %v5415
    %v5764 = vunpack.c.h.b16 %v5415
    %v5765 = vunpack.c.l.b16 %v5416
    %v5766 = vunpack.c.h.b16 %v5416
    %v5767 = vunpack.c.l.b16 %v5417
    %v5768 = vunpack.c.h.b16 %v5417
    %v5769 = vunpack.c.l.b16 %v5418
    %v5770 = vunpack.c.h.b16 %v5418
    %v5771 = vunpack.c.l.b16 %v5419
    %v5772 = vunpack.c.h.b16 %v5419
    %v5773 = vunpack.c.l.b16 %v5420
    %v5774 = vunpack.c.h.b16 %v5420
    %v5775 = vunpack.c.l.b16 %v5421
    %v5776 = vunpack.c.h.b16 %v5421
    %v5777 = vunpack.c.l.b16 %v5422
    %v5778 = vunpack.c.h.b16 %v5422
    %v5779 = vunpack.c.l.b16 %v5423
    %v5780 = vunpack.c.h.b16 %v5423
    %v5781 = vunpack.c.l.b16 %v5424
    %v5782 = vunpack.c.h.b16 %v5424
    %v5783 = vunpack.c.l.b16 %v5425
    %v5784 = vunpack.c.h.b16 %v5425
    %v5785 = vunpack.c.l.b16 %v5426
    %v5786 = vunpack.c.h.b16 %v5426
    %v5787 = vunpack.c.l.b16 %v5427
    %v5788 = vunpack.c.h.b16 %v5427
    %v5789 = vunpack.c.l.b16 %v5428
    %v5790 = vunpack.c.h.b16 %v5428
    %v5791 = vunpack.c.l.b16 %v5429
    %v5792 = vunpack.c.h.b16 %v5429
    %v5793 = vunpack.c.l.b16 %v5430
    %v5794 = vunpack.c.h.b16 %v5430
    %v5795 = vunpack.c.l.b16 %v5431
    %v5796 = vunpack.c.h.b16 %v5431
    %v5797 = vunpack.c.l.b16 %v5432
    %v5798 = vunpack.c.h.b16 %v5432
    %v5799 = vunpack.c.l.b16 %v5433
    %v5800 = vunpack.c.h.b16 %v5433
    %v5801 = vunpack.c.l.b16 %v5434
    %v5802 = vunpack.c.h.b16 %v5434
    %v5803 = vunpack.c.l.b16 %v5435
    %v5804 = vunpack.c.h.b16 %v5435
    %v5805 = vunpack.c.l.b16 %v5436
    %v5806 = vunpack.c.h.b16 %v5436
    %v5807 = vunpack.c.l.b16 %v5437
    %v5808 = vunpack.c.h.b16 %v5437
    %v5809 = vunpack.c.l.b16 %v5438
    %v5810 = vunpack.c.h.b16 %v5438
    %v5811 = vunpack.c.l.b16 %v5439
    %v5812 = vunpack.c.h.b16 %v5439
    %v5813 = vunpack.c.l.b16 %v5440
    %v5814 = vunpack.c.h.b16 %v5440
    %v5815 = vunpack.c.l.b16 %v5441
    %v5816 = vunpack.c.h.b16 %v5441
    %v5817 = vunpack.c.l.b16 %v5442
    %v5818 = vunpack.c.h.b16 %v5442
    %v5819 = vunpack.c.l.b16 %v5443
    %v5820 = vunpack.c.h.b16 %v5443
    %v5821 = vunpack.c.l.b16 %v5444
    %v5822 = vunpack.c.h.b16 %v5444
    %v5823 = vunpack.c.l.b16 %v5445
    %v5824 = vunpack.c.h.b16 %v5445
    %v5825 = vunpack.c.l.b16 %v5446
    %v5826 = vunpack.c.h.b16 %v5446
    %v5827 = vunpack.c.l.b16 %v5447
    %v5828 = vunpack.c.h.b16 %v5447
    %v5829 = vunpack.c.l.b16 %v5448
    %v5830 = vunpack.c.h.b16 %v5448
    %v5831 = vunpack.c.l.b16 %v5449
    %v5832 = vunpack.c.h.b16 %v5449
    %v5833 = vunpack.c.l.b16 %v5450
    %v5834 = vunpack.c.h.b16 %v5450
    %v5835 = vunpack.c.l.b16 %v5451
    %v5836 = vunpack.c.h.b16 %v5451
    %v5837 = vunpack.c.l.b16 %v5452
    %v5838 = vunpack.c.h.b16 %v5452
    %v5839 = vunpack.c.l.b16 %v5453
    %v5840 = vunpack.c.h.b16 %v5453
    %v5841 = vunpack.c.l.b16 %v5454
    %v5842 = vunpack.c.h.b16 %v5454
    %v5843 = vunpack.c.l.b16 %v5455
    %v5844 = vunpack.c.h.b16 %v5455
    %v5845 = vunpack.c.l.b16 %v5456
    %v5846 = vunpack.c.h.b16 %v5456
    %v5847 = vunpack.c.l.b16 %v5457
    %v5848 = vunpack.c.h.b16 %v5457
    %v5849 = vunpack.c.l.b16 %v5458
    %v5850 = vunpack.c.h.b16 %v5458
    %v5851 = vunpack.c.l.b16 %v5459
    %v5852 = vunpack.c.h.b16 %v5459
    %v5853 = vunpack.c.l.b16 %v5460
    %v5854 = vunpack.c.h.b16 %v5460
    %v5855 = vunpack.c.l.b16 %v5461
    %v5856 = vunpack.c.h.b16 %v5461
    %v5857 = vunpack.c.l.b16 %v5462
    %v5858 = vunpack.c.h.b16 %v5462
    %v5859 = vunpack.c.l.b16 %v5463
    %v5860 = vunpack.c.h.b16 %v5463
    %v5861 = vunpack.c.l.b16 %v5464
    %v5862 = vunpack.c.h.b16 %v5464
    %v5863 = vunpack.c.l.b16 %v5465
    %v5864 = vunpack.c.h.b16 %v5465
    %v5865 = vunpack.c.l.b16 %v5466
    %v5866 = vunpack.c.h.b16 %v5466
    %v5867 = vunpack.c.l.b16 %v5467
    %v5868 = vunpack.c.h.b16 %v5467
    %v5869 = vunpack.c.l.b16 %v5468
    %v5870 = vunpack.c.h.b16 %v5468
    %v5871 = vunpack.c.l.b16 %v5469
    %v5872 = vunpack.c.h.b16 %v5469
    %v5873 = vunpack.c.l.b16 %v5470
    %v5874 = vunpack.c.h.b16 %v5470
    %v5875 = vunpack.c.l.b16 %v5471
    %v5876 = vunpack.c.h.b16 %v5471
    %v5877 = vunpack.c.l.b16 %v5472
    %v5878 = vunpack.c.h.b16 %v5472
    %v5879 = vpack.c.b16 %v5627, %v5623
    %v5880 = vpack.c.b16 %v5628, %v5624
    %v5881 = vpack.c.b16 %v5629, %v5625
    %v5882 = vpack.c.b16 %v5630, %v5626
    %v5883 = vpack.c.b16 %v5635, %v5631
    %v5884 = vpack.c.b16 %v5636, %v5632
    %v5885 = vpack.c.b16 %v5637, %v5633
    %v5886 = vpack.c.b16 %v5638, %v5634
    %v5887 = vpack.c.b16 %v5643, %v5639
    %v5888 = vpack.c.b16 %v5644, %v5640
    %v5889 = vpack.c.b16 %v5645, %v5641
    %v5890 = vpack.c.b16 %v5646, %v5642
    %v5891 = vpack.c.b16 %v5651, %v5647
    %v5892 = vpack.c.b16 %v5652, %v5648
    %v5893 = vpack.c.b16 %v5653, %v5649
    %v5894 = vpack.c.b16 %v5654, %v5650
    %v5895 = vpack.c.b16 %v5659, %v5655
    %v5896 = vpack.c.b16 %v5660, %v5656
    %v5897 = vpack.c.b16 %v5661, %v5657
    %v5898 = vpack.c.b16 %v5662, %v5658
    %v5899 = vpack.c.b16 %v5667, %v5663
    %v5900 = vpack.c.b16 %v5668, %v5664
    %v5901 = vpack.c.b16 %v5669, %v5665
    %v5902 = vpack.c.b16 %v5670, %v5666
    %v5903 = vpack.c.b16 %v5675, %v5671
    %v5904 = vpack.c.b16 %v5676, %v5672
    %v5905 = vpack.c.b16 %v5677, %v5673
    %v5906 = vpack.c.b16 %v5678, %v5674
    %v5907 = vpack.c.b16 %v5683, %v5679
    %v5908 = vpack.c.b16 %v5684, %v5680
    %v5909 = vpack.c.b16 %v5685, %v5681
    %v5910 = vpack.c.b16 %v5686, %v5682
    %v5911 = vpack.c.b16 %v5691, %v5687
    %v5912 = vpack.c.b16 %v5692, %v5688
    %v5913 = vpack.c.b16 %v5693, %v5689
    %v5914 = vpack.c.b16 %v5694, %v5690
    %v5915 = vpack.c.b16 %v5699, %v5695
    %v5916 = vpack.c.b16 %v5700, %v5696
    %v5917 = vpack.c.b16 %v5701, %v5697
    %v5918 = vpack.c.b16 %v5702, %v5698
    %v5919 = vpack.c.b16 %v5707, %v5703
    %v5920 = vpack.c.b16 %v5708, %v5704
    %v5921 = vpack.c.b16 %v5709, %v5705
    %v5922 = vpack.c.b16 %v5710, %v5706
    %v5923 = vpack.c.b16 %v5715, %v5711
    %v5924 = vpack.c.b16 %v5716, %v5712
    %v5925 = vpack.c.b16 %v5717, %v5713
    %v5926 = vpack.c.b16 %v5718, %v5714
    %v5927 = vpack.c.b16 %v5723, %v5719
    %v5928 = vpack.c.b16 %v5724, %v5720
    %v5929 = vpack.c.b16 %v5725, %v5721
    %v5930 = vpack.c.b16 %v5726, %v5722
    %v5931 = vpack.c.b16 %v5731, %v5727
    %v5932 = vpack.c.b16 %v5732, %v5728
    %v5933 = vpack.c.b16 %v5733, %v5729
    %v5934 = vpack.c.b16 %v5734, %v5730
    %v5935 = vpack.c.b16 %v5739, %v5735
    %v5936 = vpack.c.b16 %v5740, %v5736
    %v5937 = vpack.c.b16 %v5741, %v5737
    %v5938 = vpack.c.b16 %v5742, %v5738
    %v5939 = vpack.c.b16 %v5747, %v5743
    %v5940 = vpack.c.b16 %v5748, %v5744
    %v5941 = vpack.c.b16 %v5749, %v5745
    %v5942 = vpack.c.b16 %v5750, %v5746
    %v5943 = vpack.c.b16 %v5755, %v5751
    %v5944 = vpack.c.b16 %v5756, %v5752
    %v5945 = vpack.c.b16 %v5757, %v5753
    %v5946 = vpack.c.b16 %v5758, %v5754
    %v5947 = vpack.c.b16 %v5763, %v5759
    %v5948 = vpack.c.b16 %v5764, %v5760
    %v5949 = vpack.c.b16 %v5765, %v5761
    %v5950 = vpack.c.b16 %v5766, %v5762
    %v5951 = vpack.c.b16 %v5771, %v5767
    %v5952 = vpack.c.b16 %v5772, %v5768
    %v5953 = vpack.c.b16 %v5773, %v5769
    %v5954 = vpack.c.b16 %v5774, %v5770
    %v5955 = vpack.c.b16 %v5779, %v5775
    %v5956 = vpack.c.b16 %v5780, %v5776
    %v5957 = vpack.c.b16 %v5781, %v5777
    %v5958 = vpack.c.b16 %v5782, %v5778
    %v5959 = vpack.c.b16 %v5787, %v5783
    %v5960 = vpack.c.b16 %v5788, %v5784
    %v5961 = vpack.c.b16 %v5789, %v5785
    %v5962 = vpack.c.b16 %v5790, %v5786
    %v5963 = vpack.c.b16 %v5795, %v5791
    %v5964 = vpack.c.b16 %v5796, %v5792
    %v5965 = vpack.c.b16 %v5797, %v5793
    %v5966 = vpack.c.b16 %v5798, %v5794
    %v5967 = vpack.c.b16 %v5803, %v5799
    %v5968 = vpack.c.b16 %v5804, %v5800
    %v5969 = vpack.c.b16 %v5805, %v5801
    %v5970 = vpack.c.b16 %v5806, %v5802
    %v5971 = vpack.c.b16 %v5811, %v5807
    %v5972 = vpack.c.b16 %v5812, %v5808
    %v5973 = vpack.c.b16 %v5813, %v5809
    %v5974 = vpack.c.b16 %v5814, %v5810
    %v5975 = vpack.c.b16 %v5819, %v5815
    %v5976 = vpack.c.b16 %v5820, %v5816
    %v5977 = vpack.c.b16 %v5821, %v5817
    %v5978 = vpack.c.b16 %v5822, %v5818
    %v5979 = vpack.c.b16 %v5827, %v5823
    %v5980 = vpack.c.b16 %v5828, %v5824
    %v5981 = vpack.c.b16 %v5829, %v5825
    %v5982 = vpack.c.b16 %v5830, %v5826
    %v5983 = vpack.c.b16 %v5835, %v5831
    %v5984 = vpack.c.b16 %v5836, %v5832
    %v5985 = vpack.c.b16 %v5837, %v5833
    %v5986 = vpack.c.b16 %v5838, %v5834
    %v5987 = vpack.c.b16 %v5843, %v5839
    %v5988 = vpack.c.b16 %v5844, %v5840
    %v5989 = vpack.c.b16 %v5845, %v5841
    %v5990 = vpack.c.b16 %v5846, %v5842
    %v5991 = vpack.c.b16 %v5851, %v5847
    %v5992 = vpack.c.b16 %v5852, %v5848
    %v5993 = vpack.c.b16 %v5853, %v5849
    %v5994 = vpack.c.b16 %v5854, %v5850
    %v5995 = vpack.c.b16 %v5859, %v5855
    %v5996 = vpack.c.b16 %v5860, %v5856
    %v5997 = vpack.c.b16 %v5861, %v5857
    %v5998 = vpack.c.b16 %v5862, %v5858
    %v5999 = vpack.c.b16 %v5867, %v5863
    %v6000 = vpack.c.b16 %v5868, %v5864
    %v6001 = vpack.c.b16 %v5869, %v5865
    %v6002 = vpack.c.b16 %v5870, %v5866
    %v6003 = vpack.c.b16 %v5875, %v5871
    %v6004 = vpack.c.b16 %v5876, %v5872
    %v6005 = vpack.c.b16 %v5877, %v5873
    %v6006 = vpack.c.b16 %v5878, %v5874
    %6135 = vmatprep.subr.bf16.mxu0 %v5880
    %6136 = vmatpush1.bf16.msra.mxu0 %v5879
    %6137 = vmatprep.subr.bf16.mxu0 %v5884
    %6138 = vmatpush1.bf16.msra.mxu0 %v5883
    %6139 = vmatprep.subr.bf16.mxu0 %v5888
    %6140 = vmatpush1.bf16.msra.mxu0 %v5887
    %6141 = vmatprep.subr.bf16.mxu0 %v5892
    %6142 = vmatpush1.bf16.msra.mxu0 %v5891
    %6143 = vmatprep.subr.bf16.mxu0 %v5896
    %6144 = vmatpush1.bf16.msra.mxu0 %v5895
    %6145 = vmatprep.subr.bf16.mxu0 %v5900
    %6146 = vmatpush1.bf16.msra.mxu0 %v5899
    %6147 = vmatprep.subr.bf16.mxu0 %v5904
    %6148 = vmatpush1.bf16.msra.mxu0 %v5903
    %6149 = vmatprep.subr.bf16.mxu0 %v5908
    %6150 = vmatpush1.bf16.msra.mxu0 %v5907
    %6151 = vmatprep.subr.bf16.mxu0 %v5912
    %6152 = vmatpush1.bf16.msra.mxu0 %v5911
    %6153 = vmatprep.subr.bf16.mxu0 %v5916
    %6154 = vmatpush1.bf16.msra.mxu0 %v5915
    %6155 = vmatprep.subr.bf16.mxu0 %v5920
    %6156 = vmatpush1.bf16.msra.mxu0 %v5919
    %6157 = vmatprep.subr.bf16.mxu0 %v5924
    %6158 = vmatpush1.bf16.msra.mxu0 %v5923
    %6159 = vmatprep.subr.bf16.mxu0 %v5928
    %6160 = vmatpush1.bf16.msra.mxu0 %v5927
    %6161 = vmatprep.subr.bf16.mxu0 %v5932
    %6162 = vmatpush1.bf16.msra.mxu0 %v5931
    %6163 = vmatprep.subr.bf16.mxu0 %v5936
    %6164 = vmatpush1.bf16.msra.mxu0 %v5935
    %6165 = vmatprep.subr.bf16.mxu0 %v5940
    %6166 = vmatpush1.bf16.msra.mxu0 %v5939
    %6167 = vmatprep.mubr.bf16.mxu0 %v5342
    %6168 = vmatmul.mubr.bf16.gmra.mrb[0].mxu0 %v5341
    %v6169 = vpop.f32.mrb[0].mxu0
    %v6170 = vadd.f32 %v5478, %v6169
    %v6171 = vpop.f32.mrb[0].mxu0
    %v6172 = vadd.f32 %v5482, %v6171
    %v6173 = vpop.f32.mrb[0].mxu0
    %v6174 = vpop.f32.mrb[0].mxu0
    %6175 = vdwg.mxu0
    %6176 = vmatprep.subr.bf16.mxu0 %v5944
    %6177 = vmatpush1.bf16.msra.mxu0 %v5943
    %6178 = vmatprep.subr.bf16.mxu0 %v5948
    %6179 = vmatpush1.bf16.msra.mxu0 %v5947
    %6180 = vmatprep.subr.bf16.mxu0 %v5952
    %6181 = vmatpush1.bf16.msra.mxu0 %v5951
    %6182 = vmatprep.subr.bf16.mxu0 %v5956
    %6183 = vmatpush1.bf16.msra.mxu0 %v5955
    %6184 = vmatprep.subr.bf16.mxu0 %v5960
    %6185 = vmatpush1.bf16.msra.mxu0 %v5959
    %6186 = vmatprep.subr.bf16.mxu0 %v5964
    %6187 = vmatpush1.bf16.msra.mxu0 %v5963
    %6188 = vmatprep.subr.bf16.mxu0 %v5968
    %6189 = vmatpush1.bf16.msra.mxu0 %v5967
    %6190 = vmatprep.subr.bf16.mxu0 %v5972
    %6191 = vmatpush1.bf16.msra.mxu0 %v5971
    %6192 = vmatprep.subr.bf16.mxu0 %v5976
    %6193 = vmatpush1.bf16.msra.mxu0 %v5975
    %6194 = vmatprep.subr.bf16.mxu0 %v5980
    %6195 = vmatpush1.bf16.msra.mxu0 %v5979
    %6196 = vmatprep.subr.bf16.mxu0 %v5984
    %6197 = vmatpush1.bf16.msra.mxu0 %v5983
    %6198 = vmatprep.subr.bf16.mxu0 %v5988
    %6199 = vmatpush1.bf16.msra.mxu0 %v5987
    %6200 = vmatprep.subr.bf16.mxu0 %v5992
    %6201 = vmatpush1.bf16.msra.mxu0 %v5991
    %6202 = vmatprep.subr.bf16.mxu0 %v5996
    %6203 = vmatpush1.bf16.msra.mxu0 %v5995
    %6204 = vmatprep.subr.bf16.mxu0 %v6000
    %6205 = vmatpush1.bf16.msra.mxu0 %v5999
    %6206 = vmatprep.subr.bf16.mxu0 %v6004
    %6207 = vmatpush1.bf16.msra.mxu0 %v6003
    %6208 = vmatprep.mubr.bf16.mxu0 %v5344
    %6209 = vmatmul.mubr.bf16.gmra.mrb[0].mxu0 %v5343
    %v6210 = vpop.f32.mrb[0].mxu0
    %v6211 = vadd.f32 %v6170, %v6210
    %v6212 = vpop.f32.mrb[0].mxu0
    %v6213 = vadd.f32 %v6172, %v6212
    %v6214 = vpop.f32.mrb[0].mxu0
    %v6215 = vpop.f32.mrb[0].mxu0
    %6216 = vdwg.mxu0
    %6217 = vmatprep.subr.bf16.mxu0 %v5882
    %6218 = vmatpush1.bf16.msra.mxu0 %v5881
    %6219 = vmatprep.subr.bf16.mxu0 %v5886
    %6220 = vmatpush1.bf16.msra.mxu0 %v5885
    %6221 = vmatprep.subr.bf16.mxu0 %v5890
    %6222 = vmatpush1.bf16.msra.mxu0 %v5889
    %6223 = vmatprep.subr.bf16.mxu0 %v5894
    %6224 = vmatpush1.bf16.msra.mxu0 %v5893
    %6225 = vmatprep.subr.bf16.mxu0 %v5898
    %6226 = vmatpush1.bf16.msra.mxu0 %v5897
    %6227 = vmatprep.subr.bf16.mxu0 %v5902
    %6228 = vmatpush1.bf16.msra.mxu0 %v5901
    %6229 = vmatprep.subr.bf16.mxu0 %v5906
    %6230 = vmatpush1.bf16.msra.mxu0 %v5905
    %6231 = vmatprep.subr.bf16.mxu0 %v5910
    %6232 = vmatpush1.bf16.msra.mxu0 %v5909
    %6233 = vmatprep.subr.bf16.mxu0 %v5914
    %6234 = vmatpush1.bf16.msra.mxu0 %v5913
    %6235 = vmatprep.subr.bf16.mxu0 %v5918
    %6236 = vmatpush1.bf16.msra.mxu0 %v5917
    %6237 = vmatprep.subr.bf16.mxu0 %v5922
    %6238 = vmatpush1.bf16.msra.mxu0 %v5921
    %6239 = vmatprep.subr.bf16.mxu0 %v5926
    %6240 = vmatpush1.bf16.msra.mxu0 %v5925
    %6241 = vmatprep.subr.bf16.mxu0 %v5930
    %6242 = vmatpush1.bf16.msra.mxu0 %v5929
    %6243 = vmatprep.subr.bf16.mxu0 %v5934
    %6244 = vmatpush1.bf16.msra.mxu0 %v5933
    %6245 = vmatprep.subr.bf16.mxu0 %v5938
    %6246 = vmatpush1.bf16.msra.mxu0 %v5937
    %6247 = vmatprep.subr.bf16.mxu0 %v5942
    %6248 = vmatpush1.bf16.msra.mxu0 %v5941
    %6249 = vmatprep.mubr.bf16.mxu0 %v5342
    %6250 = vmatmul.mubr.bf16.gmra.mrb[0].mxu0 %v5341
    %v6251 = vpop.f32.mrb[0].mxu0
    %v6252 = vadd.f32 %v5486, %v6251
    %v6253 = vpop.f32.mrb[0].mxu0
    %v6254 = vadd.f32 %v5490, %v6253
    %v6255 = vpop.f32.mrb[0].mxu0
    %v6256 = vpop.f32.mrb[0].mxu0
    %6257 = vdwg.mxu0
    %6258 = vmatprep.subr.bf16.mxu0 %v5946
    %6259 = vmatpush1.bf16.msra.mxu0 %v5945
    %6260 = vmatprep.subr.bf16.mxu0 %v5950
    %6261 = vmatpush1.bf16.msra.mxu0 %v5949
    %6262 = vmatprep.subr.bf16.mxu0 %v5954
    %6263 = vmatpush1.bf16.msra.mxu0 %v5953
    %6264 = vmatprep.subr.bf16.mxu0 %v5958
    %6265 = vmatpush1.bf16.msra.mxu0 %v5957
    %6266 = vmatprep.subr.bf16.mxu0 %v5962
    %6267 = vmatpush1.bf16.msra.mxu0 %v5961
    %6268 = vmatprep.subr.bf16.mxu0 %v5966
    %6269 = vmatpush1.bf16.msra.mxu0 %v5965
    %6270 = vmatprep.subr.bf16.mxu0 %v5970
    %6271 = vmatpush1.bf16.msra.mxu0 %v5969
    %6272 = vmatprep.subr.bf16.mxu0 %v5974
    %6273 = vmatpush1.bf16.msra.mxu0 %v5973
    %6274 = vmatprep.subr.bf16.mxu0 %v5978
    %6275 = vmatpush1.bf16.msra.mxu0 %v5977
    %6276 = vmatprep.subr.bf16.mxu0 %v5982
    %6277 = vmatpush1.bf16.msra.mxu0 %v5981
    %6278 = vmatprep.subr.bf16.mxu0 %v5986
    %6279 = vmatpush1.bf16.msra.mxu0 %v5985
    %6280 = vmatprep.subr.bf16.mxu0 %v5990
    %6281 = vmatpush1.bf16.msra.mxu0 %v5989
    %6282 = vmatprep.subr.bf16.mxu0 %v5994
    %6283 = vmatpush1.bf16.msra.mxu0 %v5993
    %6284 = vmatprep.subr.bf16.mxu0 %v5998
    %6285 = vmatpush1.bf16.msra.mxu0 %v5997
    %6286 = vmatprep.subr.bf16.mxu0 %v6002
    %6287 = vmatpush1.bf16.msra.mxu0 %v6001
    %6288 = vmatprep.subr.bf16.mxu0 %v6006
    %6289 = vmatpush1.bf16.msra.mxu0 %v6005
    %6290 = vmatprep.mubr.bf16.mxu0 %v5344
    %6291 = vmatmul.mubr.bf16.gmra.mrb[0].mxu0 %v5343
    %v6292 = vpop.f32.mrb[0].mxu0
    %v6293 = vadd.f32 %v6252, %v6292
    %v6294 = vpop.f32.mrb[0].mxu0
    %v6295 = vadd.f32 %v6254, %v6294
    %v6296 = vpop.f32.mrb[0].mxu0
    %v6297 = vpop.f32.mrb[0].mxu0
    %6298 = vdwg.mxu0
    %v6299 = vtanh.pop %v6211
    %v6300 = vtanh.pop %v6213
    %v6301 = vtanh.pop %v6293
    %v6302 = vtanh.pop %v6295
    %v6303 = vpack.c.bf16 %v6299, %v6299
    %v6304 = vpack.c.bf16 %v6300, %v6300
    %v6305 = vpack.c.bf16 %v6301, %v6301
    %v6306 = vpack.c.bf16 %v6302, %v6302
    %v6307 = vld [vmem:[#allocation2 + $0x1200] sm:$0xf]
    %v6308 = vld [vmem:[#allocation2 + $0x1210] sm:$0xf]
    %v6309 = vld [vmem:[#allocation2 + $0x1220] sm:$0xf]
    %v6310 = vld [vmem:[#allocation2 + $0x1230] sm:$0xf]
    %v6311 = vld [vmem:[#allocation2 + $0x1240] sm:$0xf]
    %v6312 = vld [vmem:[#allocation2 + $0x1250] sm:$0xf]
    %v6313 = vld [vmem:[#allocation2 + $0x1260] sm:$0xf]
    %v6314 = vld [vmem:[#allocation2 + $0x1270] sm:$0xf]
    %v6315 = vld [vmem:[#allocation2 + $0x1280] sm:$0xf]
    %v6316 = vld [vmem:[#allocation2 + $0x1290] sm:$0xf]
    %v6317 = vld [vmem:[#allocation2 + $0x12a0] sm:$0xf]
    %v6318 = vld [vmem:[#allocation2 + $0x12b0] sm:$0xf]
    %v6319 = vld [vmem:[#allocation2 + $0x12c0] sm:$0xf]
    %v6320 = vld [vmem:[#allocation2 + $0x12d0] sm:$0xf]
    %v6321 = vld [vmem:[#allocation2 + $0x12e0] sm:$0xf]
    %v6322 = vld [vmem:[#allocation2 + $0x12f0] sm:$0xf]
    %v6323 = vld [vmem:[#allocation2 + $0x1300] sm:$0xf]
    %v6324 = vld [vmem:[#allocation2 + $0x1310] sm:$0xf]
    %v6325 = vld [vmem:[#allocation2 + $0x1320] sm:$0xf]
    %v6326 = vld [vmem:[#allocation2 + $0x1330] sm:$0xf]
    %v6327 = vld [vmem:[#allocation2 + $0x1340] sm:$0xf]
    %v6328 = vld [vmem:[#allocation2 + $0x1350] sm:$0xf]
    %v6329 = vld [vmem:[#allocation2 + $0x1360] sm:$0xf]
    %v6330 = vld [vmem:[#allocation2 + $0x1370] sm:$0xf]
    %v6331 = vld [vmem:[#allocation2 + $0x1380] sm:$0xf]
    %v6332 = vld [vmem:[#allocation2 + $0x1390] sm:$0xf]
    %v6333 = vld [vmem:[#allocation2 + $0x13a0] sm:$0xf]
    %v6334 = vld [vmem:[#allocation2 + $0x13b0] sm:$0xf]
    %v6335 = vld [vmem:[#allocation2 + $0x13c0] sm:$0xf]
    %v6336 = vld [vmem:[#allocation2 + $0x13d0] sm:$0xf]
    %v6337 = vld [vmem:[#allocation2 + $0x13e0] sm:$0xf]
    %v6338 = vld [vmem:[#allocation2 + $0x13f0] sm:$0xf]
    %v6339 = vld [vmem:[#allocation2 + $0x1400] sm:$0xf]
    %v6340 = vld [vmem:[#allocation2 + $0x1410] sm:$0xf]
    %v6341 = vld [vmem:[#allocation2 + $0x1420] sm:$0xf]
    %v6342 = vld [vmem:[#allocation2 + $0x1430] sm:$0xf]
    %v6343 = vld [vmem:[#allocation2 + $0x1440] sm:$0xf]
    %v6344 = vld [vmem:[#allocation2 + $0x1450] sm:$0xf]
    %v6345 = vld [vmem:[#allocation2 + $0x1460] sm:$0xf]
    %v6346 = vld [vmem:[#allocation2 + $0x1470] sm:$0xf]
    %v6347 = vld [vmem:[#allocation2 + $0x1480] sm:$0xf]
    %v6348 = vld [vmem:[#allocation2 + $0x1490] sm:$0xf]
    %v6349 = vld [vmem:[#allocation2 + $0x14a0] sm:$0xf]
    %v6350 = vld [vmem:[#allocation2 + $0x14b0] sm:$0xf]
    %v6351 = vld [vmem:[#allocation2 + $0x14c0] sm:$0xf]
    %v6352 = vld [vmem:[#allocation2 + $0x14d0] sm:$0xf]
    %v6353 = vld [vmem:[#allocation2 + $0x14e0] sm:$0xf]
    %v6354 = vld [vmem:[#allocation2 + $0x14f0] sm:$0xf]
    %v6355 = vld [vmem:[#allocation2 + $0x1500] sm:$0xf]
    %v6356 = vld [vmem:[#allocation2 + $0x1510] sm:$0xf]
    %v6357 = vld [vmem:[#allocation2 + $0x1520] sm:$0xf]
    %v6358 = vld [vmem:[#allocation2 + $0x1530] sm:$0xf]
    %v6359 = vld [vmem:[#allocation2 + $0x1540] sm:$0xf]
    %v6360 = vld [vmem:[#allocation2 + $0x1550] sm:$0xf]
    %v6361 = vld [vmem:[#allocation2 + $0x1560] sm:$0xf]
    %v6362 = vld [vmem:[#allocation2 + $0x1570] sm:$0xf]
    %v6363 = vld [vmem:[#allocation2 + $0x1580] sm:$0xf]
    %v6364 = vld [vmem:[#allocation2 + $0x1590] sm:$0xf]
    %v6365 = vld [vmem:[#allocation2 + $0x15a0] sm:$0xf]
    %v6366 = vld [vmem:[#allocation2 + $0x15b0] sm:$0xf]
    %v6367 = vld [vmem:[#allocation2 + $0x15c0] sm:$0xf]
    %v6368 = vld [vmem:[#allocation2 + $0x15d0] sm:$0xf]
    %v6369 = vld [vmem:[#allocation2 + $0x15e0] sm:$0xf]
    %v6370 = vld [vmem:[#allocation2 + $0x15f0] sm:$0xf]
    %v6371 = vld [vmem:[#allocation6 + $0x18] sm:$0x1]
    %v6373 = vlaneseq
    %v6374 = vshrl.u32 %v6373, 7
    %v6375 = vsub.s32 0, %v6374
    %v6376 = vrot.slane %v6371, %v6375
    %v6442 = vunpack.c.l.b16 %v6307
    %v6443 = vunpack.c.l.b16 %v6308
    %v6444 = vunpack.c.l.b16 %v6309
    %v6445 = vunpack.c.l.b16 %v6310
    %v6446 = vunpack.c.l.b16 %v6311
    %v6447 = vunpack.c.l.b16 %v6312
    %v6448 = vunpack.c.l.b16 %v6313
    %v6449 = vunpack.c.l.b16 %v6314
    %v6450 = vunpack.c.l.b16 %v6315
    %v6451 = vunpack.c.l.b16 %v6316
    %v6452 = vunpack.c.l.b16 %v6317
    %v6453 = vunpack.c.l.b16 %v6318
    %v6454 = vunpack.c.l.b16 %v6319
    %v6455 = vunpack.c.l.b16 %v6320
    %v6456 = vunpack.c.l.b16 %v6321
    %v6457 = vunpack.c.l.b16 %v6322
    %v6458 = vunpack.c.l.b16 %v6323
    %v6459 = vunpack.c.l.b16 %v6324
    %v6460 = vunpack.c.l.b16 %v6325
    %v6461 = vunpack.c.l.b16 %v6326
    %v6462 = vunpack.c.l.b16 %v6327
    %v6463 = vunpack.c.l.b16 %v6328
    %v6464 = vunpack.c.l.b16 %v6329
    %v6465 = vunpack.c.l.b16 %v6330
    %v6466 = vunpack.c.l.b16 %v6331
    %v6467 = vunpack.c.l.b16 %v6332
    %v6468 = vunpack.c.l.b16 %v6333
    %v6469 = vunpack.c.l.b16 %v6334
    %v6470 = vunpack.c.l.b16 %v6335
    %v6471 = vunpack.c.l.b16 %v6336
    %v6472 = vunpack.c.l.b16 %v6337
    %v6473 = vunpack.c.l.b16 %v6338
    %v6474 = vunpack.c.l.b16 %v6339
    %v6475 = vunpack.c.l.b16 %v6340
    %v6476 = vunpack.c.l.b16 %v6341
    %v6477 = vunpack.c.l.b16 %v6342
    %v6478 = vunpack.c.l.b16 %v6343
    %v6479 = vunpack.c.l.b16 %v6344
    %v6480 = vunpack.c.l.b16 %v6345
    %v6481 = vunpack.c.l.b16 %v6346
    %v6482 = vunpack.c.l.b16 %v6347
    %v6483 = vunpack.c.l.b16 %v6348
    %v6484 = vunpack.c.l.b16 %v6349
    %v6485 = vunpack.c.l.b16 %v6350
    %v6486 = vunpack.c.l.b16 %v6351
    %v6487 = vunpack.c.l.b16 %v6352
    %v6488 = vunpack.c.l.b16 %v6353
    %v6489 = vunpack.c.l.b16 %v6354
    %v6490 = vunpack.c.l.b16 %v6355
    %v6491 = vunpack.c.l.b16 %v6356
    %v6492 = vunpack.c.l.b16 %v6357
    %v6493 = vunpack.c.l.b16 %v6358
    %v6494 = vunpack.c.l.b16 %v6359
    %v6495 = vunpack.c.l.b16 %v6360
    %v6496 = vunpack.c.l.b16 %v6361
    %v6497 = vunpack.c.l.b16 %v6362
    %v6498 = vunpack.c.l.b16 %v6363
    %v6499 = vunpack.c.l.b16 %v6364
    %v6500 = vunpack.c.l.b16 %v6365
    %v6501 = vunpack.c.l.b16 %v6366
    %v6502 = vunpack.c.l.b16 %v6367
    %v6503 = vunpack.c.l.b16 %v6368
    %v6504 = vunpack.c.l.b16 %v6369
    %v6505 = vunpack.c.l.b16 %v6370
    %v6506 = vpack.c.b16 %v6443, %v6442
    %v6507 = vpack.c.b16 %v6445, %v6444
    %v6508 = vpack.c.b16 %v6447, %v6446
    %v6509 = vpack.c.b16 %v6449, %v6448
    %v6510 = vpack.c.b16 %v6451, %v6450
    %v6511 = vpack.c.b16 %v6453, %v6452
    %v6512 = vpack.c.b16 %v6455, %v6454
    %v6513 = vpack.c.b16 %v6457, %v6456
    %v6514 = vpack.c.b16 %v6459, %v6458
    %v6515 = vpack.c.b16 %v6461, %v6460
    %v6516 = vpack.c.b16 %v6463, %v6462
    %v6517 = vpack.c.b16 %v6465, %v6464
    %v6518 = vpack.c.b16 %v6467, %v6466
    %v6519 = vpack.c.b16 %v6469, %v6468
    %v6520 = vpack.c.b16 %v6471, %v6470
    %v6521 = vpack.c.b16 %v6473, %v6472
    %v6522 = vpack.c.b16 %v6475, %v6474
    %v6523 = vpack.c.b16 %v6477, %v6476
    %v6524 = vpack.c.b16 %v6479, %v6478
    %v6525 = vpack.c.b16 %v6481, %v6480
    %v6526 = vpack.c.b16 %v6483, %v6482
    %v6527 = vpack.c.b16 %v6485, %v6484
    %v6528 = vpack.c.b16 %v6487, %v6486
    %v6529 = vpack.c.b16 %v6489, %v6488
    %v6530 = vpack.c.b16 %v6491, %v6490
    %v6531 = vpack.c.b16 %v6493, %v6492
    %v6532 = vpack.c.b16 %v6495, %v6494
    %v6533 = vpack.c.b16 %v6497, %v6496
    %v6534 = vpack.c.b16 %v6499, %v6498
    %v6535 = vpack.c.b16 %v6501, %v6500
    %v6536 = vpack.c.b16 %v6503, %v6502
    %v6537 = vpack.c.b16 %v6505, %v6504
    %6570 = vmatprep.subr.bf16.mxu0 0
    %6571 = vmatpush1.bf16.msra.mxu0 %v6506
    %6572 = vmatprep.subr.bf16.mxu0 0
    %6573 = vmatpush1.bf16.msra.mxu0 %v6507
    %6574 = vmatprep.subr.bf16.mxu0 0
    %6575 = vmatpush1.bf16.msra.mxu0 %v6508
    %6576 = vmatprep.subr.bf16.mxu0 0
    %6577 = vmatpush1.bf16.msra.mxu0 %v6509
    %6578 = vmatprep.subr.bf16.mxu0 0
    %6579 = vmatpush1.bf16.msra.mxu0 %v6510
    %6580 = vmatprep.subr.bf16.mxu0 0
    %6581 = vmatpush1.bf16.msra.mxu0 %v6511
    %6582 = vmatprep.subr.bf16.mxu0 0
    %6583 = vmatpush1.bf16.msra.mxu0 %v6512
    %6584 = vmatprep.subr.bf16.mxu0 0
    %6585 = vmatpush1.bf16.msra.mxu0 %v6513
    %6586 = vmatprep.subr.bf16.mxu0 0
    %6587 = vmatpush1.bf16.msra.mxu0 %v6514
    %6588 = vmatprep.subr.bf16.mxu0 0
    %6589 = vmatpush1.bf16.msra.mxu0 %v6515
    %6590 = vmatprep.subr.bf16.mxu0 0
    %6591 = vmatpush1.bf16.msra.mxu0 %v6516
    %6592 = vmatprep.subr.bf16.mxu0 0
    %6593 = vmatpush1.bf16.msra.mxu0 %v6517
    %6594 = vmatprep.subr.bf16.mxu0 0
    %6595 = vmatpush1.bf16.msra.mxu0 %v6518
    %6596 = vmatprep.subr.bf16.mxu0 0
    %6597 = vmatpush1.bf16.msra.mxu0 %v6519
    %6598 = vmatprep.subr.bf16.mxu0 0
    %6599 = vmatpush1.bf16.msra.mxu0 %v6520
    %6600 = vmatprep.subr.bf16.mxu0 0
    %6601 = vmatpush1.bf16.msra.mxu0 %v6521
    %6602 = vmatprep.mubr.bf16.mxu0 %v6304
    %6603 = vmatmul.mubr.bf16.gmra.mrb[0].mxu0 %v6303
    %v6604 = vpop.f32.mrb[0].mxu0
    %v6605 = vadd.f32 %v6376, %v6604
    %v6606 = vpop.f32.mrb[0].mxu0
    %v6607 = vpop.f32.mrb[0].mxu0
    %v6608 = vpop.f32.mrb[0].mxu0
    %6609 = vdwg.mxu0
    %6610 = vmatprep.subr.bf16.mxu0 0
    %6611 = vmatpush1.bf16.msra.mxu0 %v6522
    %6612 = vmatprep.subr.bf16.mxu0 0
    %6613 = vmatpush1.bf16.msra.mxu0 %v6523
    %6614 = vmatprep.subr.bf16.mxu0 0
    %6615 = vmatpush1.bf16.msra.mxu0 %v6524
    %6616 = vmatprep.subr.bf16.mxu0 0
    %6617 = vmatpush1.bf16.msra.mxu0 %v6525
    %6618 = vmatprep.subr.bf16.mxu0 0
    %6619 = vmatpush1.bf16.msra.mxu0 %v6526
    %6620 = vmatprep.subr.bf16.mxu0 0
    %6621 = vmatpush1.bf16.msra.mxu0 %v6527
    %6622 = vmatprep.subr.bf16.mxu0 0
    %6623 = vmatpush1.bf16.msra.mxu0 %v6528
    %6624 = vmatprep.subr.bf16.mxu0 0
    %6625 = vmatpush1.bf16.msra.mxu0 %v6529
    %6626 = vmatprep.subr.bf16.mxu0 0
    %6627 = vmatpush1.bf16.msra.mxu0 %v6530
    %6628 = vmatprep.subr.bf16.mxu0 0
    %6629 = vmatpush1.bf16.msra.mxu0 %v6531
    %6630 = vmatprep.subr.bf16.mxu0 0
    %6631 = vmatpush1.bf16.msra.mxu0 %v6532
    %6632 = vmatprep.subr.bf16.mxu0 0
    %6633 = vmatpush1.bf16.msra.mxu0 %v6533
    %6634 = vmatprep.subr.bf16.mxu0 0
    %6635 = vmatpush1.bf16.msra.mxu0 %v6534
    %6636 = vmatprep.subr.bf16.mxu0 0
    %6637 = vmatpush1.bf16.msra.mxu0 %v6535
    %6638 = vmatprep.subr.bf16.mxu0 0
    %6639 = vmatpush1.bf16.msra.mxu0 %v6536
    %6640 = vmatprep.subr.bf16.mxu0 0
    %6641 = vmatpush1.bf16.msra.mxu0 %v6537
    %6642 = vmatprep.mubr.bf16.mxu0 %v6306
    %6643 = vmatmul.mubr.bf16.gmra.mrb[0].mxu0 %v6305
    %v6644 = vpop.f32.mrb[0].mxu0
    %v6645 = vadd.f32 %v6605, %v6644
    %v6646 = vpop.f32.mrb[0].mxu0
    %v6647 = vpop.f32.mrb[0].mxu0
    %v6648 = vpop.f32.mrb[0].mxu0
    %6649 = vdwg.mxu0
    %6650 = vst [vmem:[%s5] sm:$0xff] %v6645
    // Predicated region
    $region30: #{forward.1} parent=1 // pred_check
      _
    $region31: #{forward.1} parent=1 // pred_check_branch
      %6652 = sbr.rel (0) target = $region33
    $region32: #{forward.1} parent=1 // pred_region
      _
    $region33: #{forward.1} parent=1 // pred_fallthru
      _
    // Predicated region
    $region34: #{forward.1} parent=1 // pred_check
      _
    $region35: #{forward.1} parent=1 // pred_check_branch
      %6654 = sbr.rel (0) target = $region37
    $region36: #{forward.1} parent=1 // pred_region
      _
    $region37: #{forward.1} parent=1 // pred_fallthru
      _
    // Predicated region
    $region38: #{forward.1} parent=1 // pred_check
      _
    $region39: #{forward.1} parent=1 // pred_check_branch
      %6656 = sbr.rel (0) target = $region41
    $region40: #{forward.1} parent=1 // pred_region
      _
    $region41: #{forward.1} parent=1 // pred_fallthru
      _
    // Predicated region
    $region42: #{forward.1} parent=1 // pred_check
      _
    $region43: #{forward.1} parent=1 // pred_check_branch
      %6658 = sbr.rel (0) target = $region45
    $region44: #{forward.1} parent=1 // pred_region
      _
    $region45: #{forward.1} parent=1 // pred_fallthru
      _
    %6659 = vsyncpa [#allocation3], 1
    %6660 = vsyncpa [#allocation5], 1

</llo_original>
